<compile_context>
chip_gen: v7x
topology: tpu7x:2x2x1
jax: 0.10.0
libtpu: 0.0.40
codegen_flags: <defaults>
</compile_context>

<pallas_src>
import functools

import jax
import jax.numpy as jnp
from jax.experimental import pallas as pl
from jax.experimental.pallas import tpu as pltpu


def _round_up(x, m):
    return ((x + m - 1) // m) * m


_VMEM_LIMIT = 32 * 1024 * 1024


# ---------------------------------------------------------------------------
# Pallas kernels
# ---------------------------------------------------------------------------
def _linear_relu_kernel(x_ref, w_ref, b_ref, o_ref):
    """One column tile of y = relu(x @ W + b).

    x_ref: (B, K)  bf16 full row block (constant index_map -> resident)
    w_ref: (K, tn) bf16 weight column tile (streamed from HBM)
    b_ref: (1, tn) f32
    o_ref: (B, tn) bf16
    """
    acc = jnp.dot(x_ref[...], w_ref[...], preferred_element_type=jnp.float32)
    acc = jnp.maximum(acc + b_ref[...], 0.0)
    o_ref[...] = acc.astype(o_ref.dtype)


def _tail_kernel(h_ref, w4_ref, b4_ref, w5_ref, b5_ref, w2_ref, b2_ref,
                 o_ref, *, num_classes):
    """Fused fc4 -> relu -> fc5 -> relu -> fc2 -> log_softmax (single block)."""
    a4 = jnp.dot(h_ref[...], w4_ref[...], preferred_element_type=jnp.float32)
    a4 = jnp.maximum(a4 + b4_ref[...], 0.0).astype(jnp.bfloat16)

    a5 = jnp.dot(a4, w5_ref[...], preferred_element_type=jnp.float32)
    a5 = jnp.maximum(a5 + b5_ref[...], 0.0).astype(jnp.bfloat16)

    logits = jnp.dot(a5, w2_ref[...], preferred_element_type=jnp.float32)
    logits = logits + b2_ref[...]

    # Mask padded class columns, then numerically-stable log_softmax.
    col = jax.lax.broadcasted_iota(jnp.int32, logits.shape, 1)
    logits = jnp.where(col < num_classes, logits, jnp.float32(-1e30))
    m = jnp.max(logits, axis=-1, keepdims=True)
    shifted = logits - m
    lse = jnp.log(jnp.sum(jnp.exp(shifted), axis=-1, keepdims=True))
    o_ref[...] = (shifted - lse).astype(o_ref.dtype)


# ---------------------------------------------------------------------------
# Wrappers around pallas_call
# ---------------------------------------------------------------------------
def pallas_linear_relu(x, w, b, *, tn=512):
    """x: (B, K) bf16, w: (K, N) bf16, b: (1, N) f32.  N % tn == 0."""
    B, K = x.shape
    Kw, N = w.shape
    assert K == Kw and N % tn == 0
    nt = N // tn
    cost = pl.CostEstimate(
        flops=2 * B * K * N,
        transcendentals=0,
        bytes_accessed=K * N * 2 + N * 4 + B * K * 2 + B * N * 2)
    return pl.pallas_call(
        _linear_relu_kernel,
        out_shape=jax.ShapeDtypeStruct((B, N), jnp.bfloat16),
        grid_spec=pltpu.PrefetchScalarGridSpec(
            num_scalar_prefetch=0,
            grid=(nt,),
            in_specs=[
                pl.BlockSpec((B, K), lambda j: (0, 0)),
                pl.BlockSpec((K, tn), lambda j: (0, j)),
                pl.BlockSpec((1, tn), lambda j: (0, j)),
            ],
            out_specs=pl.BlockSpec((B, tn), lambda j: (0, j)),
        ),
        compiler_params=pltpu.CompilerParams(
            dimension_semantics=("parallel",),
            vmem_limit_bytes=_VMEM_LIMIT),
        cost_estimate=cost,
    )(x, w, b)


def pallas_tail(h, w4, b4, w5, b5, w2, b2, *, num_classes):
    """Fused fc4+fc5+fc2+log_softmax; all operands fit single VMEM blocks."""
    B, K4 = h.shape
    N4 = w4.shape[1]
    N5 = w5.shape[1]
    NC = w2.shape[1]
    flops = 2 * B * (K4 * N4 + N4 * N5 + N5 * NC)
    bytes_accessed = ((w4.size + w5.size + w2.size) * 2
                      + (b4.size + b5.size + b2.size) * 4
                      + h.size * 2 + B * NC * 4)
    cost = pl.CostEstimate(flops=flops, transcendentals=B * NC,
                           bytes_accessed=bytes_accessed)
    return pl.pallas_call(
        functools.partial(_tail_kernel, num_classes=num_classes),
        out_shape=jax.ShapeDtypeStruct((B, NC), jnp.float32),
        grid_spec=pltpu.PrefetchScalarGridSpec(
            num_scalar_prefetch=0,
            grid=(1,),
            in_specs=[
                pl.BlockSpec((B, K4), lambda i: (0, 0)),
                pl.BlockSpec((K4, N4), lambda i: (0, 0)),
                pl.BlockSpec((1, N4), lambda i: (0, 0)),
                pl.BlockSpec((N4, N5), lambda i: (0, 0)),
                pl.BlockSpec((1, N5), lambda i: (0, 0)),
                pl.BlockSpec((N5, NC), lambda i: (0, 0)),
                pl.BlockSpec((1, NC), lambda i: (0, 0)),
            ],
            out_specs=pl.BlockSpec((B, NC), lambda i: (0, 0)),
        ),
        compiler_params=pltpu.CompilerParams(
            dimension_semantics=("arbitrary",),
            vmem_limit_bytes=_VMEM_LIMIT),
        cost_estimate=cost,
    )(h, w4, b4, w5, b5, w2, b2)


# ---------------------------------------------------------------------------
# Parameter construction (deterministic, mimics nn.Linear default init)
# ---------------------------------------------------------------------------
def make_linear_params(key, fan_in, fan_out):
    bound = 1.0 / jnp.sqrt(jnp.float32(fan_in))
    kw, kb = jax.random.split(key)
    # stored as (in, out) so the kernel computes x @ W + b
    w = jax.random.uniform(kw, (fan_in, fan_out), jnp.float32, -bound, bound)
    b = jax.random.uniform(kb, (fan_out,), jnp.float32, -bound, bound)
    return w, b


def pad_params(w, b, kp, np_):
    fi, fo = w.shape
    w_p = jnp.zeros((kp, np_), jnp.float32).at[:fi, :fo].set(w)
    b_p = jnp.zeros((1, np_), jnp.float32).at[0, :fo].set(b)
    return w_p.astype(jnp.bfloat16), b_p   # weights bf16, bias f32


class FiveClassClassifierWithSoftmaxPallas:
    # forward: fc1 -> relu -> fc3 -> relu -> fc4 -> relu -> fc5 -> relu
    #          -> fc2 -> log_softmax        (dropout disabled: drop_state=False)
    def __init__(self, key, num_classes=5, dropout=False):
        assert not dropout  # TODO(synk): dropout (p=0.2) training path not implemented
        self.num_classes = num_classes
        keys = jax.random.split(key, 5)
        # (in, out) per layer, in forward order: fc1, fc3, fc4, fc5, fc2
        sizes = [(2000, 4000), (4000, 2000), (2000, 1000), (1000, 500),
                 (500, num_classes)]
        self.params = []
        for k, (fi, fo) in zip(keys, sizes):
            w, b = make_linear_params(k, fi, fo)
            self.params.append(
                pad_params(w, b, _round_up(fi, 128), _round_up(fo, 128)))
        self.in_features = 2000

    def _pad_input(self, x):
        B, F = x.shape
        Bp = _round_up(max(B, 16), 16)      # 16-row pad: bf16 sublane friendly
        Kp = _round_up(F, 128)
        return jnp.zeros((Bp, Kp), jnp.bfloat16).at[:B, :F].set(
            x.astype(jnp.bfloat16))

    def __call__(self, x):
        B, F = x.shape
        assert F == self.in_features
        xp = self._pad_input(x)
        (w1, b1), (w3, b3), (w4, b4), (w5, b5), (w2, b2) = self.params
        h = pallas_linear_relu(xp, w1, b1, tn=512)   # fc1: 2048 -> 4096
        h = pallas_linear_relu(h, w3, b3, tn=512)    # fc3: 4096 -> 2048
        out = pallas_tail(h, w4, b4, w5, b5, w2, b2,
                          num_classes=self.num_classes)
        return out[:B, :self.num_classes]

    # Pure-JAX reference mirroring the kernel numerics (bf16 weights/acts,
    # f32 accumulation).  Padded rows/cols are zero, so this equals the
    # unpadded PyTorch forward up to bf16 rounding.
    def reference(self, x):
        B, _ = x.shape
        h = self._pad_input(x)
        (w1, b1), (w3, b3), (w4, b4), (w5, b5), (w2, b2) = self.params

        def lin_relu(h, w, b):
            acc = jnp.dot(h, w, preferred_element_type=jnp.float32) + b
            return jnp.maximum(acc, 0.0).astype(jnp.bfloat16)

        h = lin_relu(h, w1, b1)
        h = lin_relu(h, w3, b3)
        h = lin_relu(h, w4, b4)
        h = lin_relu(h, w5, b5)
        logits = jnp.dot(h, w2, preferred_element_type=jnp.float32) + b2
        col = jax.lax.broadcasted_iota(jnp.int32, logits.shape, 1)
        logits = jnp.where(col < self.num_classes, logits, jnp.float32(-1e30))
        logp = jax.nn.log_softmax(logits, axis=-1)
        return logp[:B, :self.num_classes]


if __name__ == "__main__":
    key = jax.random.PRNGKey(0)
    k_params, k_x = jax.random.split(key)

    model = FiveClassClassifierWithSoftmaxPallas(k_params, num_classes=5,
                                                 dropout=False)

    batch = 2
    x = jax.random.normal(k_x, (batch, 2000), jnp.float32)

    out = jax.block_until_ready(model(x))
    ref = jax.block_until_ready(model.reference(x))

    assert out.shape == (batch, 5)
    assert jnp.allclose(out, ref, atol=2e-3, rtol=2e-3), (out, ref)

    print("KERNEL_OK")
</pallas_src>

<mosaic_0001>
module attributes {stable_mosaic.version = 11 : i64} {
  func.func @_linear_relu_kernel(%arg0: i32, %arg1: memref<16x2048xbf16, #tpu.memory_space<vmem>>, %arg2: memref<2048x512xbf16, #tpu.memory_space<vmem>>, %arg3: memref<1x512xf32, #tpu.memory_space<vmem>>, %arg4: memref<16x512xbf16, #tpu.memory_space<vmem>>) attributes {dimension_semantics = [#tpu.dimension_semantics<parallel>], iteration_bounds = array<i64: 8>, scalar_prefetch = 0 : i64, scratch_operands = 0 : i64, tpu.core_type = #tpu.core_type<tc>, window_params = [{pipeline_mode = #tpu.pipeline_mode<synchronous>, transform_indices = @transform_0, window_bounds = array<i64: 16, 2048>}, {transform_indices = @transform_1, window_bounds = array<i64: 2048, 512>}, {transform_indices = @transform_2, window_bounds = array<i64: 1, 512>}, {transform_indices = @transform_3, window_bounds = array<i64: 16, 512>}]} {
    %c0 = arith.constant 0 : index
    %c0_0 = arith.constant 0 : index
    %0 = vector.load %arg1[%c0, %c0_0] : memref<16x2048xbf16, #tpu.memory_space<vmem>>, vector<16x2048xbf16>
    %c0_1 = arith.constant 0 : index
    %c0_2 = arith.constant 0 : index
    %1 = vector.load %arg2[%c0_1, %c0_2] : memref<2048x512xbf16, #tpu.memory_space<vmem>>, vector<2048x512xbf16>
    %cst = arith.constant dense<0.000000e+00> : vector<16x512xf32>
    %2 = tpu.matmul %0, %1, %cst {dimension_numbers = #tpu.dot_dimension_numbers<[1], [0], [0], [1], [0, 0, 1, 1], [], []>} : vector<16x2048xbf16>, vector<2048x512xbf16>, vector<16x512xf32> -> vector<16x512xf32>
    %c0_3 = arith.constant 0 : index
    %c0_4 = arith.constant 0 : index
    %3 = vector.load %arg3[%c0_3, %c0_4] : memref<1x512xf32, #tpu.memory_space<vmem>>, vector<1x512xf32>
    %4 = vector.broadcast %3 : vector<1x512xf32> to vector<16x512xf32>
    %5 = arith.addf %2, %4 : vector<16x512xf32>
    %cst_5 = arith.constant 0.000000e+00 : f32
    %6 = vector.broadcast %cst_5 : f32 to vector<16x512xf32>
    %7 = arith.maximumf %5, %6 : vector<16x512xf32>
    %8 = arith.truncf %7 : vector<16x512xf32> to vector<16x512xbf16>
    %c0_6 = arith.constant 0 : index
    %c0_7 = arith.constant 0 : index
    %9 = vector.load %arg4[%c0_6, %c0_7] : memref<16x512xbf16, #tpu.memory_space<vmem>>, vector<16x512xbf16>
    tpu.vector_store %arg4[%c0_6, %c0_7], %8 {strides = array<i32>} : memref<16x512xbf16, #tpu.memory_space<vmem>>, vector<16x512xbf16>,
    return
  }
  func.func @transform_0(%arg0: i32) -> (i32, i32) {
    %c0_i32 = arith.constant 0 : i32
    %c0_i32_0 = arith.constant 0 : i32
    %c0_i32_1 = arith.constant 0 : i32
    return %c0_i32, %c0_i32_0 : i32, i32
  }
  func.func @transform_1(%arg0: i32) -> (i32, i32) {
    %c0_i32 = arith.constant 0 : i32
    %c0_i32_0 = arith.constant 0 : i32
    return %c0_i32, %arg0 : i32, i32
  }
  func.func @transform_2(%arg0: i32) -> (i32, i32) {
    %c0_i32 = arith.constant 0 : i32
    %c0_i32_0 = arith.constant 0 : i32
    return %c0_i32, %arg0 : i32, i32
  }
  func.func @transform_3(%arg0: i32) -> (i32, i32) {
    %c0_i32 = arith.constant 0 : i32
    %c0_i32_0 = arith.constant 0 : i32
    return %c0_i32, %arg0 : i32, i32
  }
}

</mosaic_0001>

<llo_original>
// kernel: tpu_custom_call.1
$region0: #{tpu_custom_call.1}
  #allocation0 [shape = 'u32[]', space=smem, size = 0x4, offset = 0x4, fixed_abs, tag = 'smem constant byte address 0x4 - core index']
  #allocation1 [shape = 'u32[144,128]{1,0:T(1,128)}', space=vmem, size = 0x12000, scoped, tag = 'internal scratch']
  %s0 = inlined_call_operand.hbm [shape: bf16[16,2048], index: 0, kind: input, shape index: {}]
  %s1 = inlined_call_operand.hbm [shape: bf16[2048,4096], index: 1, kind: input, shape index: {}]
  %s2 = inlined_call_operand.hbm [shape: f32[1,4096], index: 2, kind: input, shape index: {}]
  %s3 = inlined_call_operand.hbm [shape: bf16[16,4096], index: 3, kind: output, shape index: {}]
  %s4 = sld [smem:[#allocation0]]
  $region57: #{tpu_custom_call.1} parent=0
    _
  %s6 = ssub.s32 1, %s4
  %s7 = scalar_select 0, %s6, %s4
  $region1: #{tpu_custom_call.1} parent=0
    #allocation2 [shape = 'u8[65536]{0}', space=vmem, size = 0x10000, scoped, tag = 'input window, operand 0, single buffered']
    #allocation3 [shape = 's32[2]{0}', space=sflag, size = 0x8, scoped, tag = 'scoped memory for tpu_custom_call.1']
    #allocation4 [shape = 's32[2]{0}', space=sflag, size = 0x8, scoped, tag = 'scoped memory for tpu_custom_call.1']
    #allocation5 [shape = 'u8[4194304]{0}', space=vmem, size = 0x400000, scoped, tag = 'input window, operand 1']
    #allocation6 [shape = 's32[2]{0}', space=sflag, size = 0x8, scoped, tag = 'scoped memory for tpu_custom_call.1']
    #allocation7 [shape = 'u8[4096]{0}', space=vmem, size = 0x1000, scoped, tag = 'input window, operand 2']
    #allocation8 [shape = 'u8[32768]{0}', space=vmem, size = 0x8000, scoped, tag = 'output window, operand 0']
    %8 = vsyncpa [#allocation3], 0
    %9 = vsyncpa [#allocation6], 0
    %s10 = scalar_lea.sflag [#allocation6], 1
    %11 = vsyncpa %s10, 0
    %12 = vsyncpa [#allocation4], 0
    %s13 = scalar_lea.sflag [#allocation4], 1
    %14 = vsyncpa %s13, 0
    loop: start=0, step=1, limit=10
    $region2: #{tpu_custom_call.1} parent=1 // loop_pre_header
      _
    $region3: #{tpu_custom_call.1} parent=1 // loop_header
      %s16 = sphi 0, %s20
      %p17 = scmp.ge.s32.totalorder %s16, 10
      %s24 = sphi 0, %s24
      %s26 = sphi 0, %s24
      %s27 = sphi 0, %s26
      %s41 = sphi 0, %s27
      %s47 = sphi 0, %s49
      %s50 = sphi 0, %s47
      %s51 = sphi 0, %s50
      %s67 = sphi 0, %s51
      %s73 = sphi 0, %s75
      %s76 = sphi 0, %s73
      %s77 = sphi 0, %s76
      %s93 = sphi 0, %s77
      %s99 = sphi 0, %s101
      %s102 = sphi 0, %s99
      %s103 = sphi 0, %s102
      %s119 = sphi 0, %s103
    $region4: #{tpu_custom_call.1} parent=1 // loop_header_branch
      %19 = sbr.rel (%p17) target = $region8
    $region5: #{tpu_custom_call.1} parent=1 // loop_body
      %s21 = ssub.s32 %s16, 1
      %s22 = ssub.s32 %s16, 2
      %s23 = sadd.s32 %s16, 1
      %s25 = sadd.s32 %s24, 1
      %p28 = scmp.eq.s32.totalorder %s16, 7
      %p29 = scmp.ne.s32.totalorder %s24, %s26
      %p30 = scmp.eq.s32.totalorder %s16, 0
      %p31 = por %p29, %p30
      %p32 = scmp.ne.s32.totalorder %s24, %s26
      %p33 = scmp.eq.s32.totalorder %s21, 7
      %p34 = por %p32, %p33
      %p35 = scmp.ne.s32.totalorder %s26, %s27
      %p36 = scmp.eq.s32.totalorder %s21, 0
      %p37 = por %p35, %p36
      %p38 = scmp.ne.s32.totalorder %s26, %s27
      %p39 = scmp.eq.s32.totalorder %s22, 7
      %p40 = por %p38, %p39
      %p42 = scmp.ne.s32.totalorder %s27, %s41
      %p43 = scmp.eq.s32.totalorder %s22, 0
      %p44 = por %p42, %p43
      %s45 = ssub.s32 %s16, %s23
      %p46 = scmp.eq.s32.totalorder %s45, 0
      %s48 = sadd.s32 %s47, 1
      %s49 = scalar_select %p46, %s47, %s48
      %p52 = pneg %p46
      %p53 = scmp.eq.s32.totalorder %s16, 7
      %p54 = por %p52, %p53
      %p55 = scmp.ne.s32.totalorder %s47, %s50
      %p56 = scmp.eq.s32.totalorder %s16, 0
      %p57 = por %p55, %p56
      %p58 = scmp.ne.s32.totalorder %s47, %s50
      %p59 = scmp.eq.s32.totalorder %s21, 7
      %p60 = por %p58, %p59
      %p61 = scmp.ne.s32.totalorder %s50, %s51
      %p62 = scmp.eq.s32.totalorder %s21, 0
      %p63 = por %p61, %p62
      %p64 = scmp.ne.s32.totalorder %s50, %s51
      %p65 = scmp.eq.s32.totalorder %s22, 7
      %p66 = por %p64, %p65
      %p68 = scmp.ne.s32.totalorder %s51, %s67
      %p69 = scmp.eq.s32.totalorder %s22, 0
      %p70 = por %p68, %p69
      %s71 = ssub.s32 %s16, %s23
      %p72 = scmp.eq.s32.totalorder %s71, 0
      %s74 = sadd.s32 %s73, 1
      %s75 = scalar_select %p72, %s73, %s74
      %p78 = pneg %p72
      %p79 = scmp.eq.s32.totalorder %s16, 7
      %p80 = por %p78, %p79
      %p81 = scmp.ne.s32.totalorder %s73, %s76
      %p82 = scmp.eq.s32.totalorder %s16, 0
      %p83 = por %p81, %p82
      %p84 = scmp.ne.s32.totalorder %s73, %s76
      %p85 = scmp.eq.s32.totalorder %s21, 7
      %p86 = por %p84, %p85
      %p87 = scmp.ne.s32.totalorder %s76, %s77
      %p88 = scmp.eq.s32.totalorder %s21, 0
      %p89 = por %p87, %p88
      %p90 = scmp.ne.s32.totalorder %s76, %s77
      %p91 = scmp.eq.s32.totalorder %s22, 7
      %p92 = por %p90, %p91
      %p94 = scmp.ne.s32.totalorder %s77, %s93
      %p95 = scmp.eq.s32.totalorder %s22, 0
      %p96 = por %p94, %p95
      %s97 = ssub.s32 %s16, %s23
      %p98 = scmp.eq.s32.totalorder %s97, 0
      %s100 = sadd.s32 %s99, 1
      %s101 = scalar_select %p98, %s99, %s100
      %p104 = pneg %p98
      %p105 = scmp.eq.s32.totalorder %s16, 7
      %p106 = por %p104, %p105
      %p107 = scmp.ne.s32.totalorder %s99, %s102
      %p108 = scmp.eq.s32.totalorder %s16, 0
      %p109 = por %p107, %p108
      %p110 = scmp.ne.s32.totalorder %s99, %s102
      %p111 = scmp.eq.s32.totalorder %s21, 7
      %p112 = por %p110, %p111
      %p113 = scmp.ne.s32.totalorder %s102, %s103
      %p114 = scmp.eq.s32.totalorder %s21, 0
      %p115 = por %p113, %p114
      %p116 = scmp.ne.s32.totalorder %s102, %s103
      %p117 = scmp.eq.s32.totalorder %s22, 7
      %p118 = por %p116, %p117
      %p120 = scmp.ne.s32.totalorder %s103, %s119
      %p121 = scmp.eq.s32.totalorder %s22, 0
      %p122 = por %p120, %p121
      %p123 = scmp.le.s32.totalorder 1, %s16
      %p124 = scmp.lt.s32.totalorder %s16, 9
      %p125 = pnand %p123, %p124
      %p126 = pneg %p125
      // Predicated region
      $region9: #{tpu_custom_call.1} parent=5 // pred_check
        _
      $region10: #{tpu_custom_call.1} parent=5 // pred_check_branch
        %128 = sbr.rel (%p125) target = $region12
      $region11: #{tpu_custom_call.1} parent=5 // pred_region
        %s129 = ssub.s32 %s16, 1
        // Predicated region
        $region13: #{tpu_custom_call.1} parent=11 // pred_check
          %p130 = pneg %p37
        $region14: #{tpu_custom_call.1} parent=11 // pred_check_branch
          %132 = sbr.rel (%p130) target = $region16
        $region15: #{tpu_custom_call.1} parent=11 // pred_region
          %s134 = ssub.s32 2048, 2048
          %135 = vsyncadd [#allocation3], %s134
          %s136 = sshll.u32 [#allocation2], 4
          %s137 = int_to_ptr.vmem [resolvable:$true] %s136
          %142 = dma.hbm_to_vmem [thread:$0]  %s0, 2048, %s137, [#allocation3], 1024, 1024, 64
        $region16: #{tpu_custom_call.1} parent=11 // pred_fallthru
          _
      $region12: #{tpu_custom_call.1} parent=5 // pred_fallthru
        _
      %p143 = scmp.lt.s32.totalorder %s16, 8
      // Predicated region
      $region17: #{tpu_custom_call.1} parent=5 // pred_check
        %p144 = pneg %p143
      $region18: #{tpu_custom_call.1} parent=5 // pred_check_branch
        %146 = sbr.rel (%p144) target = $region20
      $region19: #{tpu_custom_call.1} parent=5 // pred_region
        // Predicated region
        $region21: #{tpu_custom_call.1} parent=19 // pred_check
          %p147 = pneg %p57
        $region22: #{tpu_custom_call.1} parent=19 // pred_check_branch
          %149 = sbr.rel (%p147) target = $region24
        $region23: #{tpu_custom_call.1} parent=19 // pred_region
          %s150 = sand.u32 %s16, 1
          %s151 = scalar_lea.sflag [#allocation6], %s150
          %s152 = sand.u32 %s47, 1
          %s153 = smul.addr %s152, 4096
          %s154 = scalar_lea.vmem [#allocation5], %s153
          %s155 = smul.u32 4, %s16
          %s157 = ssub.s32 65536, 65536
          %158 = vsyncadd %s151, %s157
          %s159 = smul.addr %s155, 64
          %s160 = scalar_lea.hbm %s1, %s159
          %s161 = sshll.u32 %s154, 4
          %s162 = int_to_ptr.vmem [resolvable:$true] %s161
          %167 = dma.hbm_to_vmem [thread:$0]  %s160, 65536, %s162, %s151, 2048, 256, 16
        $region24: #{tpu_custom_call.1} parent=19 // pred_fallthru
          _
        // Predicated region
        $region25: #{tpu_custom_call.1} parent=19 // pred_check
          %p168 = pneg %p83
        $region26: #{tpu_custom_call.1} parent=19 // pred_check_branch
          %170 = sbr.rel (%p168) target = $region28
        $region27: #{tpu_custom_call.1} parent=19 // pred_region
          %s171 = sand.u32 %s16, 1
          %s172 = scalar_lea.sflag [#allocation6], %s171
          %s173 = sand.u32 %s73, 1
          %s174 = smul.addr %s173, 4
          %s175 = scalar_lea.vmem [#allocation7], %s174
          %s176 = smul.u32 4, %s16
          %s178 = ssub.s32 64, 64
          %179 = vsyncadd %s172, %s178
          %s180 = smul.addr %s176, 16
          %s181 = scalar_lea.hbm %s2, %s180
          %s183 = sshll.u32 %s175, 4
          %s184 = int_to_ptr.vmem [resolvable:$true] %s183
          %186 = dma.hbm_to_vmem [thread:$0]  %s181, 64, %s184, %s172
        $region28: #{tpu_custom_call.1} parent=19 // pred_fallthru
          _
      $region20: #{tpu_custom_call.1} parent=5 // pred_fallthru
        _
      %p187 = scmp.le.s32.totalorder 1, %s16
      %p188 = scmp.lt.s32.totalorder %s16, 9
      %p189 = pnand %p187, %p188
      %p190 = pneg %p189
      // Predicated region
      $region29: #{tpu_custom_call.1} parent=5 // pred_check
        _
      $region30: #{tpu_custom_call.1} parent=5 // pred_check_branch
        %192 = sbr.rel (%p189) target = $region32
      $region31: #{tpu_custom_call.1} parent=5 // pred_region
        %s193 = ssub.s32 %s16, 1
        // Predicated region
        $region33: #{tpu_custom_call.1} parent=31 // pred_check
          %p194 = pneg %p37
        $region34: #{tpu_custom_call.1} parent=31 // pred_check_branch
          %196 = sbr.rel (%p194) target = $region36
        $region35: #{tpu_custom_call.1} parent=31 // pred_region
          %197 = dma.done [#allocation3], 2048
        $region36: #{tpu_custom_call.1} parent=31 // pred_fallthru
          _
        %s198 = sand.u32 %s21, 1
        %s199 = scalar_lea.sflag [#allocation6], %s198
        %s200 = sand.u32 %s50, 1
        %s201 = smul.addr %s200, 4096
        %s202 = scalar_lea.vmem [#allocation5], %s201
        // Predicated region
        $region37: #{tpu_custom_call.1} parent=31 // pred_check
          %p203 = pneg %p63
        $region38: #{tpu_custom_call.1} parent=31 // pred_check_branch
          %205 = sbr.rel (%p203) target = $region40
        $region39: #{tpu_custom_call.1} parent=31 // pred_region
          %206 = dma.done %s199, 65536
        $region40: #{tpu_custom_call.1} parent=31 // pred_fallthru
          _
        %s207 = sand.u32 %s21, 1
        %s208 = scalar_lea.sflag [#allocation6], %s207
        %s209 = sand.u32 %s76, 1
        %s210 = smul.addr %s209, 4
        %s211 = scalar_lea.vmem [#allocation7], %s210
        // Predicated region
        $region41: #{tpu_custom_call.1} parent=31 // pred_check
          %p212 = pneg %p89
        $region42: #{tpu_custom_call.1} parent=31 // pred_check_branch
          %214 = sbr.rel (%p212) target = $region44
        $region43: #{tpu_custom_call.1} parent=31 // pred_region
          %215 = dma.done %s208, 64
        $region44: #{tpu_custom_call.1} parent=31 // pred_fallthru
          _
        %p216 = pneg %p37
        %p217 = pneg %p34
        %s218 = sand.u32 %s21, 1
        %s219 = scalar_lea.sflag [#allocation6], %s218
        %s220 = sand.u32 %s50, 1
        %s221 = smul.addr %s220, 4096
        %s222 = scalar_lea.vmem [#allocation5], %s221
        %p223 = pneg %p63
        %p224 = pneg %p60
        %s225 = sand.u32 %s21, 1
        %s226 = scalar_lea.sflag [#allocation6], %s225
        %s227 = sand.u32 %s76, 1
        %s228 = smul.addr %s227, 4
        %s229 = scalar_lea.vmem [#allocation7], %s228
        %p230 = pneg %p89
        %p231 = pneg %p86
        %p232 = pneg %p115
        %p233 = pneg %p112
        %s234 = sand.u32 %s102, 1
        %s235 = scalar_lea.sflag [#allocation4], %s234
        %s236 = sand.u32 %s102, 1
        %s237 = smul.addr %s236, 32
        %s238 = scalar_lea.vmem [#allocation8], %s237
        %s239 = smul.u32 4, %s21
        %s240 = smul.u32 4, %s21
        %s241 = smul.u32 4, %s21
        %v242 = vld [vmem:[#allocation2] sm:$0xff]
        %v243 = vld [vmem:[#allocation2 + $0x8] sm:$0xff]
        %v244 = vld [vmem:[#allocation2 + $0x10] sm:$0xff]
        %v245 = vld [vmem:[#allocation2 + $0x18] sm:$0xff]
        %v246 = vld [vmem:[#allocation2 + $0x20] sm:$0xff]
        %v247 = vld [vmem:[#allocation2 + $0x28] sm:$0xff]
        %v248 = vld [vmem:[#allocation2 + $0x30] sm:$0xff]
        %v249 = vld [vmem:[#allocation2 + $0x38] sm:$0xff]
        %v250 = vld [vmem:[#allocation2 + $0x40] sm:$0xff]
        %v251 = vld [vmem:[#allocation2 + $0x48] sm:$0xff]
        %v252 = vld [vmem:[#allocation2 + $0x50] sm:$0xff]
        %v253 = vld [vmem:[#allocation2 + $0x58] sm:$0xff]
        %v254 = vld [vmem:[#allocation2 + $0x60] sm:$0xff]
        %v255 = vld [vmem:[#allocation2 + $0x68] sm:$0xff]
        %v256 = vld [vmem:[#allocation2 + $0x70] sm:$0xff]
        %v257 = vld [vmem:[#allocation2 + $0x78] sm:$0xff]
        %v258 = vld [vmem:[%s202] sm:$0xff]
        %v259 = vld [vmem:[%s202 + $0x8] sm:$0xff]
        %v260 = vld [vmem:[%s202 + $0x10] sm:$0xff]
        %v261 = vld [vmem:[%s202 + $0x18] sm:$0xff]
        %v262 = vld [vmem:[%s202 + $0x20] sm:$0xff]
        %v263 = vld [vmem:[%s202 + $0x28] sm:$0xff]
        %v264 = vld [vmem:[%s202 + $0x30] sm:$0xff]
        %v265 = vld [vmem:[%s202 + $0x38] sm:$0xff]
        %v266 = vld [vmem:[%s202 + $0x40] sm:$0xff]
        %v267 = vld [vmem:[%s202 + $0x48] sm:$0xff]
        %v268 = vld [vmem:[%s202 + $0x50] sm:$0xff]
        %v269 = vld [vmem:[%s202 + $0x58] sm:$0xff]
        %v270 = vld [vmem:[%s202 + $0x60] sm:$0xff]
        %v271 = vld [vmem:[%s202 + $0x68] sm:$0xff]
        %v272 = vld [vmem:[%s202 + $0x70] sm:$0xff]
        %v273 = vld [vmem:[%s202 + $0x78] sm:$0xff]
        %v274 = vld [vmem:[%s202 + $0x80] sm:$0xff]
        %v275 = vld [vmem:[%s202 + $0x88] sm:$0xff]
        %v276 = vld [vmem:[%s202 + $0x90] sm:$0xff]
        %v277 = vld [vmem:[%s202 + $0x98] sm:$0xff]
        %v278 = vld [vmem:[%s202 + $0xa0] sm:$0xff]
        %v279 = vld [vmem:[%s202 + $0xa8] sm:$0xff]
        %v280 = vld [vmem:[%s202 + $0xb0] sm:$0xff]
        %v281 = vld [vmem:[%s202 + $0xb8] sm:$0xff]
        %v282 = vld [vmem:[%s202 + $0xc0] sm:$0xff]
        %v283 = vld [vmem:[%s202 + $0xc8] sm:$0xff]
        %v284 = vld [vmem:[%s202 + $0xd0] sm:$0xff]
        %v285 = vld [vmem:[%s202 + $0xd8] sm:$0xff]
        %v286 = vld [vmem:[%s202 + $0xe0] sm:$0xff]
        %v287 = vld [vmem:[%s202 + $0xe8] sm:$0xff]
        %v288 = vld [vmem:[%s202 + $0xf0] sm:$0xff]
        %v289 = vld [vmem:[%s202 + $0xf8] sm:$0xff]
        %v290 = vld [vmem:[%s202 + $0x100] sm:$0xff]
        %v291 = vld [vmem:[%s202 + $0x108] sm:$0xff]
        %v292 = vld [vmem:[%s202 + $0x110] sm:$0xff]
        %v293 = vld [vmem:[%s202 + $0x118] sm:$0xff]
        %v294 = vld [vmem:[%s202 + $0x120] sm:$0xff]
        %v295 = vld [vmem:[%s202 + $0x128] sm:$0xff]
        %v296 = vld [vmem:[%s202 + $0x130] sm:$0xff]
        %v297 = vld [vmem:[%s202 + $0x138] sm:$0xff]
        %v298 = vld [vmem:[%s202 + $0x140] sm:$0xff]
        %v299 = vld [vmem:[%s202 + $0x148] sm:$0xff]
        %v300 = vld [vmem:[%s202 + $0x150] sm:$0xff]
        %v301 = vld [vmem:[%s202 + $0x158] sm:$0xff]
        %v302 = vld [vmem:[%s202 + $0x160] sm:$0xff]
        %v303 = vld [vmem:[%s202 + $0x168] sm:$0xff]
        %v304 = vld [vmem:[%s202 + $0x170] sm:$0xff]
        %v305 = vld [vmem:[%s202 + $0x178] sm:$0xff]
        %v306 = vld [vmem:[%s202 + $0x180] sm:$0xff]
        %v307 = vld [vmem:[%s202 + $0x188] sm:$0xff]
        %v308 = vld [vmem:[%s202 + $0x190] sm:$0xff]
        %v309 = vld [vmem:[%s202 + $0x198] sm:$0xff]
        %v310 = vld [vmem:[%s202 + $0x1a0] sm:$0xff]
        %v311 = vld [vmem:[%s202 + $0x1a8] sm:$0xff]
        %v312 = vld [vmem:[%s202 + $0x1b0] sm:$0xff]
        %v313 = vld [vmem:[%s202 + $0x1b8] sm:$0xff]
        %v314 = vld [vmem:[%s202 + $0x1c0] sm:$0xff]
        %v315 = vld [vmem:[%s202 + $0x1c8] sm:$0xff]
        %v316 = vld [vmem:[%s202 + $0x1d0] sm:$0xff]
        %v317 = vld [vmem:[%s202 + $0x1d8] sm:$0xff]
        %v318 = vld [vmem:[%s202 + $0x1e0] sm:$0xff]
        %v319 = vld [vmem:[%s202 + $0x1e8] sm:$0xff]
        %v320 = vld [vmem:[%s202 + $0x1f0] sm:$0xff]
        %v321 = vld [vmem:[%s202 + $0x1f8] sm:$0xff]
        %v322 = vld [vmem:[%s202 + $0x200] sm:$0xff]
        %v323 = vld [vmem:[%s202 + $0x208] sm:$0xff]
        %v324 = vld [vmem:[%s202 + $0x210] sm:$0xff]
        %v325 = vld [vmem:[%s202 + $0x218] sm:$0xff]
        %v326 = vld [vmem:[%s202 + $0x220] sm:$0xff]
        %v327 = vld [vmem:[%s202 + $0x228] sm:$0xff]
        %v328 = vld [vmem:[%s202 + $0x230] sm:$0xff]
        %v329 = vld [vmem:[%s202 + $0x238] sm:$0xff]
        %v330 = vld [vmem:[%s202 + $0x240] sm:$0xff]
        %v331 = vld [vmem:[%s202 + $0x248] sm:$0xff]
        %v332 = vld [vmem:[%s202 + $0x250] sm:$0xff]
        %v333 = vld [vmem:[%s202 + $0x258] sm:$0xff]
        %v334 = vld [vmem:[%s202 + $0x260] sm:$0xff]
        %v335 = vld [vmem:[%s202 + $0x268] sm:$0xff]
        %v336 = vld [vmem:[%s202 + $0x270] sm:$0xff]
        %v337 = vld [vmem:[%s202 + $0x278] sm:$0xff]
        %v338 = vld [vmem:[%s202 + $0x280] sm:$0xff]
        %v339 = vld [vmem:[%s202 + $0x288] sm:$0xff]
        %v340 = vld [vmem:[%s202 + $0x290] sm:$0xff]
        %v341 = vld [vmem:[%s202 + $0x298] sm:$0xff]
        %v342 = vld [vmem:[%s202 + $0x2a0] sm:$0xff]
        %v343 = vld [vmem:[%s202 + $0x2a8] sm:$0xff]
        %v344 = vld [vmem:[%s202 + $0x2b0] sm:$0xff]
        %v345 = vld [vmem:[%s202 + $0x2b8] sm:$0xff]
        %v346 = vld [vmem:[%s202 + $0x2c0] sm:$0xff]
        %v347 = vld [vmem:[%s202 + $0x2c8] sm:$0xff]
        %v348 = vld [vmem:[%s202 + $0x2d0] sm:$0xff]
        %v349 = vld [vmem:[%s202 + $0x2d8] sm:$0xff]
        %v350 = vld [vmem:[%s202 + $0x2e0] sm:$0xff]
        %v351 = vld [vmem:[%s202 + $0x2e8] sm:$0xff]
        %v352 = vld [vmem:[%s202 + $0x2f0] sm:$0xff]
        %v353 = vld [vmem:[%s202 + $0x2f8] sm:$0xff]
        %v354 = vld [vmem:[%s202 + $0x300] sm:$0xff]
        %v355 = vld [vmem:[%s202 + $0x308] sm:$0xff]
        %v356 = vld [vmem:[%s202 + $0x310] sm:$0xff]
        %v357 = vld [vmem:[%s202 + $0x318] sm:$0xff]
        %v358 = vld [vmem:[%s202 + $0x320] sm:$0xff]
        %v359 = vld [vmem:[%s202 + $0x328] sm:$0xff]
        %v360 = vld [vmem:[%s202 + $0x330] sm:$0xff]
        %v361 = vld [vmem:[%s202 + $0x338] sm:$0xff]
        %v362 = vld [vmem:[%s202 + $0x340] sm:$0xff]
        %v363 = vld [vmem:[%s202 + $0x348] sm:$0xff]
        %v364 = vld [vmem:[%s202 + $0x350] sm:$0xff]
        %v365 = vld [vmem:[%s202 + $0x358] sm:$0xff]
        %v366 = vld [vmem:[%s202 + $0x360] sm:$0xff]
        %v367 = vld [vmem:[%s202 + $0x368] sm:$0xff]
        %v368 = vld [vmem:[%s202 + $0x370] sm:$0xff]
        %v369 = vld [vmem:[%s202 + $0x378] sm:$0xff]
        %v370 = vld [vmem:[%s202 + $0x380] sm:$0xff]
        %v371 = vld [vmem:[%s202 + $0x388] sm:$0xff]
        %v372 = vld [vmem:[%s202 + $0x390] sm:$0xff]
        %v373 = vld [vmem:[%s202 + $0x398] sm:$0xff]
        %v374 = vld [vmem:[%s202 + $0x3a0] sm:$0xff]
        %v375 = vld [vmem:[%s202 + $0x3a8] sm:$0xff]
        %v376 = vld [vmem:[%s202 + $0x3b0] sm:$0xff]
        %v377 = vld [vmem:[%s202 + $0x3b8] sm:$0xff]
        %v378 = vld [vmem:[%s202 + $0x3c0] sm:$0xff]
        %v379 = vld [vmem:[%s202 + $0x3c8] sm:$0xff]
        %v380 = vld [vmem:[%s202 + $0x3d0] sm:$0xff]
        %v381 = vld [vmem:[%s202 + $0x3d8] sm:$0xff]
        %v382 = vld [vmem:[%s202 + $0x3e0] sm:$0xff]
        %v383 = vld [vmem:[%s202 + $0x3e8] sm:$0xff]
        %v384 = vld [vmem:[%s202 + $0x3f0] sm:$0xff]
        %v385 = vld [vmem:[%s202 + $0x3f8] sm:$0xff]
        %v386 = vld [vmem:[%s202 + $0x400] sm:$0xff]
        %v387 = vld [vmem:[%s202 + $0x408] sm:$0xff]
        %v388 = vld [vmem:[%s202 + $0x410] sm:$0xff]
        %v389 = vld [vmem:[%s202 + $0x418] sm:$0xff]
        %v390 = vld [vmem:[%s202 + $0x420] sm:$0xff]
        %v391 = vld [vmem:[%s202 + $0x428] sm:$0xff]
        %v392 = vld [vmem:[%s202 + $0x430] sm:$0xff]
        %v393 = vld [vmem:[%s202 + $0x438] sm:$0xff]
        %v394 = vld [vmem:[%s202 + $0x440] sm:$0xff]
        %v395 = vld [vmem:[%s202 + $0x448] sm:$0xff]
        %v396 = vld [vmem:[%s202 + $0x450] sm:$0xff]
        %v397 = vld [vmem:[%s202 + $0x458] sm:$0xff]
        %v398 = vld [vmem:[%s202 + $0x460] sm:$0xff]
        %v399 = vld [vmem:[%s202 + $0x468] sm:$0xff]
        %v400 = vld [vmem:[%s202 + $0x470] sm:$0xff]
        %v401 = vld [vmem:[%s202 + $0x478] sm:$0xff]
        %v402 = vld [vmem:[%s202 + $0x480] sm:$0xff]
        %v403 = vld [vmem:[%s202 + $0x488] sm:$0xff]
        %v404 = vld [vmem:[%s202 + $0x490] sm:$0xff]
        %v405 = vld [vmem:[%s202 + $0x498] sm:$0xff]
        %v406 = vld [vmem:[%s202 + $0x4a0] sm:$0xff]
        %v407 = vld [vmem:[%s202 + $0x4a8] sm:$0xff]
        %v408 = vld [vmem:[%s202 + $0x4b0] sm:$0xff]
        %v409 = vld [vmem:[%s202 + $0x4b8] sm:$0xff]
        %v410 = vld [vmem:[%s202 + $0x4c0] sm:$0xff]
        %v411 = vld [vmem:[%s202 + $0x4c8] sm:$0xff]
        %v412 = vld [vmem:[%s202 + $0x4d0] sm:$0xff]
        %v413 = vld [vmem:[%s202 + $0x4d8] sm:$0xff]
        %v414 = vld [vmem:[%s202 + $0x4e0] sm:$0xff]
        %v415 = vld [vmem:[%s202 + $0x4e8] sm:$0xff]
        %v416 = vld [vmem:[%s202 + $0x4f0] sm:$0xff]
        %v417 = vld [vmem:[%s202 + $0x4f8] sm:$0xff]
        %v418 = vld [vmem:[%s202 + $0x500] sm:$0xff]
        %v419 = vld [vmem:[%s202 + $0x508] sm:$0xff]
        %v420 = vld [vmem:[%s202 + $0x510] sm:$0xff]
        %v421 = vld [vmem:[%s202 + $0x518] sm:$0xff]
        %v422 = vld [vmem:[%s202 + $0x520] sm:$0xff]
        %v423 = vld [vmem:[%s202 + $0x528] sm:$0xff]
        %v424 = vld [vmem:[%s202 + $0x530] sm:$0xff]
        %v425 = vld [vmem:[%s202 + $0x538] sm:$0xff]
        %v426 = vld [vmem:[%s202 + $0x540] sm:$0xff]
        %v427 = vld [vmem:[%s202 + $0x548] sm:$0xff]
        %v428 = vld [vmem:[%s202 + $0x550] sm:$0xff]
        %v429 = vld [vmem:[%s202 + $0x558] sm:$0xff]
        %v430 = vld [vmem:[%s202 + $0x560] sm:$0xff]
        %v431 = vld [vmem:[%s202 + $0x568] sm:$0xff]
        %v432 = vld [vmem:[%s202 + $0x570] sm:$0xff]
        %v433 = vld [vmem:[%s202 + $0x578] sm:$0xff]
        %v434 = vld [vmem:[%s202 + $0x580] sm:$0xff]
        %v435 = vld [vmem:[%s202 + $0x588] sm:$0xff]
        %v436 = vld [vmem:[%s202 + $0x590] sm:$0xff]
        %v437 = vld [vmem:[%s202 + $0x598] sm:$0xff]
        %v438 = vld [vmem:[%s202 + $0x5a0] sm:$0xff]
        %v439 = vld [vmem:[%s202 + $0x5a8] sm:$0xff]
        %v440 = vld [vmem:[%s202 + $0x5b0] sm:$0xff]
        %v441 = vld [vmem:[%s202 + $0x5b8] sm:$0xff]
        %v442 = vld [vmem:[%s202 + $0x5c0] sm:$0xff]
        %v443 = vld [vmem:[%s202 + $0x5c8] sm:$0xff]
        %v444 = vld [vmem:[%s202 + $0x5d0] sm:$0xff]
        %v445 = vld [vmem:[%s202 + $0x5d8] sm:$0xff]
        %v446 = vld [vmem:[%s202 + $0x5e0] sm:$0xff]
        %v447 = vld [vmem:[%s202 + $0x5e8] sm:$0xff]
        %v448 = vld [vmem:[%s202 + $0x5f0] sm:$0xff]
        %v449 = vld [vmem:[%s202 + $0x5f8] sm:$0xff]
        %v450 = vld [vmem:[%s202 + $0x600] sm:$0xff]
        %v451 = vld [vmem:[%s202 + $0x608] sm:$0xff]
        %v452 = vld [vmem:[%s202 + $0x610] sm:$0xff]
        %v453 = vld [vmem:[%s202 + $0x618] sm:$0xff]
        %v454 = vld [vmem:[%s202 + $0x620] sm:$0xff]
        %v455 = vld [vmem:[%s202 + $0x628] sm:$0xff]
        %v456 = vld [vmem:[%s202 + $0x630] sm:$0xff]
        %v457 = vld [vmem:[%s202 + $0x638] sm:$0xff]
        %v458 = vld [vmem:[%s202 + $0x640] sm:$0xff]
        %v459 = vld [vmem:[%s202 + $0x648] sm:$0xff]
        %v460 = vld [vmem:[%s202 + $0x650] sm:$0xff]
        %v461 = vld [vmem:[%s202 + $0x658] sm:$0xff]
        %v462 = vld [vmem:[%s202 + $0x660] sm:$0xff]
        %v463 = vld [vmem:[%s202 + $0x668] sm:$0xff]
        %v464 = vld [vmem:[%s202 + $0x670] sm:$0xff]
        %v465 = vld [vmem:[%s202 + $0x678] sm:$0xff]
        %v466 = vld [vmem:[%s202 + $0x680] sm:$0xff]
        %v467 = vld [vmem:[%s202 + $0x688] sm:$0xff]
        %v468 = vld [vmem:[%s202 + $0x690] sm:$0xff]
        %v469 = vld [vmem:[%s202 + $0x698] sm:$0xff]
        %v470 = vld [vmem:[%s202 + $0x6a0] sm:$0xff]
        %v471 = vld [vmem:[%s202 + $0x6a8] sm:$0xff]
        %v472 = vld [vmem:[%s202 + $0x6b0] sm:$0xff]
        %v473 = vld [vmem:[%s202 + $0x6b8] sm:$0xff]
        %v474 = vld [vmem:[%s202 + $0x6c0] sm:$0xff]
        %v475 = vld [vmem:[%s202 + $0x6c8] sm:$0xff]
        %v476 = vld [vmem:[%s202 + $0x6d0] sm:$0xff]
        %v477 = vld [vmem:[%s202 + $0x6d8] sm:$0xff]
        %v478 = vld [vmem:[%s202 + $0x6e0] sm:$0xff]
        %v479 = vld [vmem:[%s202 + $0x6e8] sm:$0xff]
        %v480 = vld [vmem:[%s202 + $0x6f0] sm:$0xff]
        %v481 = vld [vmem:[%s202 + $0x6f8] sm:$0xff]
        %v482 = vld [vmem:[%s202 + $0x700] sm:$0xff]
        %v483 = vld [vmem:[%s202 + $0x708] sm:$0xff]
        %v484 = vld [vmem:[%s202 + $0x710] sm:$0xff]
        %v485 = vld [vmem:[%s202 + $0x718] sm:$0xff]
        %v486 = vld [vmem:[%s202 + $0x720] sm:$0xff]
        %v487 = vld [vmem:[%s202 + $0x728] sm:$0xff]
        %v488 = vld [vmem:[%s202 + $0x730] sm:$0xff]
        %v489 = vld [vmem:[%s202 + $0x738] sm:$0xff]
        %v490 = vld [vmem:[%s202 + $0x740] sm:$0xff]
        %v491 = vld [vmem:[%s202 + $0x748] sm:$0xff]
        %v492 = vld [vmem:[%s202 + $0x750] sm:$0xff]
        %v493 = vld [vmem:[%s202 + $0x758] sm:$0xff]
        %v494 = vld [vmem:[%s202 + $0x760] sm:$0xff]
        %v495 = vld [vmem:[%s202 + $0x768] sm:$0xff]
        %v496 = vld [vmem:[%s202 + $0x770] sm:$0xff]
        %v497 = vld [vmem:[%s202 + $0x778] sm:$0xff]
        %v498 = vld [vmem:[%s202 + $0x780] sm:$0xff]
        %v499 = vld [vmem:[%s202 + $0x788] sm:$0xff]
        %v500 = vld [vmem:[%s202 + $0x790] sm:$0xff]
        %v501 = vld [vmem:[%s202 + $0x798] sm:$0xff]
        %v502 = vld [vmem:[%s202 + $0x7a0] sm:$0xff]
        %v503 = vld [vmem:[%s202 + $0x7a8] sm:$0xff]
        %v504 = vld [vmem:[%s202 + $0x7b0] sm:$0xff]
        %v505 = vld [vmem:[%s202 + $0x7b8] sm:$0xff]
        %v506 = vld [vmem:[%s202 + $0x7c0] sm:$0xff]
        %v507 = vld [vmem:[%s202 + $0x7c8] sm:$0xff]
        %v508 = vld [vmem:[%s202 + $0x7d0] sm:$0xff]
        %v509 = vld [vmem:[%s202 + $0x7d8] sm:$0xff]
        %v510 = vld [vmem:[%s202 + $0x7e0] sm:$0xff]
        %v511 = vld [vmem:[%s202 + $0x7e8] sm:$0xff]
        %v512 = vld [vmem:[%s202 + $0x7f0] sm:$0xff]
        %v513 = vld [vmem:[%s202 + $0x7f8] sm:$0xff]
        %v514 = vld [vmem:[%s202 + $0x800] sm:$0xff]
        %v515 = vld [vmem:[%s202 + $0x808] sm:$0xff]
        %v516 = vld [vmem:[%s202 + $0x810] sm:$0xff]
        %v517 = vld [vmem:[%s202 + $0x818] sm:$0xff]
        %v518 = vld [vmem:[%s202 + $0x820] sm:$0xff]
        %v519 = vld [vmem:[%s202 + $0x828] sm:$0xff]
        %v520 = vld [vmem:[%s202 + $0x830] sm:$0xff]
        %v521 = vld [vmem:[%s202 + $0x838] sm:$0xff]
        %v522 = vld [vmem:[%s202 + $0x840] sm:$0xff]
        %v523 = vld [vmem:[%s202 + $0x848] sm:$0xff]
        %v524 = vld [vmem:[%s202 + $0x850] sm:$0xff]
        %v525 = vld [vmem:[%s202 + $0x858] sm:$0xff]
        %v526 = vld [vmem:[%s202 + $0x860] sm:$0xff]
        %v527 = vld [vmem:[%s202 + $0x868] sm:$0xff]
        %v528 = vld [vmem:[%s202 + $0x870] sm:$0xff]
        %v529 = vld [vmem:[%s202 + $0x878] sm:$0xff]
        %v530 = vld [vmem:[%s202 + $0x880] sm:$0xff]
        %v531 = vld [vmem:[%s202 + $0x888] sm:$0xff]
        %v532 = vld [vmem:[%s202 + $0x890] sm:$0xff]
        %v533 = vld [vmem:[%s202 + $0x898] sm:$0xff]
        %v534 = vld [vmem:[%s202 + $0x8a0] sm:$0xff]
        %v535 = vld [vmem:[%s202 + $0x8a8] sm:$0xff]
        %v536 = vld [vmem:[%s202 + $0x8b0] sm:$0xff]
        %v537 = vld [vmem:[%s202 + $0x8b8] sm:$0xff]
        %v538 = vld [vmem:[%s202 + $0x8c0] sm:$0xff]
        %v539 = vld [vmem:[%s202 + $0x8c8] sm:$0xff]
        %v540 = vld [vmem:[%s202 + $0x8d0] sm:$0xff]
        %v541 = vld [vmem:[%s202 + $0x8d8] sm:$0xff]
        %v542 = vld [vmem:[%s202 + $0x8e0] sm:$0xff]
        %v543 = vld [vmem:[%s202 + $0x8e8] sm:$0xff]
        %v544 = vld [vmem:[%s202 + $0x8f0] sm:$0xff]
        %v545 = vld [vmem:[%s202 + $0x8f8] sm:$0xff]
        %v546 = vld [vmem:[%s202 + $0x900] sm:$0xff]
        %v547 = vld [vmem:[%s202 + $0x908] sm:$0xff]
        %v548 = vld [vmem:[%s202 + $0x910] sm:$0xff]
        %v549 = vld [vmem:[%s202 + $0x918] sm:$0xff]
        %v550 = vld [vmem:[%s202 + $0x920] sm:$0xff]
        %v551 = vld [vmem:[%s202 + $0x928] sm:$0xff]
        %v552 = vld [vmem:[%s202 + $0x930] sm:$0xff]
        %v553 = vld [vmem:[%s202 + $0x938] sm:$0xff]
        %v554 = vld [vmem:[%s202 + $0x940] sm:$0xff]
        %v555 = vld [vmem:[%s202 + $0x948] sm:$0xff]
        %v556 = vld [vmem:[%s202 + $0x950] sm:$0xff]
        %v557 = vld [vmem:[%s202 + $0x958] sm:$0xff]
        %v558 = vld [vmem:[%s202 + $0x960] sm:$0xff]
        %v559 = vld [vmem:[%s202 + $0x968] sm:$0xff]
        %v560 = vld [vmem:[%s202 + $0x970] sm:$0xff]
        %v561 = vld [vmem:[%s202 + $0x978] sm:$0xff]
        %v562 = vld [vmem:[%s202 + $0x980] sm:$0xff]
        %v563 = vld [vmem:[%s202 + $0x988] sm:$0xff]
        %v564 = vld [vmem:[%s202 + $0x990] sm:$0xff]
        %v565 = vld [vmem:[%s202 + $0x998] sm:$0xff]
        %v566 = vld [vmem:[%s202 + $0x9a0] sm:$0xff]
        %v567 = vld [vmem:[%s202 + $0x9a8] sm:$0xff]
        %v568 = vld [vmem:[%s202 + $0x9b0] sm:$0xff]
        %v569 = vld [vmem:[%s202 + $0x9b8] sm:$0xff]
        %v570 = vld [vmem:[%s202 + $0x9c0] sm:$0xff]
        %v571 = vld [vmem:[%s202 + $0x9c8] sm:$0xff]
        %v572 = vld [vmem:[%s202 + $0x9d0] sm:$0xff]
        %v573 = vld [vmem:[%s202 + $0x9d8] sm:$0xff]
        %v574 = vld [vmem:[%s202 + $0x9e0] sm:$0xff]
        %v575 = vld [vmem:[%s202 + $0x9e8] sm:$0xff]
        %v576 = vld [vmem:[%s202 + $0x9f0] sm:$0xff]
        %v577 = vld [vmem:[%s202 + $0x9f8] sm:$0xff]
        %v578 = vld [vmem:[%s202 + $0xa00] sm:$0xff]
        %v579 = vld [vmem:[%s202 + $0xa08] sm:$0xff]
        %v580 = vld [vmem:[%s202 + $0xa10] sm:$0xff]
        %v581 = vld [vmem:[%s202 + $0xa18] sm:$0xff]
        %v582 = vld [vmem:[%s202 + $0xa20] sm:$0xff]
        %v583 = vld [vmem:[%s202 + $0xa28] sm:$0xff]
        %v584 = vld [vmem:[%s202 + $0xa30] sm:$0xff]
        %v585 = vld [vmem:[%s202 + $0xa38] sm:$0xff]
        %v586 = vld [vmem:[%s202 + $0xa40] sm:$0xff]
        %v587 = vld [vmem:[%s202 + $0xa48] sm:$0xff]
        %v588 = vld [vmem:[%s202 + $0xa50] sm:$0xff]
        %v589 = vld [vmem:[%s202 + $0xa58] sm:$0xff]
        %v590 = vld [vmem:[%s202 + $0xa60] sm:$0xff]
        %v591 = vld [vmem:[%s202 + $0xa68] sm:$0xff]
        %v592 = vld [vmem:[%s202 + $0xa70] sm:$0xff]
        %v593 = vld [vmem:[%s202 + $0xa78] sm:$0xff]
        %v594 = vld [vmem:[%s202 + $0xa80] sm:$0xff]
        %v595 = vld [vmem:[%s202 + $0xa88] sm:$0xff]
        %v596 = vld [vmem:[%s202 + $0xa90] sm:$0xff]
        %v597 = vld [vmem:[%s202 + $0xa98] sm:$0xff]
        %v598 = vld [vmem:[%s202 + $0xaa0] sm:$0xff]
        %v599 = vld [vmem:[%s202 + $0xaa8] sm:$0xff]
        %v600 = vld [vmem:[%s202 + $0xab0] sm:$0xff]
        %v601 = vld [vmem:[%s202 + $0xab8] sm:$0xff]
        %v602 = vld [vmem:[%s202 + $0xac0] sm:$0xff]
        %v603 = vld [vmem:[%s202 + $0xac8] sm:$0xff]
        %v604 = vld [vmem:[%s202 + $0xad0] sm:$0xff]
        %v605 = vld [vmem:[%s202 + $0xad8] sm:$0xff]
        %v606 = vld [vmem:[%s202 + $0xae0] sm:$0xff]
        %v607 = vld [vmem:[%s202 + $0xae8] sm:$0xff]
        %v608 = vld [vmem:[%s202 + $0xaf0] sm:$0xff]
        %v609 = vld [vmem:[%s202 + $0xaf8] sm:$0xff]
        %v610 = vld [vmem:[%s202 + $0xb00] sm:$0xff]
        %v611 = vld [vmem:[%s202 + $0xb08] sm:$0xff]
        %v612 = vld [vmem:[%s202 + $0xb10] sm:$0xff]
        %v613 = vld [vmem:[%s202 + $0xb18] sm:$0xff]
        %v614 = vld [vmem:[%s202 + $0xb20] sm:$0xff]
        %v615 = vld [vmem:[%s202 + $0xb28] sm:$0xff]
        %v616 = vld [vmem:[%s202 + $0xb30] sm:$0xff]
        %v617 = vld [vmem:[%s202 + $0xb38] sm:$0xff]
        %v618 = vld [vmem:[%s202 + $0xb40] sm:$0xff]
        %v619 = vld [vmem:[%s202 + $0xb48] sm:$0xff]
        %v620 = vld [vmem:[%s202 + $0xb50] sm:$0xff]
        %v621 = vld [vmem:[%s202 + $0xb58] sm:$0xff]
        %v622 = vld [vmem:[%s202 + $0xb60] sm:$0xff]
        %v623 = vld [vmem:[%s202 + $0xb68] sm:$0xff]
        %v624 = vld [vmem:[%s202 + $0xb70] sm:$0xff]
        %v625 = vld [vmem:[%s202 + $0xb78] sm:$0xff]
        %v626 = vld [vmem:[%s202 + $0xb80] sm:$0xff]
        %v627 = vld [vmem:[%s202 + $0xb88] sm:$0xff]
        %v628 = vld [vmem:[%s202 + $0xb90] sm:$0xff]
        %v629 = vld [vmem:[%s202 + $0xb98] sm:$0xff]
        %v630 = vld [vmem:[%s202 + $0xba0] sm:$0xff]
        %v631 = vld [vmem:[%s202 + $0xba8] sm:$0xff]
        %v632 = vld [vmem:[%s202 + $0xbb0] sm:$0xff]
        %v633 = vld [vmem:[%s202 + $0xbb8] sm:$0xff]
        %v634 = vld [vmem:[%s202 + $0xbc0] sm:$0xff]
        %v635 = vld [vmem:[%s202 + $0xbc8] sm:$0xff]
        %v636 = vld [vmem:[%s202 + $0xbd0] sm:$0xff]
        %v637 = vld [vmem:[%s202 + $0xbd8] sm:$0xff]
        %v638 = vld [vmem:[%s202 + $0xbe0] sm:$0xff]
        %v639 = vld [vmem:[%s202 + $0xbe8] sm:$0xff]
        %v640 = vld [vmem:[%s202 + $0xbf0] sm:$0xff]
        %v641 = vld [vmem:[%s202 + $0xbf8] sm:$0xff]
        %v642 = vld [vmem:[%s202 + $0xc00] sm:$0xff]
        %v643 = vld [vmem:[%s202 + $0xc08] sm:$0xff]
        %v644 = vld [vmem:[%s202 + $0xc10] sm:$0xff]
        %v645 = vld [vmem:[%s202 + $0xc18] sm:$0xff]
        %v646 = vld [vmem:[%s202 + $0xc20] sm:$0xff]
        %v647 = vld [vmem:[%s202 + $0xc28] sm:$0xff]
        %v648 = vld [vmem:[%s202 + $0xc30] sm:$0xff]
        %v649 = vld [vmem:[%s202 + $0xc38] sm:$0xff]
        %v650 = vld [vmem:[%s202 + $0xc40] sm:$0xff]
        %v651 = vld [vmem:[%s202 + $0xc48] sm:$0xff]
        %v652 = vld [vmem:[%s202 + $0xc50] sm:$0xff]
        %v653 = vld [vmem:[%s202 + $0xc58] sm:$0xff]
        %v654 = vld [vmem:[%s202 + $0xc60] sm:$0xff]
        %v655 = vld [vmem:[%s202 + $0xc68] sm:$0xff]
        %v656 = vld [vmem:[%s202 + $0xc70] sm:$0xff]
        %v657 = vld [vmem:[%s202 + $0xc78] sm:$0xff]
        %v658 = vld [vmem:[%s202 + $0xc80] sm:$0xff]
        %v659 = vld [vmem:[%s202 + $0xc88] sm:$0xff]
        %v660 = vld [vmem:[%s202 + $0xc90] sm:$0xff]
        %v661 = vld [vmem:[%s202 + $0xc98] sm:$0xff]
        %v662 = vld [vmem:[%s202 + $0xca0] sm:$0xff]
        %v663 = vld [vmem:[%s202 + $0xca8] sm:$0xff]
        %v664 = vld [vmem:[%s202 + $0xcb0] sm:$0xff]
        %v665 = vld [vmem:[%s202 + $0xcb8] sm:$0xff]
        %v666 = vld [vmem:[%s202 + $0xcc0] sm:$0xff]
        %v667 = vld [vmem:[%s202 + $0xcc8] sm:$0xff]
        %v668 = vld [vmem:[%s202 + $0xcd0] sm:$0xff]
        %v669 = vld [vmem:[%s202 + $0xcd8] sm:$0xff]
        %v670 = vld [vmem:[%s202 + $0xce0] sm:$0xff]
        %v671 = vld [vmem:[%s202 + $0xce8] sm:$0xff]
        %v672 = vld [vmem:[%s202 + $0xcf0] sm:$0xff]
        %v673 = vld [vmem:[%s202 + $0xcf8] sm:$0xff]
        %v674 = vld [vmem:[%s202 + $0xd00] sm:$0xff]
        %v675 = vld [vmem:[%s202 + $0xd08] sm:$0xff]
        %v676 = vld [vmem:[%s202 + $0xd10] sm:$0xff]
        %v677 = vld [vmem:[%s202 + $0xd18] sm:$0xff]
        %v678 = vld [vmem:[%s202 + $0xd20] sm:$0xff]
        %v679 = vld [vmem:[%s202 + $0xd28] sm:$0xff]
        %v680 = vld [vmem:[%s202 + $0xd30] sm:$0xff]
        %v681 = vld [vmem:[%s202 + $0xd38] sm:$0xff]
        %v682 = vld [vmem:[%s202 + $0xd40] sm:$0xff]
        %v683 = vld [vmem:[%s202 + $0xd48] sm:$0xff]
        %v684 = vld [vmem:[%s202 + $0xd50] sm:$0xff]
        %v685 = vld [vmem:[%s202 + $0xd58] sm:$0xff]
        %v686 = vld [vmem:[%s202 + $0xd60] sm:$0xff]
        %v687 = vld [vmem:[%s202 + $0xd68] sm:$0xff]
        %v688 = vld [vmem:[%s202 + $0xd70] sm:$0xff]
        %v689 = vld [vmem:[%s202 + $0xd78] sm:$0xff]
        %v690 = vld [vmem:[%s202 + $0xd80] sm:$0xff]
        %v691 = vld [vmem:[%s202 + $0xd88] sm:$0xff]
        %v692 = vld [vmem:[%s202 + $0xd90] sm:$0xff]
        %v693 = vld [vmem:[%s202 + $0xd98] sm:$0xff]
        %v694 = vld [vmem:[%s202 + $0xda0] sm:$0xff]
        %v695 = vld [vmem:[%s202 + $0xda8] sm:$0xff]
        %v696 = vld [vmem:[%s202 + $0xdb0] sm:$0xff]
        %v697 = vld [vmem:[%s202 + $0xdb8] sm:$0xff]
        %v698 = vld [vmem:[%s202 + $0xdc0] sm:$0xff]
        %v699 = vld [vmem:[%s202 + $0xdc8] sm:$0xff]
        %v700 = vld [vmem:[%s202 + $0xdd0] sm:$0xff]
        %v701 = vld [vmem:[%s202 + $0xdd8] sm:$0xff]
        %v702 = vld [vmem:[%s202 + $0xde0] sm:$0xff]
        %v703 = vld [vmem:[%s202 + $0xde8] sm:$0xff]
        %v704 = vld [vmem:[%s202 + $0xdf0] sm:$0xff]
        %v705 = vld [vmem:[%s202 + $0xdf8] sm:$0xff]
        %v706 = vld [vmem:[%s202 + $0xe00] sm:$0xff]
        %v707 = vld [vmem:[%s202 + $0xe08] sm:$0xff]
        %v708 = vld [vmem:[%s202 + $0xe10] sm:$0xff]
        %v709 = vld [vmem:[%s202 + $0xe18] sm:$0xff]
        %v710 = vld [vmem:[%s202 + $0xe20] sm:$0xff]
        %v711 = vld [vmem:[%s202 + $0xe28] sm:$0xff]
        %v712 = vld [vmem:[%s202 + $0xe30] sm:$0xff]
        %v713 = vld [vmem:[%s202 + $0xe38] sm:$0xff]
        %v714 = vld [vmem:[%s202 + $0xe40] sm:$0xff]
        %v715 = vld [vmem:[%s202 + $0xe48] sm:$0xff]
        %v716 = vld [vmem:[%s202 + $0xe50] sm:$0xff]
        %v717 = vld [vmem:[%s202 + $0xe58] sm:$0xff]
        %v718 = vld [vmem:[%s202 + $0xe60] sm:$0xff]
        %v719 = vld [vmem:[%s202 + $0xe68] sm:$0xff]
        %v720 = vld [vmem:[%s202 + $0xe70] sm:$0xff]
        %v721 = vld [vmem:[%s202 + $0xe78] sm:$0xff]
        %v722 = vld [vmem:[%s202 + $0xe80] sm:$0xff]
        %v723 = vld [vmem:[%s202 + $0xe88] sm:$0xff]
        %v724 = vld [vmem:[%s202 + $0xe90] sm:$0xff]
        %v725 = vld [vmem:[%s202 + $0xe98] sm:$0xff]
        %v726 = vld [vmem:[%s202 + $0xea0] sm:$0xff]
        %v727 = vld [vmem:[%s202 + $0xea8] sm:$0xff]
        %v728 = vld [vmem:[%s202 + $0xeb0] sm:$0xff]
        %v729 = vld [vmem:[%s202 + $0xeb8] sm:$0xff]
        %v730 = vld [vmem:[%s202 + $0xec0] sm:$0xff]
        %v731 = vld [vmem:[%s202 + $0xec8] sm:$0xff]
        %v732 = vld [vmem:[%s202 + $0xed0] sm:$0xff]
        %v733 = vld [vmem:[%s202 + $0xed8] sm:$0xff]
        %v734 = vld [vmem:[%s202 + $0xee0] sm:$0xff]
        %v735 = vld [vmem:[%s202 + $0xee8] sm:$0xff]
        %v736 = vld [vmem:[%s202 + $0xef0] sm:$0xff]
        %v737 = vld [vmem:[%s202 + $0xef8] sm:$0xff]
        %v738 = vld [vmem:[%s202 + $0xf00] sm:$0xff]
        %v739 = vld [vmem:[%s202 + $0xf08] sm:$0xff]
        %v740 = vld [vmem:[%s202 + $0xf10] sm:$0xff]
        %v741 = vld [vmem:[%s202 + $0xf18] sm:$0xff]
        %v742 = vld [vmem:[%s202 + $0xf20] sm:$0xff]
        %v743 = vld [vmem:[%s202 + $0xf28] sm:$0xff]
        %v744 = vld [vmem:[%s202 + $0xf30] sm:$0xff]
        %v745 = vld [vmem:[%s202 + $0xf38] sm:$0xff]
        %v746 = vld [vmem:[%s202 + $0xf40] sm:$0xff]
        %v747 = vld [vmem:[%s202 + $0xf48] sm:$0xff]
        %v748 = vld [vmem:[%s202 + $0xf50] sm:$0xff]
        %v749 = vld [vmem:[%s202 + $0xf58] sm:$0xff]
        %v750 = vld [vmem:[%s202 + $0xf60] sm:$0xff]
        %v751 = vld [vmem:[%s202 + $0xf68] sm:$0xff]
        %v752 = vld [vmem:[%s202 + $0xf70] sm:$0xff]
        %v753 = vld [vmem:[%s202 + $0xf78] sm:$0xff]
        %v754 = vld [vmem:[%s202 + $0xf80] sm:$0xff]
        %v755 = vld [vmem:[%s202 + $0xf88] sm:$0xff]
        %v756 = vld [vmem:[%s202 + $0xf90] sm:$0xff]
        %v757 = vld [vmem:[%s202 + $0xf98] sm:$0xff]
        %v758 = vld [vmem:[%s202 + $0xfa0] sm:$0xff]
        %v759 = vld [vmem:[%s202 + $0xfa8] sm:$0xff]
        %v760 = vld [vmem:[%s202 + $0xfb0] sm:$0xff]
        %v761 = vld [vmem:[%s202 + $0xfb8] sm:$0xff]
        %v762 = vld [vmem:[%s202 + $0xfc0] sm:$0xff]
        %v763 = vld [vmem:[%s202 + $0xfc8] sm:$0xff]
        %v764 = vld [vmem:[%s202 + $0xfd0] sm:$0xff]
        %v765 = vld [vmem:[%s202 + $0xfd8] sm:$0xff]
        %v766 = vld [vmem:[%s202 + $0xfe0] sm:$0xff]
        %v767 = vld [vmem:[%s202 + $0xfe8] sm:$0xff]
        %v768 = vld [vmem:[%s202 + $0xff0] sm:$0xff]
        %v769 = vld [vmem:[%s202 + $0xff8] sm:$0xff]
        %v770 = vld [vmem:[%s211] sm:$0xf]
        %v772 = vlaneseq
        %v773 = vshrl.u32 %v772, 7
        %v774 = vsub.s32 0, %v773
        %v775 = vrot.slane %v770, %v774
        %v776 = vlaneseq
        %v777 = vshrl.u32 %v776, 7
        %v778 = vsub.s32 1, %v777
        %v779 = vrot.slane %v770, %v778
        %v780 = vlaneseq
        %v781 = vshrl.u32 %v780, 7
        %v782 = vsub.s32 2, %v781
        %v783 = vrot.slane %v770, %v782
        %v784 = vlaneseq
        %v785 = vshrl.u32 %v784, 7
        %v786 = vsub.s32 3, %v785
        %v787 = vrot.slane %v770, %v786
        %v808 = vunpack.c.l.b16 %v242
        %v809 = vunpack.c.h.b16 %v242
        %v810 = vunpack.c.l.b16 %v243
        %v811 = vunpack.c.h.b16 %v243
        %v812 = vunpack.c.l.b16 %v244
        %v813 = vunpack.c.h.b16 %v244
        %v814 = vunpack.c.l.b16 %v245
        %v815 = vunpack.c.h.b16 %v245
        %v816 = vunpack.c.l.b16 %v246
        %v817 = vunpack.c.h.b16 %v246
        %v818 = vunpack.c.l.b16 %v247
        %v819 = vunpack.c.h.b16 %v247
        %v820 = vunpack.c.l.b16 %v248
        %v821 = vunpack.c.h.b16 %v248
        %v822 = vunpack.c.l.b16 %v249
        %v823 = vunpack.c.h.b16 %v249
        %v824 = vunpack.c.l.b16 %v250
        %v825 = vunpack.c.h.b16 %v250
        %v826 = vunpack.c.l.b16 %v251
        %v827 = vunpack.c.h.b16 %v251
        %v828 = vunpack.c.l.b16 %v252
        %v829 = vunpack.c.h.b16 %v252
        %v830 = vunpack.c.l.b16 %v253
        %v831 = vunpack.c.h.b16 %v253
        %v832 = vunpack.c.l.b16 %v254
        %v833 = vunpack.c.h.b16 %v254
        %v834 = vunpack.c.l.b16 %v255
        %v835 = vunpack.c.h.b16 %v255
        %v836 = vunpack.c.l.b16 %v256
        %v837 = vunpack.c.h.b16 %v256
        %v838 = vunpack.c.l.b16 %v257
        %v839 = vunpack.c.h.b16 %v257
        %v840 = vpack.c.b16 %v824, %v808
        %v841 = vpack.c.b16 %v825, %v809
        %v842 = vpack.c.b16 %v826, %v810
        %v843 = vpack.c.b16 %v827, %v811
        %v844 = vpack.c.b16 %v828, %v812
        %v845 = vpack.c.b16 %v829, %v813
        %v846 = vpack.c.b16 %v830, %v814
        %v847 = vpack.c.b16 %v831, %v815
        %v848 = vpack.c.b16 %v832, %v816
        %v849 = vpack.c.b16 %v833, %v817
        %v850 = vpack.c.b16 %v834, %v818
        %v851 = vpack.c.b16 %v835, %v819
        %v852 = vpack.c.b16 %v836, %v820
        %v853 = vpack.c.b16 %v837, %v821
        %v854 = vpack.c.b16 %v838, %v822
        %v855 = vpack.c.b16 %v839, %v823
        %v1384 = vunpack.c.l.b16 %v258
        %v1385 = vunpack.c.h.b16 %v258
        %v1386 = vunpack.c.l.b16 %v259
        %v1387 = vunpack.c.h.b16 %v259
        %v1388 = vunpack.c.l.b16 %v260
        %v1389 = vunpack.c.h.b16 %v260
        %v1390 = vunpack.c.l.b16 %v261
        %v1391 = vunpack.c.h.b16 %v261
        %v1392 = vunpack.c.l.b16 %v262
        %v1393 = vunpack.c.h.b16 %v262
        %v1394 = vunpack.c.l.b16 %v263
        %v1395 = vunpack.c.h.b16 %v263
        %v1396 = vunpack.c.l.b16 %v264
        %v1397 = vunpack.c.h.b16 %v264
        %v1398 = vunpack.c.l.b16 %v265
        %v1399 = vunpack.c.h.b16 %v265
        %v1400 = vunpack.c.l.b16 %v266
        %v1401 = vunpack.c.h.b16 %v266
        %v1402 = vunpack.c.l.b16 %v267
        %v1403 = vunpack.c.h.b16 %v267
        %v1404 = vunpack.c.l.b16 %v268
        %v1405 = vunpack.c.h.b16 %v268
        %v1406 = vunpack.c.l.b16 %v269
        %v1407 = vunpack.c.h.b16 %v269
        %v1408 = vunpack.c.l.b16 %v270
        %v1409 = vunpack.c.h.b16 %v270
        %v1410 = vunpack.c.l.b16 %v271
        %v1411 = vunpack.c.h.b16 %v271
        %v1412 = vunpack.c.l.b16 %v272
        %v1413 = vunpack.c.h.b16 %v272
        %v1414 = vunpack.c.l.b16 %v273
        %v1415 = vunpack.c.h.b16 %v273
        %v1416 = vunpack.c.l.b16 %v274
        %v1417 = vunpack.c.h.b16 %v274
        %v1418 = vunpack.c.l.b16 %v275
        %v1419 = vunpack.c.h.b16 %v275
        %v1420 = vunpack.c.l.b16 %v276
        %v1421 = vunpack.c.h.b16 %v276
        %v1422 = vunpack.c.l.b16 %v277
        %v1423 = vunpack.c.h.b16 %v277
        %v1424 = vunpack.c.l.b16 %v278
        %v1425 = vunpack.c.h.b16 %v278
        %v1426 = vunpack.c.l.b16 %v279
        %v1427 = vunpack.c.h.b16 %v279
        %v1428 = vunpack.c.l.b16 %v280
        %v1429 = vunpack.c.h.b16 %v280
        %v1430 = vunpack.c.l.b16 %v281
        %v1431 = vunpack.c.h.b16 %v281
        %v1432 = vunpack.c.l.b16 %v282
        %v1433 = vunpack.c.h.b16 %v282
        %v1434 = vunpack.c.l.b16 %v283
        %v1435 = vunpack.c.h.b16 %v283
        %v1436 = vunpack.c.l.b16 %v284
        %v1437 = vunpack.c.h.b16 %v284
        %v1438 = vunpack.c.l.b16 %v285
        %v1439 = vunpack.c.h.b16 %v285
        %v1440 = vunpack.c.l.b16 %v286
        %v1441 = vunpack.c.h.b16 %v286
        %v1442 = vunpack.c.l.b16 %v287
        %v1443 = vunpack.c.h.b16 %v287
        %v1444 = vunpack.c.l.b16 %v288
        %v1445 = vunpack.c.h.b16 %v288
        %v1446 = vunpack.c.l.b16 %v289
        %v1447 = vunpack.c.h.b16 %v289
        %v1448 = vunpack.c.l.b16 %v290
        %v1449 = vunpack.c.h.b16 %v290
        %v1450 = vunpack.c.l.b16 %v291
        %v1451 = vunpack.c.h.b16 %v291
        %v1452 = vunpack.c.l.b16 %v292
        %v1453 = vunpack.c.h.b16 %v292
        %v1454 = vunpack.c.l.b16 %v293
        %v1455 = vunpack.c.h.b16 %v293
        %v1456 = vunpack.c.l.b16 %v294
        %v1457 = vunpack.c.h.b16 %v294
        %v1458 = vunpack.c.l.b16 %v295
        %v1459 = vunpack.c.h.b16 %v295
        %v1460 = vunpack.c.l.b16 %v296
        %v1461 = vunpack.c.h.b16 %v296
        %v1462 = vunpack.c.l.b16 %v297
        %v1463 = vunpack.c.h.b16 %v297
        %v1464 = vunpack.c.l.b16 %v298
        %v1465 = vunpack.c.h.b16 %v298
        %v1466 = vunpack.c.l.b16 %v299
        %v1467 = vunpack.c.h.b16 %v299
        %v1468 = vunpack.c.l.b16 %v300
        %v1469 = vunpack.c.h.b16 %v300
        %v1470 = vunpack.c.l.b16 %v301
        %v1471 = vunpack.c.h.b16 %v301
        %v1472 = vunpack.c.l.b16 %v302
        %v1473 = vunpack.c.h.b16 %v302
        %v1474 = vunpack.c.l.b16 %v303
        %v1475 = vunpack.c.h.b16 %v303
        %v1476 = vunpack.c.l.b16 %v304
        %v1477 = vunpack.c.h.b16 %v304
        %v1478 = vunpack.c.l.b16 %v305
        %v1479 = vunpack.c.h.b16 %v305
        %v1480 = vunpack.c.l.b16 %v306
        %v1481 = vunpack.c.h.b16 %v306
        %v1482 = vunpack.c.l.b16 %v307
        %v1483 = vunpack.c.h.b16 %v307
        %v1484 = vunpack.c.l.b16 %v308
        %v1485 = vunpack.c.h.b16 %v308
        %v1486 = vunpack.c.l.b16 %v309
        %v1487 = vunpack.c.h.b16 %v309
        %v1488 = vunpack.c.l.b16 %v310
        %v1489 = vunpack.c.h.b16 %v310
        %v1490 = vunpack.c.l.b16 %v311
        %v1491 = vunpack.c.h.b16 %v311
        %v1492 = vunpack.c.l.b16 %v312
        %v1493 = vunpack.c.h.b16 %v312
        %v1494 = vunpack.c.l.b16 %v313
        %v1495 = vunpack.c.h.b16 %v313
        %v1496 = vunpack.c.l.b16 %v314
        %v1497 = vunpack.c.h.b16 %v314
        %v1498 = vunpack.c.l.b16 %v315
        %v1499 = vunpack.c.h.b16 %v315
        %v1500 = vunpack.c.l.b16 %v316
        %v1501 = vunpack.c.h.b16 %v316
        %v1502 = vunpack.c.l.b16 %v317
        %v1503 = vunpack.c.h.b16 %v317
        %v1504 = vunpack.c.l.b16 %v318
        %v1505 = vunpack.c.h.b16 %v318
        %v1506 = vunpack.c.l.b16 %v319
        %v1507 = vunpack.c.h.b16 %v319
        %v1508 = vunpack.c.l.b16 %v320
        %v1509 = vunpack.c.h.b16 %v320
        %v1510 = vunpack.c.l.b16 %v321
        %v1511 = vunpack.c.h.b16 %v321
        %v1512 = vunpack.c.l.b16 %v322
        %v1513 = vunpack.c.h.b16 %v322
        %v1514 = vunpack.c.l.b16 %v323
        %v1515 = vunpack.c.h.b16 %v323
        %v1516 = vunpack.c.l.b16 %v324
        %v1517 = vunpack.c.h.b16 %v324
        %v1518 = vunpack.c.l.b16 %v325
        %v1519 = vunpack.c.h.b16 %v325
        %v1520 = vunpack.c.l.b16 %v326
        %v1521 = vunpack.c.h.b16 %v326
        %v1522 = vunpack.c.l.b16 %v327
        %v1523 = vunpack.c.h.b16 %v327
        %v1524 = vunpack.c.l.b16 %v328
        %v1525 = vunpack.c.h.b16 %v328
        %v1526 = vunpack.c.l.b16 %v329
        %v1527 = vunpack.c.h.b16 %v329
        %v1528 = vunpack.c.l.b16 %v330
        %v1529 = vunpack.c.h.b16 %v330
        %v1530 = vunpack.c.l.b16 %v331
        %v1531 = vunpack.c.h.b16 %v331
        %v1532 = vunpack.c.l.b16 %v332
        %v1533 = vunpack.c.h.b16 %v332
        %v1534 = vunpack.c.l.b16 %v333
        %v1535 = vunpack.c.h.b16 %v333
        %v1536 = vunpack.c.l.b16 %v334
        %v1537 = vunpack.c.h.b16 %v334
        %v1538 = vunpack.c.l.b16 %v335
        %v1539 = vunpack.c.h.b16 %v335
        %v1540 = vunpack.c.l.b16 %v336
        %v1541 = vunpack.c.h.b16 %v336
        %v1542 = vunpack.c.l.b16 %v337
        %v1543 = vunpack.c.h.b16 %v337
        %v1544 = vunpack.c.l.b16 %v338
        %v1545 = vunpack.c.h.b16 %v338
        %v1546 = vunpack.c.l.b16 %v339
        %v1547 = vunpack.c.h.b16 %v339
        %v1548 = vunpack.c.l.b16 %v340
        %v1549 = vunpack.c.h.b16 %v340
        %v1550 = vunpack.c.l.b16 %v341
        %v1551 = vunpack.c.h.b16 %v341
        %v1552 = vunpack.c.l.b16 %v342
        %v1553 = vunpack.c.h.b16 %v342
        %v1554 = vunpack.c.l.b16 %v343
        %v1555 = vunpack.c.h.b16 %v343
        %v1556 = vunpack.c.l.b16 %v344
        %v1557 = vunpack.c.h.b16 %v344
        %v1558 = vunpack.c.l.b16 %v345
        %v1559 = vunpack.c.h.b16 %v345
        %v1560 = vunpack.c.l.b16 %v346
        %v1561 = vunpack.c.h.b16 %v346
        %v1562 = vunpack.c.l.b16 %v347
        %v1563 = vunpack.c.h.b16 %v347
        %v1564 = vunpack.c.l.b16 %v348
        %v1565 = vunpack.c.h.b16 %v348
        %v1566 = vunpack.c.l.b16 %v349
        %v1567 = vunpack.c.h.b16 %v349
        %v1568 = vunpack.c.l.b16 %v350
        %v1569 = vunpack.c.h.b16 %v350
        %v1570 = vunpack.c.l.b16 %v351
        %v1571 = vunpack.c.h.b16 %v351
        %v1572 = vunpack.c.l.b16 %v352
        %v1573 = vunpack.c.h.b16 %v352
        %v1574 = vunpack.c.l.b16 %v353
        %v1575 = vunpack.c.h.b16 %v353
        %v1576 = vunpack.c.l.b16 %v354
        %v1577 = vunpack.c.h.b16 %v354
        %v1578 = vunpack.c.l.b16 %v355
        %v1579 = vunpack.c.h.b16 %v355
        %v1580 = vunpack.c.l.b16 %v356
        %v1581 = vunpack.c.h.b16 %v356
        %v1582 = vunpack.c.l.b16 %v357
        %v1583 = vunpack.c.h.b16 %v357
        %v1584 = vunpack.c.l.b16 %v358
        %v1585 = vunpack.c.h.b16 %v358
        %v1586 = vunpack.c.l.b16 %v359
        %v1587 = vunpack.c.h.b16 %v359
        %v1588 = vunpack.c.l.b16 %v360
        %v1589 = vunpack.c.h.b16 %v360
        %v1590 = vunpack.c.l.b16 %v361
        %v1591 = vunpack.c.h.b16 %v361
        %v1592 = vunpack.c.l.b16 %v362
        %v1593 = vunpack.c.h.b16 %v362
        %v1594 = vunpack.c.l.b16 %v363
        %v1595 = vunpack.c.h.b16 %v363
        %v1596 = vunpack.c.l.b16 %v364
        %v1597 = vunpack.c.h.b16 %v364
        %v1598 = vunpack.c.l.b16 %v365
        %v1599 = vunpack.c.h.b16 %v365
        %v1600 = vunpack.c.l.b16 %v366
        %v1601 = vunpack.c.h.b16 %v366
        %v1602 = vunpack.c.l.b16 %v367
        %v1603 = vunpack.c.h.b16 %v367
        %v1604 = vunpack.c.l.b16 %v368
        %v1605 = vunpack.c.h.b16 %v368
        %v1606 = vunpack.c.l.b16 %v369
        %v1607 = vunpack.c.h.b16 %v369
        %v1608 = vunpack.c.l.b16 %v370
        %v1609 = vunpack.c.h.b16 %v370
        %v1610 = vunpack.c.l.b16 %v371
        %v1611 = vunpack.c.h.b16 %v371
        %v1612 = vunpack.c.l.b16 %v372
        %v1613 = vunpack.c.h.b16 %v372
        %v1614 = vunpack.c.l.b16 %v373
        %v1615 = vunpack.c.h.b16 %v373
        %v1616 = vunpack.c.l.b16 %v374
        %v1617 = vunpack.c.h.b16 %v374
        %v1618 = vunpack.c.l.b16 %v375
        %v1619 = vunpack.c.h.b16 %v375
        %v1620 = vunpack.c.l.b16 %v376
        %v1621 = vunpack.c.h.b16 %v376
        %v1622 = vunpack.c.l.b16 %v377
        %v1623 = vunpack.c.h.b16 %v377
        %v1624 = vunpack.c.l.b16 %v378
        %v1625 = vunpack.c.h.b16 %v378
        %v1626 = vunpack.c.l.b16 %v379
        %v1627 = vunpack.c.h.b16 %v379
        %v1628 = vunpack.c.l.b16 %v380
        %v1629 = vunpack.c.h.b16 %v380
        %v1630 = vunpack.c.l.b16 %v381
        %v1631 = vunpack.c.h.b16 %v381
        %v1632 = vunpack.c.l.b16 %v382
        %v1633 = vunpack.c.h.b16 %v382
        %v1634 = vunpack.c.l.b16 %v383
        %v1635 = vunpack.c.h.b16 %v383
        %v1636 = vunpack.c.l.b16 %v384
        %v1637 = vunpack.c.h.b16 %v384
        %v1638 = vunpack.c.l.b16 %v385
        %v1639 = vunpack.c.h.b16 %v385
        %v1640 = vunpack.c.l.b16 %v386
        %v1641 = vunpack.c.h.b16 %v386
        %v1642 = vunpack.c.l.b16 %v387
        %v1643 = vunpack.c.h.b16 %v387
        %v1644 = vunpack.c.l.b16 %v388
        %v1645 = vunpack.c.h.b16 %v388
        %v1646 = vunpack.c.l.b16 %v389
        %v1647 = vunpack.c.h.b16 %v389
        %v1648 = vunpack.c.l.b16 %v390
        %v1649 = vunpack.c.h.b16 %v390
        %v1650 = vunpack.c.l.b16 %v391
        %v1651 = vunpack.c.h.b16 %v391
        %v1652 = vunpack.c.l.b16 %v392
        %v1653 = vunpack.c.h.b16 %v392
        %v1654 = vunpack.c.l.b16 %v393
        %v1655 = vunpack.c.h.b16 %v393
        %v1656 = vunpack.c.l.b16 %v394
        %v1657 = vunpack.c.h.b16 %v394
        %v1658 = vunpack.c.l.b16 %v395
        %v1659 = vunpack.c.h.b16 %v395
        %v1660 = vunpack.c.l.b16 %v396
        %v1661 = vunpack.c.h.b16 %v396
        %v1662 = vunpack.c.l.b16 %v397
        %v1663 = vunpack.c.h.b16 %v397
        %v1664 = vunpack.c.l.b16 %v398
        %v1665 = vunpack.c.h.b16 %v398
        %v1666 = vunpack.c.l.b16 %v399
        %v1667 = vunpack.c.h.b16 %v399
        %v1668 = vunpack.c.l.b16 %v400
        %v1669 = vunpack.c.h.b16 %v400
        %v1670 = vunpack.c.l.b16 %v401
        %v1671 = vunpack.c.h.b16 %v401
        %v1672 = vunpack.c.l.b16 %v402
        %v1673 = vunpack.c.h.b16 %v402
        %v1674 = vunpack.c.l.b16 %v403
        %v1675 = vunpack.c.h.b16 %v403
        %v1676 = vunpack.c.l.b16 %v404
        %v1677 = vunpack.c.h.b16 %v404
        %v1678 = vunpack.c.l.b16 %v405
        %v1679 = vunpack.c.h.b16 %v405
        %v1680 = vunpack.c.l.b16 %v406
        %v1681 = vunpack.c.h.b16 %v406
        %v1682 = vunpack.c.l.b16 %v407
        %v1683 = vunpack.c.h.b16 %v407
        %v1684 = vunpack.c.l.b16 %v408
        %v1685 = vunpack.c.h.b16 %v408
        %v1686 = vunpack.c.l.b16 %v409
        %v1687 = vunpack.c.h.b16 %v409
        %v1688 = vunpack.c.l.b16 %v410
        %v1689 = vunpack.c.h.b16 %v410
        %v1690 = vunpack.c.l.b16 %v411
        %v1691 = vunpack.c.h.b16 %v411
        %v1692 = vunpack.c.l.b16 %v412
        %v1693 = vunpack.c.h.b16 %v412
        %v1694 = vunpack.c.l.b16 %v413
        %v1695 = vunpack.c.h.b16 %v413
        %v1696 = vunpack.c.l.b16 %v414
        %v1697 = vunpack.c.h.b16 %v414
        %v1698 = vunpack.c.l.b16 %v415
        %v1699 = vunpack.c.h.b16 %v415
        %v1700 = vunpack.c.l.b16 %v416
        %v1701 = vunpack.c.h.b16 %v416
        %v1702 = vunpack.c.l.b16 %v417
        %v1703 = vunpack.c.h.b16 %v417
        %v1704 = vunpack.c.l.b16 %v418
        %v1705 = vunpack.c.h.b16 %v418
        %v1706 = vunpack.c.l.b16 %v419
        %v1707 = vunpack.c.h.b16 %v419
        %v1708 = vunpack.c.l.b16 %v420
        %v1709 = vunpack.c.h.b16 %v420
        %v1710 = vunpack.c.l.b16 %v421
        %v1711 = vunpack.c.h.b16 %v421
        %v1712 = vunpack.c.l.b16 %v422
        %v1713 = vunpack.c.h.b16 %v422
        %v1714 = vunpack.c.l.b16 %v423
        %v1715 = vunpack.c.h.b16 %v423
        %v1716 = vunpack.c.l.b16 %v424
        %v1717 = vunpack.c.h.b16 %v424
        %v1718 = vunpack.c.l.b16 %v425
        %v1719 = vunpack.c.h.b16 %v425
        %v1720 = vunpack.c.l.b16 %v426
        %v1721 = vunpack.c.h.b16 %v426
        %v1722 = vunpack.c.l.b16 %v427
        %v1723 = vunpack.c.h.b16 %v427
        %v1724 = vunpack.c.l.b16 %v428
        %v1725 = vunpack.c.h.b16 %v428
        %v1726 = vunpack.c.l.b16 %v429
        %v1727 = vunpack.c.h.b16 %v429
        %v1728 = vunpack.c.l.b16 %v430
        %v1729 = vunpack.c.h.b16 %v430
        %v1730 = vunpack.c.l.b16 %v431
        %v1731 = vunpack.c.h.b16 %v431
        %v1732 = vunpack.c.l.b16 %v432
        %v1733 = vunpack.c.h.b16 %v432
        %v1734 = vunpack.c.l.b16 %v433
        %v1735 = vunpack.c.h.b16 %v433
        %v1736 = vunpack.c.l.b16 %v434
        %v1737 = vunpack.c.h.b16 %v434
        %v1738 = vunpack.c.l.b16 %v435
        %v1739 = vunpack.c.h.b16 %v435
        %v1740 = vunpack.c.l.b16 %v436
        %v1741 = vunpack.c.h.b16 %v436
        %v1742 = vunpack.c.l.b16 %v437
        %v1743 = vunpack.c.h.b16 %v437
        %v1744 = vunpack.c.l.b16 %v438
        %v1745 = vunpack.c.h.b16 %v438
        %v1746 = vunpack.c.l.b16 %v439
        %v1747 = vunpack.c.h.b16 %v439
        %v1748 = vunpack.c.l.b16 %v440
        %v1749 = vunpack.c.h.b16 %v440
        %v1750 = vunpack.c.l.b16 %v441
        %v1751 = vunpack.c.h.b16 %v441
        %v1752 = vunpack.c.l.b16 %v442
        %v1753 = vunpack.c.h.b16 %v442
        %v1754 = vunpack.c.l.b16 %v443
        %v1755 = vunpack.c.h.b16 %v443
        %v1756 = vunpack.c.l.b16 %v444
        %v1757 = vunpack.c.h.b16 %v444
        %v1758 = vunpack.c.l.b16 %v445
        %v1759 = vunpack.c.h.b16 %v445
        %v1760 = vunpack.c.l.b16 %v446
        %v1761 = vunpack.c.h.b16 %v446
        %v1762 = vunpack.c.l.b16 %v447
        %v1763 = vunpack.c.h.b16 %v447
        %v1764 = vunpack.c.l.b16 %v448
        %v1765 = vunpack.c.h.b16 %v448
        %v1766 = vunpack.c.l.b16 %v449
        %v1767 = vunpack.c.h.b16 %v449
        %v1768 = vunpack.c.l.b16 %v450
        %v1769 = vunpack.c.h.b16 %v450
        %v1770 = vunpack.c.l.b16 %v451
        %v1771 = vunpack.c.h.b16 %v451
        %v1772 = vunpack.c.l.b16 %v452
        %v1773 = vunpack.c.h.b16 %v452
        %v1774 = vunpack.c.l.b16 %v453
        %v1775 = vunpack.c.h.b16 %v453
        %v1776 = vunpack.c.l.b16 %v454
        %v1777 = vunpack.c.h.b16 %v454
        %v1778 = vunpack.c.l.b16 %v455
        %v1779 = vunpack.c.h.b16 %v455
        %v1780 = vunpack.c.l.b16 %v456
        %v1781 = vunpack.c.h.b16 %v456
        %v1782 = vunpack.c.l.b16 %v457
        %v1783 = vunpack.c.h.b16 %v457
        %v1784 = vunpack.c.l.b16 %v458
        %v1785 = vunpack.c.h.b16 %v458
        %v1786 = vunpack.c.l.b16 %v459
        %v1787 = vunpack.c.h.b16 %v459
        %v1788 = vunpack.c.l.b16 %v460
        %v1789 = vunpack.c.h.b16 %v460
        %v1790 = vunpack.c.l.b16 %v461
        %v1791 = vunpack.c.h.b16 %v461
        %v1792 = vunpack.c.l.b16 %v462
        %v1793 = vunpack.c.h.b16 %v462
        %v1794 = vunpack.c.l.b16 %v463
        %v1795 = vunpack.c.h.b16 %v463
        %v1796 = vunpack.c.l.b16 %v464
        %v1797 = vunpack.c.h.b16 %v464
        %v1798 = vunpack.c.l.b16 %v465
        %v1799 = vunpack.c.h.b16 %v465
        %v1800 = vunpack.c.l.b16 %v466
        %v1801 = vunpack.c.h.b16 %v466
        %v1802 = vunpack.c.l.b16 %v467
        %v1803 = vunpack.c.h.b16 %v467
        %v1804 = vunpack.c.l.b16 %v468
        %v1805 = vunpack.c.h.b16 %v468
        %v1806 = vunpack.c.l.b16 %v469
        %v1807 = vunpack.c.h.b16 %v469
        %v1808 = vunpack.c.l.b16 %v470
        %v1809 = vunpack.c.h.b16 %v470
        %v1810 = vunpack.c.l.b16 %v471
        %v1811 = vunpack.c.h.b16 %v471
        %v1812 = vunpack.c.l.b16 %v472
        %v1813 = vunpack.c.h.b16 %v472
        %v1814 = vunpack.c.l.b16 %v473
        %v1815 = vunpack.c.h.b16 %v473
        %v1816 = vunpack.c.l.b16 %v474
        %v1817 = vunpack.c.h.b16 %v474
        %v1818 = vunpack.c.l.b16 %v475
        %v1819 = vunpack.c.h.b16 %v475
        %v1820 = vunpack.c.l.b16 %v476
        %v1821 = vunpack.c.h.b16 %v476
        %v1822 = vunpack.c.l.b16 %v477
        %v1823 = vunpack.c.h.b16 %v477
        %v1824 = vunpack.c.l.b16 %v478
        %v1825 = vunpack.c.h.b16 %v478
        %v1826 = vunpack.c.l.b16 %v479
        %v1827 = vunpack.c.h.b16 %v479
        %v1828 = vunpack.c.l.b16 %v480
        %v1829 = vunpack.c.h.b16 %v480
        %v1830 = vunpack.c.l.b16 %v481
        %v1831 = vunpack.c.h.b16 %v481
        %v1832 = vunpack.c.l.b16 %v482
        %v1833 = vunpack.c.h.b16 %v482
        %v1834 = vunpack.c.l.b16 %v483
        %v1835 = vunpack.c.h.b16 %v483
        %v1836 = vunpack.c.l.b16 %v484
        %v1837 = vunpack.c.h.b16 %v484
        %v1838 = vunpack.c.l.b16 %v485
        %v1839 = vunpack.c.h.b16 %v485
        %v1840 = vunpack.c.l.b16 %v486
        %v1841 = vunpack.c.h.b16 %v486
        %v1842 = vunpack.c.l.b16 %v487
        %v1843 = vunpack.c.h.b16 %v487
        %v1844 = vunpack.c.l.b16 %v488
        %v1845 = vunpack.c.h.b16 %v488
        %v1846 = vunpack.c.l.b16 %v489
        %v1847 = vunpack.c.h.b16 %v489
        %v1848 = vunpack.c.l.b16 %v490
        %v1849 = vunpack.c.h.b16 %v490
        %v1850 = vunpack.c.l.b16 %v491
        %v1851 = vunpack.c.h.b16 %v491
        %v1852 = vunpack.c.l.b16 %v492
        %v1853 = vunpack.c.h.b16 %v492
        %v1854 = vunpack.c.l.b16 %v493
        %v1855 = vunpack.c.h.b16 %v493
        %v1856 = vunpack.c.l.b16 %v494
        %v1857 = vunpack.c.h.b16 %v494
        %v1858 = vunpack.c.l.b16 %v495
        %v1859 = vunpack.c.h.b16 %v495
        %v1860 = vunpack.c.l.b16 %v496
        %v1861 = vunpack.c.h.b16 %v496
        %v1862 = vunpack.c.l.b16 %v497
        %v1863 = vunpack.c.h.b16 %v497
        %v1864 = vunpack.c.l.b16 %v498
        %v1865 = vunpack.c.h.b16 %v498
        %v1866 = vunpack.c.l.b16 %v499
        %v1867 = vunpack.c.h.b16 %v499
        %v1868 = vunpack.c.l.b16 %v500
        %v1869 = vunpack.c.h.b16 %v500
        %v1870 = vunpack.c.l.b16 %v501
        %v1871 = vunpack.c.h.b16 %v501
        %v1872 = vunpack.c.l.b16 %v502
        %v1873 = vunpack.c.h.b16 %v502
        %v1874 = vunpack.c.l.b16 %v503
        %v1875 = vunpack.c.h.b16 %v503
        %v1876 = vunpack.c.l.b16 %v504
        %v1877 = vunpack.c.h.b16 %v504
        %v1878 = vunpack.c.l.b16 %v505
        %v1879 = vunpack.c.h.b16 %v505
        %v1880 = vunpack.c.l.b16 %v506
        %v1881 = vunpack.c.h.b16 %v506
        %v1882 = vunpack.c.l.b16 %v507
        %v1883 = vunpack.c.h.b16 %v507
        %v1884 = vunpack.c.l.b16 %v508
        %v1885 = vunpack.c.h.b16 %v508
        %v1886 = vunpack.c.l.b16 %v509
        %v1887 = vunpack.c.h.b16 %v509
        %v1888 = vunpack.c.l.b16 %v510
        %v1889 = vunpack.c.h.b16 %v510
        %v1890 = vunpack.c.l.b16 %v511
        %v1891 = vunpack.c.h.b16 %v511
        %v1892 = vunpack.c.l.b16 %v512
        %v1893 = vunpack.c.h.b16 %v512
        %v1894 = vunpack.c.l.b16 %v513
        %v1895 = vunpack.c.h.b16 %v513
        %v1896 = vunpack.c.l.b16 %v514
        %v1897 = vunpack.c.h.b16 %v514
        %v1898 = vunpack.c.l.b16 %v515
        %v1899 = vunpack.c.h.b16 %v515
        %v1900 = vunpack.c.l.b16 %v516
        %v1901 = vunpack.c.h.b16 %v516
        %v1902 = vunpack.c.l.b16 %v517
        %v1903 = vunpack.c.h.b16 %v517
        %v1904 = vunpack.c.l.b16 %v518
        %v1905 = vunpack.c.h.b16 %v518
        %v1906 = vunpack.c.l.b16 %v519
        %v1907 = vunpack.c.h.b16 %v519
        %v1908 = vunpack.c.l.b16 %v520
        %v1909 = vunpack.c.h.b16 %v520
        %v1910 = vunpack.c.l.b16 %v521
        %v1911 = vunpack.c.h.b16 %v521
        %v1912 = vunpack.c.l.b16 %v522
        %v1913 = vunpack.c.h.b16 %v522
        %v1914 = vunpack.c.l.b16 %v523
        %v1915 = vunpack.c.h.b16 %v523
        %v1916 = vunpack.c.l.b16 %v524
        %v1917 = vunpack.c.h.b16 %v524
        %v1918 = vunpack.c.l.b16 %v525
        %v1919 = vunpack.c.h.b16 %v525
        %v1920 = vunpack.c.l.b16 %v526
        %v1921 = vunpack.c.h.b16 %v526
        %v1922 = vunpack.c.l.b16 %v527
        %v1923 = vunpack.c.h.b16 %v527
        %v1924 = vunpack.c.l.b16 %v528
        %v1925 = vunpack.c.h.b16 %v528
        %v1926 = vunpack.c.l.b16 %v529
        %v1927 = vunpack.c.h.b16 %v529
        %v1928 = vunpack.c.l.b16 %v530
        %v1929 = vunpack.c.h.b16 %v530
        %v1930 = vunpack.c.l.b16 %v531
        %v1931 = vunpack.c.h.b16 %v531
        %v1932 = vunpack.c.l.b16 %v532
        %v1933 = vunpack.c.h.b16 %v532
        %v1934 = vunpack.c.l.b16 %v533
        %v1935 = vunpack.c.h.b16 %v533
        %v1936 = vunpack.c.l.b16 %v534
        %v1937 = vunpack.c.h.b16 %v534
        %v1938 = vunpack.c.l.b16 %v535
        %v1939 = vunpack.c.h.b16 %v535
        %v1940 = vunpack.c.l.b16 %v536
        %v1941 = vunpack.c.h.b16 %v536
        %v1942 = vunpack.c.l.b16 %v537
        %v1943 = vunpack.c.h.b16 %v537
        %v1944 = vunpack.c.l.b16 %v538
        %v1945 = vunpack.c.h.b16 %v538
        %v1946 = vunpack.c.l.b16 %v539
        %v1947 = vunpack.c.h.b16 %v539
        %v1948 = vunpack.c.l.b16 %v540
        %v1949 = vunpack.c.h.b16 %v540
        %v1950 = vunpack.c.l.b16 %v541
        %v1951 = vunpack.c.h.b16 %v541
        %v1952 = vunpack.c.l.b16 %v542
        %v1953 = vunpack.c.h.b16 %v542
        %v1954 = vunpack.c.l.b16 %v543
        %v1955 = vunpack.c.h.b16 %v543
        %v1956 = vunpack.c.l.b16 %v544
        %v1957 = vunpack.c.h.b16 %v544
        %v1958 = vunpack.c.l.b16 %v545
        %v1959 = vunpack.c.h.b16 %v545
        %v1960 = vunpack.c.l.b16 %v546
        %v1961 = vunpack.c.h.b16 %v546
        %v1962 = vunpack.c.l.b16 %v547
        %v1963 = vunpack.c.h.b16 %v547
        %v1964 = vunpack.c.l.b16 %v548
        %v1965 = vunpack.c.h.b16 %v548
        %v1966 = vunpack.c.l.b16 %v549
        %v1967 = vunpack.c.h.b16 %v549
        %v1968 = vunpack.c.l.b16 %v550
        %v1969 = vunpack.c.h.b16 %v550
        %v1970 = vunpack.c.l.b16 %v551
        %v1971 = vunpack.c.h.b16 %v551
        %v1972 = vunpack.c.l.b16 %v552
        %v1973 = vunpack.c.h.b16 %v552
        %v1974 = vunpack.c.l.b16 %v553
        %v1975 = vunpack.c.h.b16 %v553
        %v1976 = vunpack.c.l.b16 %v554
        %v1977 = vunpack.c.h.b16 %v554
        %v1978 = vunpack.c.l.b16 %v555
        %v1979 = vunpack.c.h.b16 %v555
        %v1980 = vunpack.c.l.b16 %v556
        %v1981 = vunpack.c.h.b16 %v556
        %v1982 = vunpack.c.l.b16 %v557
        %v1983 = vunpack.c.h.b16 %v557
        %v1984 = vunpack.c.l.b16 %v558
        %v1985 = vunpack.c.h.b16 %v558
        %v1986 = vunpack.c.l.b16 %v559
        %v1987 = vunpack.c.h.b16 %v559
        %v1988 = vunpack.c.l.b16 %v560
        %v1989 = vunpack.c.h.b16 %v560
        %v1990 = vunpack.c.l.b16 %v561
        %v1991 = vunpack.c.h.b16 %v561
        %v1992 = vunpack.c.l.b16 %v562
        %v1993 = vunpack.c.h.b16 %v562
        %v1994 = vunpack.c.l.b16 %v563
        %v1995 = vunpack.c.h.b16 %v563
        %v1996 = vunpack.c.l.b16 %v564
        %v1997 = vunpack.c.h.b16 %v564
        %v1998 = vunpack.c.l.b16 %v565
        %v1999 = vunpack.c.h.b16 %v565
        %v2000 = vunpack.c.l.b16 %v566
        %v2001 = vunpack.c.h.b16 %v566
        %v2002 = vunpack.c.l.b16 %v567
        %v2003 = vunpack.c.h.b16 %v567
        %v2004 = vunpack.c.l.b16 %v568
        %v2005 = vunpack.c.h.b16 %v568
        %v2006 = vunpack.c.l.b16 %v569
        %v2007 = vunpack.c.h.b16 %v569
        %v2008 = vunpack.c.l.b16 %v570
        %v2009 = vunpack.c.h.b16 %v570
        %v2010 = vunpack.c.l.b16 %v571
        %v2011 = vunpack.c.h.b16 %v571
        %v2012 = vunpack.c.l.b16 %v572
        %v2013 = vunpack.c.h.b16 %v572
        %v2014 = vunpack.c.l.b16 %v573
        %v2015 = vunpack.c.h.b16 %v573
        %v2016 = vunpack.c.l.b16 %v574
        %v2017 = vunpack.c.h.b16 %v574
        %v2018 = vunpack.c.l.b16 %v575
        %v2019 = vunpack.c.h.b16 %v575
        %v2020 = vunpack.c.l.b16 %v576
        %v2021 = vunpack.c.h.b16 %v576
        %v2022 = vunpack.c.l.b16 %v577
        %v2023 = vunpack.c.h.b16 %v577
        %v2024 = vunpack.c.l.b16 %v578
        %v2025 = vunpack.c.h.b16 %v578
        %v2026 = vunpack.c.l.b16 %v579
        %v2027 = vunpack.c.h.b16 %v579
        %v2028 = vunpack.c.l.b16 %v580
        %v2029 = vunpack.c.h.b16 %v580
        %v2030 = vunpack.c.l.b16 %v581
        %v2031 = vunpack.c.h.b16 %v581
        %v2032 = vunpack.c.l.b16 %v582
        %v2033 = vunpack.c.h.b16 %v582
        %v2034 = vunpack.c.l.b16 %v583
        %v2035 = vunpack.c.h.b16 %v583
        %v2036 = vunpack.c.l.b16 %v584
        %v2037 = vunpack.c.h.b16 %v584
        %v2038 = vunpack.c.l.b16 %v585
        %v2039 = vunpack.c.h.b16 %v585
        %v2040 = vunpack.c.l.b16 %v586
        %v2041 = vunpack.c.h.b16 %v586
        %v2042 = vunpack.c.l.b16 %v587
        %v2043 = vunpack.c.h.b16 %v587
        %v2044 = vunpack.c.l.b16 %v588
        %v2045 = vunpack.c.h.b16 %v588
        %v2046 = vunpack.c.l.b16 %v589
        %v2047 = vunpack.c.h.b16 %v589
        %v2048 = vunpack.c.l.b16 %v590
        %v2049 = vunpack.c.h.b16 %v590
        %v2050 = vunpack.c.l.b16 %v591
        %v2051 = vunpack.c.h.b16 %v591
        %v2052 = vunpack.c.l.b16 %v592
        %v2053 = vunpack.c.h.b16 %v592
        %v2054 = vunpack.c.l.b16 %v593
        %v2055 = vunpack.c.h.b16 %v593
        %v2056 = vunpack.c.l.b16 %v594
        %v2057 = vunpack.c.h.b16 %v594
        %v2058 = vunpack.c.l.b16 %v595
        %v2059 = vunpack.c.h.b16 %v595
        %v2060 = vunpack.c.l.b16 %v596
        %v2061 = vunpack.c.h.b16 %v596
        %v2062 = vunpack.c.l.b16 %v597
        %v2063 = vunpack.c.h.b16 %v597
        %v2064 = vunpack.c.l.b16 %v598
        %v2065 = vunpack.c.h.b16 %v598
        %v2066 = vunpack.c.l.b16 %v599
        %v2067 = vunpack.c.h.b16 %v599
        %v2068 = vunpack.c.l.b16 %v600
        %v2069 = vunpack.c.h.b16 %v600
        %v2070 = vunpack.c.l.b16 %v601
        %v2071 = vunpack.c.h.b16 %v601
        %v2072 = vunpack.c.l.b16 %v602
        %v2073 = vunpack.c.h.b16 %v602
        %v2074 = vunpack.c.l.b16 %v603
        %v2075 = vunpack.c.h.b16 %v603
        %v2076 = vunpack.c.l.b16 %v604
        %v2077 = vunpack.c.h.b16 %v604
        %v2078 = vunpack.c.l.b16 %v605
        %v2079 = vunpack.c.h.b16 %v605
        %v2080 = vunpack.c.l.b16 %v606
        %v2081 = vunpack.c.h.b16 %v606
        %v2082 = vunpack.c.l.b16 %v607
        %v2083 = vunpack.c.h.b16 %v607
        %v2084 = vunpack.c.l.b16 %v608
        %v2085 = vunpack.c.h.b16 %v608
        %v2086 = vunpack.c.l.b16 %v609
        %v2087 = vunpack.c.h.b16 %v609
        %v2088 = vunpack.c.l.b16 %v610
        %v2089 = vunpack.c.h.b16 %v610
        %v2090 = vunpack.c.l.b16 %v611
        %v2091 = vunpack.c.h.b16 %v611
        %v2092 = vunpack.c.l.b16 %v612
        %v2093 = vunpack.c.h.b16 %v612
        %v2094 = vunpack.c.l.b16 %v613
        %v2095 = vunpack.c.h.b16 %v613
        %v2096 = vunpack.c.l.b16 %v614
        %v2097 = vunpack.c.h.b16 %v614
        %v2098 = vunpack.c.l.b16 %v615
        %v2099 = vunpack.c.h.b16 %v615
        %v2100 = vunpack.c.l.b16 %v616
        %v2101 = vunpack.c.h.b16 %v616
        %v2102 = vunpack.c.l.b16 %v617
        %v2103 = vunpack.c.h.b16 %v617
        %v2104 = vunpack.c.l.b16 %v618
        %v2105 = vunpack.c.h.b16 %v618
        %v2106 = vunpack.c.l.b16 %v619
        %v2107 = vunpack.c.h.b16 %v619
        %v2108 = vunpack.c.l.b16 %v620
        %v2109 = vunpack.c.h.b16 %v620
        %v2110 = vunpack.c.l.b16 %v621
        %v2111 = vunpack.c.h.b16 %v621
        %v2112 = vunpack.c.l.b16 %v622
        %v2113 = vunpack.c.h.b16 %v622
        %v2114 = vunpack.c.l.b16 %v623
        %v2115 = vunpack.c.h.b16 %v623
        %v2116 = vunpack.c.l.b16 %v624
        %v2117 = vunpack.c.h.b16 %v624
        %v2118 = vunpack.c.l.b16 %v625
        %v2119 = vunpack.c.h.b16 %v625
        %v2120 = vunpack.c.l.b16 %v626
        %v2121 = vunpack.c.h.b16 %v626
        %v2122 = vunpack.c.l.b16 %v627
        %v2123 = vunpack.c.h.b16 %v627
        %v2124 = vunpack.c.l.b16 %v628
        %v2125 = vunpack.c.h.b16 %v628
        %v2126 = vunpack.c.l.b16 %v629
        %v2127 = vunpack.c.h.b16 %v629
        %v2128 = vunpack.c.l.b16 %v630
        %v2129 = vunpack.c.h.b16 %v630
        %v2130 = vunpack.c.l.b16 %v631
        %v2131 = vunpack.c.h.b16 %v631
        %v2132 = vunpack.c.l.b16 %v632
        %v2133 = vunpack.c.h.b16 %v632
        %v2134 = vunpack.c.l.b16 %v633
        %v2135 = vunpack.c.h.b16 %v633
        %v2136 = vunpack.c.l.b16 %v634
        %v2137 = vunpack.c.h.b16 %v634
        %v2138 = vunpack.c.l.b16 %v635
        %v2139 = vunpack.c.h.b16 %v635
        %v2140 = vunpack.c.l.b16 %v636
        %v2141 = vunpack.c.h.b16 %v636
        %v2142 = vunpack.c.l.b16 %v637
        %v2143 = vunpack.c.h.b16 %v637
        %v2144 = vunpack.c.l.b16 %v638
        %v2145 = vunpack.c.h.b16 %v638
        %v2146 = vunpack.c.l.b16 %v639
        %v2147 = vunpack.c.h.b16 %v639
        %v2148 = vunpack.c.l.b16 %v640
        %v2149 = vunpack.c.h.b16 %v640
        %v2150 = vunpack.c.l.b16 %v641
        %v2151 = vunpack.c.h.b16 %v641
        %v2152 = vunpack.c.l.b16 %v642
        %v2153 = vunpack.c.h.b16 %v642
        %v2154 = vunpack.c.l.b16 %v643
        %v2155 = vunpack.c.h.b16 %v643
        %v2156 = vunpack.c.l.b16 %v644
        %v2157 = vunpack.c.h.b16 %v644
        %v2158 = vunpack.c.l.b16 %v645
        %v2159 = vunpack.c.h.b16 %v645
        %v2160 = vunpack.c.l.b16 %v646
        %v2161 = vunpack.c.h.b16 %v646
        %v2162 = vunpack.c.l.b16 %v647
        %v2163 = vunpack.c.h.b16 %v647
        %v2164 = vunpack.c.l.b16 %v648
        %v2165 = vunpack.c.h.b16 %v648
        %v2166 = vunpack.c.l.b16 %v649
        %v2167 = vunpack.c.h.b16 %v649
        %v2168 = vunpack.c.l.b16 %v650
        %v2169 = vunpack.c.h.b16 %v650
        %v2170 = vunpack.c.l.b16 %v651
        %v2171 = vunpack.c.h.b16 %v651
        %v2172 = vunpack.c.l.b16 %v652
        %v2173 = vunpack.c.h.b16 %v652
        %v2174 = vunpack.c.l.b16 %v653
        %v2175 = vunpack.c.h.b16 %v653
        %v2176 = vunpack.c.l.b16 %v654
        %v2177 = vunpack.c.h.b16 %v654
        %v2178 = vunpack.c.l.b16 %v655
        %v2179 = vunpack.c.h.b16 %v655
        %v2180 = vunpack.c.l.b16 %v656
        %v2181 = vunpack.c.h.b16 %v656
        %v2182 = vunpack.c.l.b16 %v657
        %v2183 = vunpack.c.h.b16 %v657
        %v2184 = vunpack.c.l.b16 %v658
        %v2185 = vunpack.c.h.b16 %v658
        %v2186 = vunpack.c.l.b16 %v659
        %v2187 = vunpack.c.h.b16 %v659
        %v2188 = vunpack.c.l.b16 %v660
        %v2189 = vunpack.c.h.b16 %v660
        %v2190 = vunpack.c.l.b16 %v661
        %v2191 = vunpack.c.h.b16 %v661
        %v2192 = vunpack.c.l.b16 %v662
        %v2193 = vunpack.c.h.b16 %v662
        %v2194 = vunpack.c.l.b16 %v663
        %v2195 = vunpack.c.h.b16 %v663
        %v2196 = vunpack.c.l.b16 %v664
        %v2197 = vunpack.c.h.b16 %v664
        %v2198 = vunpack.c.l.b16 %v665
        %v2199 = vunpack.c.h.b16 %v665
        %v2200 = vunpack.c.l.b16 %v666
        %v2201 = vunpack.c.h.b16 %v666
        %v2202 = vunpack.c.l.b16 %v667
        %v2203 = vunpack.c.h.b16 %v667
        %v2204 = vunpack.c.l.b16 %v668
        %v2205 = vunpack.c.h.b16 %v668
        %v2206 = vunpack.c.l.b16 %v669
        %v2207 = vunpack.c.h.b16 %v669
        %v2208 = vunpack.c.l.b16 %v670
        %v2209 = vunpack.c.h.b16 %v670
        %v2210 = vunpack.c.l.b16 %v671
        %v2211 = vunpack.c.h.b16 %v671
        %v2212 = vunpack.c.l.b16 %v672
        %v2213 = vunpack.c.h.b16 %v672
        %v2214 = vunpack.c.l.b16 %v673
        %v2215 = vunpack.c.h.b16 %v673
        %v2216 = vunpack.c.l.b16 %v674
        %v2217 = vunpack.c.h.b16 %v674
        %v2218 = vunpack.c.l.b16 %v675
        %v2219 = vunpack.c.h.b16 %v675
        %v2220 = vunpack.c.l.b16 %v676
        %v2221 = vunpack.c.h.b16 %v676
        %v2222 = vunpack.c.l.b16 %v677
        %v2223 = vunpack.c.h.b16 %v677
        %v2224 = vunpack.c.l.b16 %v678
        %v2225 = vunpack.c.h.b16 %v678
        %v2226 = vunpack.c.l.b16 %v679
        %v2227 = vunpack.c.h.b16 %v679
        %v2228 = vunpack.c.l.b16 %v680
        %v2229 = vunpack.c.h.b16 %v680
        %v2230 = vunpack.c.l.b16 %v681
        %v2231 = vunpack.c.h.b16 %v681
        %v2232 = vunpack.c.l.b16 %v682
        %v2233 = vunpack.c.h.b16 %v682
        %v2234 = vunpack.c.l.b16 %v683
        %v2235 = vunpack.c.h.b16 %v683
        %v2236 = vunpack.c.l.b16 %v684
        %v2237 = vunpack.c.h.b16 %v684
        %v2238 = vunpack.c.l.b16 %v685
        %v2239 = vunpack.c.h.b16 %v685
        %v2240 = vunpack.c.l.b16 %v686
        %v2241 = vunpack.c.h.b16 %v686
        %v2242 = vunpack.c.l.b16 %v687
        %v2243 = vunpack.c.h.b16 %v687
        %v2244 = vunpack.c.l.b16 %v688
        %v2245 = vunpack.c.h.b16 %v688
        %v2246 = vunpack.c.l.b16 %v689
        %v2247 = vunpack.c.h.b16 %v689
        %v2248 = vunpack.c.l.b16 %v690
        %v2249 = vunpack.c.h.b16 %v690
        %v2250 = vunpack.c.l.b16 %v691
        %v2251 = vunpack.c.h.b16 %v691
        %v2252 = vunpack.c.l.b16 %v692
        %v2253 = vunpack.c.h.b16 %v692
        %v2254 = vunpack.c.l.b16 %v693
        %v2255 = vunpack.c.h.b16 %v693
        %v2256 = vunpack.c.l.b16 %v694
        %v2257 = vunpack.c.h.b16 %v694
        %v2258 = vunpack.c.l.b16 %v695
        %v2259 = vunpack.c.h.b16 %v695
        %v2260 = vunpack.c.l.b16 %v696
        %v2261 = vunpack.c.h.b16 %v696
        %v2262 = vunpack.c.l.b16 %v697
        %v2263 = vunpack.c.h.b16 %v697
        %v2264 = vunpack.c.l.b16 %v698
        %v2265 = vunpack.c.h.b16 %v698
        %v2266 = vunpack.c.l.b16 %v699
        %v2267 = vunpack.c.h.b16 %v699
        %v2268 = vunpack.c.l.b16 %v700
        %v2269 = vunpack.c.h.b16 %v700
        %v2270 = vunpack.c.l.b16 %v701
        %v2271 = vunpack.c.h.b16 %v701
        %v2272 = vunpack.c.l.b16 %v702
        %v2273 = vunpack.c.h.b16 %v702
        %v2274 = vunpack.c.l.b16 %v703
        %v2275 = vunpack.c.h.b16 %v703
        %v2276 = vunpack.c.l.b16 %v704
        %v2277 = vunpack.c.h.b16 %v704
        %v2278 = vunpack.c.l.b16 %v705
        %v2279 = vunpack.c.h.b16 %v705
        %v2280 = vunpack.c.l.b16 %v706
        %v2281 = vunpack.c.h.b16 %v706
        %v2282 = vunpack.c.l.b16 %v707
        %v2283 = vunpack.c.h.b16 %v707
        %v2284 = vunpack.c.l.b16 %v708
        %v2285 = vunpack.c.h.b16 %v708
        %v2286 = vunpack.c.l.b16 %v709
        %v2287 = vunpack.c.h.b16 %v709
        %v2288 = vunpack.c.l.b16 %v710
        %v2289 = vunpack.c.h.b16 %v710
        %v2290 = vunpack.c.l.b16 %v711
        %v2291 = vunpack.c.h.b16 %v711
        %v2292 = vunpack.c.l.b16 %v712
        %v2293 = vunpack.c.h.b16 %v712
        %v2294 = vunpack.c.l.b16 %v713
        %v2295 = vunpack.c.h.b16 %v713
        %v2296 = vunpack.c.l.b16 %v714
        %v2297 = vunpack.c.h.b16 %v714
        %v2298 = vunpack.c.l.b16 %v715
        %v2299 = vunpack.c.h.b16 %v715
        %v2300 = vunpack.c.l.b16 %v716
        %v2301 = vunpack.c.h.b16 %v716
        %v2302 = vunpack.c.l.b16 %v717
        %v2303 = vunpack.c.h.b16 %v717
        %v2304 = vunpack.c.l.b16 %v718
        %v2305 = vunpack.c.h.b16 %v718
        %v2306 = vunpack.c.l.b16 %v719
        %v2307 = vunpack.c.h.b16 %v719
        %v2308 = vunpack.c.l.b16 %v720
        %v2309 = vunpack.c.h.b16 %v720
        %v2310 = vunpack.c.l.b16 %v721
        %v2311 = vunpack.c.h.b16 %v721
        %v2312 = vunpack.c.l.b16 %v722
        %v2313 = vunpack.c.h.b16 %v722
        %v2314 = vunpack.c.l.b16 %v723
        %v2315 = vunpack.c.h.b16 %v723
        %v2316 = vunpack.c.l.b16 %v724
        %v2317 = vunpack.c.h.b16 %v724
        %v2318 = vunpack.c.l.b16 %v725
        %v2319 = vunpack.c.h.b16 %v725
        %v2320 = vunpack.c.l.b16 %v726
        %v2321 = vunpack.c.h.b16 %v726
        %v2322 = vunpack.c.l.b16 %v727
        %v2323 = vunpack.c.h.b16 %v727
        %v2324 = vunpack.c.l.b16 %v728
        %v2325 = vunpack.c.h.b16 %v728
        %v2326 = vunpack.c.l.b16 %v729
        %v2327 = vunpack.c.h.b16 %v729
        %v2328 = vunpack.c.l.b16 %v730
        %v2329 = vunpack.c.h.b16 %v730
        %v2330 = vunpack.c.l.b16 %v731
        %v2331 = vunpack.c.h.b16 %v731
        %v2332 = vunpack.c.l.b16 %v732
        %v2333 = vunpack.c.h.b16 %v732
        %v2334 = vunpack.c.l.b16 %v733
        %v2335 = vunpack.c.h.b16 %v733
        %v2336 = vunpack.c.l.b16 %v734
        %v2337 = vunpack.c.h.b16 %v734
        %v2338 = vunpack.c.l.b16 %v735
        %v2339 = vunpack.c.h.b16 %v735
        %v2340 = vunpack.c.l.b16 %v736
        %v2341 = vunpack.c.h.b16 %v736
        %v2342 = vunpack.c.l.b16 %v737
        %v2343 = vunpack.c.h.b16 %v737
        %v2344 = vunpack.c.l.b16 %v738
        %v2345 = vunpack.c.h.b16 %v738
        %v2346 = vunpack.c.l.b16 %v739
        %v2347 = vunpack.c.h.b16 %v739
        %v2348 = vunpack.c.l.b16 %v740
        %v2349 = vunpack.c.h.b16 %v740
        %v2350 = vunpack.c.l.b16 %v741
        %v2351 = vunpack.c.h.b16 %v741
        %v2352 = vunpack.c.l.b16 %v742
        %v2353 = vunpack.c.h.b16 %v742
        %v2354 = vunpack.c.l.b16 %v743
        %v2355 = vunpack.c.h.b16 %v743
        %v2356 = vunpack.c.l.b16 %v744
        %v2357 = vunpack.c.h.b16 %v744
        %v2358 = vunpack.c.l.b16 %v745
        %v2359 = vunpack.c.h.b16 %v745
        %v2360 = vunpack.c.l.b16 %v746
        %v2361 = vunpack.c.h.b16 %v746
        %v2362 = vunpack.c.l.b16 %v747
        %v2363 = vunpack.c.h.b16 %v747
        %v2364 = vunpack.c.l.b16 %v748
        %v2365 = vunpack.c.h.b16 %v748
        %v2366 = vunpack.c.l.b16 %v749
        %v2367 = vunpack.c.h.b16 %v749
        %v2368 = vunpack.c.l.b16 %v750
        %v2369 = vunpack.c.h.b16 %v750
        %v2370 = vunpack.c.l.b16 %v751
        %v2371 = vunpack.c.h.b16 %v751
        %v2372 = vunpack.c.l.b16 %v752
        %v2373 = vunpack.c.h.b16 %v752
        %v2374 = vunpack.c.l.b16 %v753
        %v2375 = vunpack.c.h.b16 %v753
        %v2376 = vunpack.c.l.b16 %v754
        %v2377 = vunpack.c.h.b16 %v754
        %v2378 = vunpack.c.l.b16 %v755
        %v2379 = vunpack.c.h.b16 %v755
        %v2380 = vunpack.c.l.b16 %v756
        %v2381 = vunpack.c.h.b16 %v756
        %v2382 = vunpack.c.l.b16 %v757
        %v2383 = vunpack.c.h.b16 %v757
        %v2384 = vunpack.c.l.b16 %v758
        %v2385 = vunpack.c.h.b16 %v758
        %v2386 = vunpack.c.l.b16 %v759
        %v2387 = vunpack.c.h.b16 %v759
        %v2388 = vunpack.c.l.b16 %v760
        %v2389 = vunpack.c.h.b16 %v760
        %v2390 = vunpack.c.l.b16 %v761
        %v2391 = vunpack.c.h.b16 %v761
        %v2392 = vunpack.c.l.b16 %v762
        %v2393 = vunpack.c.h.b16 %v762
        %v2394 = vunpack.c.l.b16 %v763
        %v2395 = vunpack.c.h.b16 %v763
        %v2396 = vunpack.c.l.b16 %v764
        %v2397 = vunpack.c.h.b16 %v764
        %v2398 = vunpack.c.l.b16 %v765
        %v2399 = vunpack.c.h.b16 %v765
        %v2400 = vunpack.c.l.b16 %v766
        %v2401 = vunpack.c.h.b16 %v766
        %v2402 = vunpack.c.l.b16 %v767
        %v2403 = vunpack.c.h.b16 %v767
        %v2404 = vunpack.c.l.b16 %v768
        %v2405 = vunpack.c.h.b16 %v768
        %v2406 = vunpack.c.l.b16 %v769
        %v2407 = vunpack.c.h.b16 %v769
        %v2408 = vpack.c.b16 %v1388, %v1384
        %v2409 = vpack.c.b16 %v1389, %v1385
        %v2410 = vpack.c.b16 %v1390, %v1386
        %v2411 = vpack.c.b16 %v1391, %v1387
        %v2412 = vpack.c.b16 %v1396, %v1392
        %v2413 = vpack.c.b16 %v1397, %v1393
        %v2414 = vpack.c.b16 %v1398, %v1394
        %v2415 = vpack.c.b16 %v1399, %v1395
        %v2416 = vpack.c.b16 %v1404, %v1400
        %v2417 = vpack.c.b16 %v1405, %v1401
        %v2418 = vpack.c.b16 %v1406, %v1402
        %v2419 = vpack.c.b16 %v1407, %v1403
        %v2420 = vpack.c.b16 %v1412, %v1408
        %v2421 = vpack.c.b16 %v1413, %v1409
        %v2422 = vpack.c.b16 %v1414, %v1410
        %v2423 = vpack.c.b16 %v1415, %v1411
        %v2424 = vpack.c.b16 %v1420, %v1416
        %v2425 = vpack.c.b16 %v1421, %v1417
        %v2426 = vpack.c.b16 %v1422, %v1418
        %v2427 = vpack.c.b16 %v1423, %v1419
        %v2428 = vpack.c.b16 %v1428, %v1424
        %v2429 = vpack.c.b16 %v1429, %v1425
        %v2430 = vpack.c.b16 %v1430, %v1426
        %v2431 = vpack.c.b16 %v1431, %v1427
        %v2432 = vpack.c.b16 %v1436, %v1432
        %v2433 = vpack.c.b16 %v1437, %v1433
        %v2434 = vpack.c.b16 %v1438, %v1434
        %v2435 = vpack.c.b16 %v1439, %v1435
        %v2436 = vpack.c.b16 %v1444, %v1440
        %v2437 = vpack.c.b16 %v1445, %v1441
        %v2438 = vpack.c.b16 %v1446, %v1442
        %v2439 = vpack.c.b16 %v1447, %v1443
        %v2440 = vpack.c.b16 %v1452, %v1448
        %v2441 = vpack.c.b16 %v1453, %v1449
        %v2442 = vpack.c.b16 %v1454, %v1450
        %v2443 = vpack.c.b16 %v1455, %v1451
        %v2444 = vpack.c.b16 %v1460, %v1456
        %v2445 = vpack.c.b16 %v1461, %v1457
        %v2446 = vpack.c.b16 %v1462, %v1458
        %v2447 = vpack.c.b16 %v1463, %v1459
        %v2448 = vpack.c.b16 %v1468, %v1464
        %v2449 = vpack.c.b16 %v1469, %v1465
        %v2450 = vpack.c.b16 %v1470, %v1466
        %v2451 = vpack.c.b16 %v1471, %v1467
        %v2452 = vpack.c.b16 %v1476, %v1472
        %v2453 = vpack.c.b16 %v1477, %v1473
        %v2454 = vpack.c.b16 %v1478, %v1474
        %v2455 = vpack.c.b16 %v1479, %v1475
        %v2456 = vpack.c.b16 %v1484, %v1480
        %v2457 = vpack.c.b16 %v1485, %v1481
        %v2458 = vpack.c.b16 %v1486, %v1482
        %v2459 = vpack.c.b16 %v1487, %v1483
        %v2460 = vpack.c.b16 %v1492, %v1488
        %v2461 = vpack.c.b16 %v1493, %v1489
        %v2462 = vpack.c.b16 %v1494, %v1490
        %v2463 = vpack.c.b16 %v1495, %v1491
        %v2464 = vpack.c.b16 %v1500, %v1496
        %v2465 = vpack.c.b16 %v1501, %v1497
        %v2466 = vpack.c.b16 %v1502, %v1498
        %v2467 = vpack.c.b16 %v1503, %v1499
        %v2468 = vpack.c.b16 %v1508, %v1504
        %v2469 = vpack.c.b16 %v1509, %v1505
        %v2470 = vpack.c.b16 %v1510, %v1506
        %v2471 = vpack.c.b16 %v1511, %v1507
        %v2472 = vpack.c.b16 %v1516, %v1512
        %v2473 = vpack.c.b16 %v1517, %v1513
        %v2474 = vpack.c.b16 %v1518, %v1514
        %v2475 = vpack.c.b16 %v1519, %v1515
        %v2476 = vpack.c.b16 %v1524, %v1520
        %v2477 = vpack.c.b16 %v1525, %v1521
        %v2478 = vpack.c.b16 %v1526, %v1522
        %v2479 = vpack.c.b16 %v1527, %v1523
        %v2480 = vpack.c.b16 %v1532, %v1528
        %v2481 = vpack.c.b16 %v1533, %v1529
        %v2482 = vpack.c.b16 %v1534, %v1530
        %v2483 = vpack.c.b16 %v1535, %v1531
        %v2484 = vpack.c.b16 %v1540, %v1536
        %v2485 = vpack.c.b16 %v1541, %v1537
        %v2486 = vpack.c.b16 %v1542, %v1538
        %v2487 = vpack.c.b16 %v1543, %v1539
        %v2488 = vpack.c.b16 %v1548, %v1544
        %v2489 = vpack.c.b16 %v1549, %v1545
        %v2490 = vpack.c.b16 %v1550, %v1546
        %v2491 = vpack.c.b16 %v1551, %v1547
        %v2492 = vpack.c.b16 %v1556, %v1552
        %v2493 = vpack.c.b16 %v1557, %v1553
        %v2494 = vpack.c.b16 %v1558, %v1554
        %v2495 = vpack.c.b16 %v1559, %v1555
        %v2496 = vpack.c.b16 %v1564, %v1560
        %v2497 = vpack.c.b16 %v1565, %v1561
        %v2498 = vpack.c.b16 %v1566, %v1562
        %v2499 = vpack.c.b16 %v1567, %v1563
        %v2500 = vpack.c.b16 %v1572, %v1568
        %v2501 = vpack.c.b16 %v1573, %v1569
        %v2502 = vpack.c.b16 %v1574, %v1570
        %v2503 = vpack.c.b16 %v1575, %v1571
        %v2504 = vpack.c.b16 %v1580, %v1576
        %v2505 = vpack.c.b16 %v1581, %v1577
        %v2506 = vpack.c.b16 %v1582, %v1578
        %v2507 = vpack.c.b16 %v1583, %v1579
        %v2508 = vpack.c.b16 %v1588, %v1584
        %v2509 = vpack.c.b16 %v1589, %v1585
        %v2510 = vpack.c.b16 %v1590, %v1586
        %v2511 = vpack.c.b16 %v1591, %v1587
        %v2512 = vpack.c.b16 %v1596, %v1592
        %v2513 = vpack.c.b16 %v1597, %v1593
        %v2514 = vpack.c.b16 %v1598, %v1594
        %v2515 = vpack.c.b16 %v1599, %v1595
        %v2516 = vpack.c.b16 %v1604, %v1600
        %v2517 = vpack.c.b16 %v1605, %v1601
        %v2518 = vpack.c.b16 %v1606, %v1602
        %v2519 = vpack.c.b16 %v1607, %v1603
        %v2520 = vpack.c.b16 %v1612, %v1608
        %v2521 = vpack.c.b16 %v1613, %v1609
        %v2522 = vpack.c.b16 %v1614, %v1610
        %v2523 = vpack.c.b16 %v1615, %v1611
        %v2524 = vpack.c.b16 %v1620, %v1616
        %v2525 = vpack.c.b16 %v1621, %v1617
        %v2526 = vpack.c.b16 %v1622, %v1618
        %v2527 = vpack.c.b16 %v1623, %v1619
        %v2528 = vpack.c.b16 %v1628, %v1624
        %v2529 = vpack.c.b16 %v1629, %v1625
        %v2530 = vpack.c.b16 %v1630, %v1626
        %v2531 = vpack.c.b16 %v1631, %v1627
        %v2532 = vpack.c.b16 %v1636, %v1632
        %v2533 = vpack.c.b16 %v1637, %v1633
        %v2534 = vpack.c.b16 %v1638, %v1634
        %v2535 = vpack.c.b16 %v1639, %v1635
        %v2536 = vpack.c.b16 %v1644, %v1640
        %v2537 = vpack.c.b16 %v1645, %v1641
        %v2538 = vpack.c.b16 %v1646, %v1642
        %v2539 = vpack.c.b16 %v1647, %v1643
        %v2540 = vpack.c.b16 %v1652, %v1648
        %v2541 = vpack.c.b16 %v1653, %v1649
        %v2542 = vpack.c.b16 %v1654, %v1650
        %v2543 = vpack.c.b16 %v1655, %v1651
        %v2544 = vpack.c.b16 %v1660, %v1656
        %v2545 = vpack.c.b16 %v1661, %v1657
        %v2546 = vpack.c.b16 %v1662, %v1658
        %v2547 = vpack.c.b16 %v1663, %v1659
        %v2548 = vpack.c.b16 %v1668, %v1664
        %v2549 = vpack.c.b16 %v1669, %v1665
        %v2550 = vpack.c.b16 %v1670, %v1666
        %v2551 = vpack.c.b16 %v1671, %v1667
        %v2552 = vpack.c.b16 %v1676, %v1672
        %v2553 = vpack.c.b16 %v1677, %v1673
        %v2554 = vpack.c.b16 %v1678, %v1674
        %v2555 = vpack.c.b16 %v1679, %v1675
        %v2556 = vpack.c.b16 %v1684, %v1680
        %v2557 = vpack.c.b16 %v1685, %v1681
        %v2558 = vpack.c.b16 %v1686, %v1682
        %v2559 = vpack.c.b16 %v1687, %v1683
        %v2560 = vpack.c.b16 %v1692, %v1688
        %v2561 = vpack.c.b16 %v1693, %v1689
        %v2562 = vpack.c.b16 %v1694, %v1690
        %v2563 = vpack.c.b16 %v1695, %v1691
        %v2564 = vpack.c.b16 %v1700, %v1696
        %v2565 = vpack.c.b16 %v1701, %v1697
        %v2566 = vpack.c.b16 %v1702, %v1698
        %v2567 = vpack.c.b16 %v1703, %v1699
        %v2568 = vpack.c.b16 %v1708, %v1704
        %v2569 = vpack.c.b16 %v1709, %v1705
        %v2570 = vpack.c.b16 %v1710, %v1706
        %v2571 = vpack.c.b16 %v1711, %v1707
        %v2572 = vpack.c.b16 %v1716, %v1712
        %v2573 = vpack.c.b16 %v1717, %v1713
        %v2574 = vpack.c.b16 %v1718, %v1714
        %v2575 = vpack.c.b16 %v1719, %v1715
        %v2576 = vpack.c.b16 %v1724, %v1720
        %v2577 = vpack.c.b16 %v1725, %v1721
        %v2578 = vpack.c.b16 %v1726, %v1722
        %v2579 = vpack.c.b16 %v1727, %v1723
        %v2580 = vpack.c.b16 %v1732, %v1728
        %v2581 = vpack.c.b16 %v1733, %v1729
        %v2582 = vpack.c.b16 %v1734, %v1730
        %v2583 = vpack.c.b16 %v1735, %v1731
        %v2584 = vpack.c.b16 %v1740, %v1736
        %v2585 = vpack.c.b16 %v1741, %v1737
        %v2586 = vpack.c.b16 %v1742, %v1738
        %v2587 = vpack.c.b16 %v1743, %v1739
        %v2588 = vpack.c.b16 %v1748, %v1744
        %v2589 = vpack.c.b16 %v1749, %v1745
        %v2590 = vpack.c.b16 %v1750, %v1746
        %v2591 = vpack.c.b16 %v1751, %v1747
        %v2592 = vpack.c.b16 %v1756, %v1752
        %v2593 = vpack.c.b16 %v1757, %v1753
        %v2594 = vpack.c.b16 %v1758, %v1754
        %v2595 = vpack.c.b16 %v1759, %v1755
        %v2596 = vpack.c.b16 %v1764, %v1760
        %v2597 = vpack.c.b16 %v1765, %v1761
        %v2598 = vpack.c.b16 %v1766, %v1762
        %v2599 = vpack.c.b16 %v1767, %v1763
        %v2600 = vpack.c.b16 %v1772, %v1768
        %v2601 = vpack.c.b16 %v1773, %v1769
        %v2602 = vpack.c.b16 %v1774, %v1770
        %v2603 = vpack.c.b16 %v1775, %v1771
        %v2604 = vpack.c.b16 %v1780, %v1776
        %v2605 = vpack.c.b16 %v1781, %v1777
        %v2606 = vpack.c.b16 %v1782, %v1778
        %v2607 = vpack.c.b16 %v1783, %v1779
        %v2608 = vpack.c.b16 %v1788, %v1784
        %v2609 = vpack.c.b16 %v1789, %v1785
        %v2610 = vpack.c.b16 %v1790, %v1786
        %v2611 = vpack.c.b16 %v1791, %v1787
        %v2612 = vpack.c.b16 %v1796, %v1792
        %v2613 = vpack.c.b16 %v1797, %v1793
        %v2614 = vpack.c.b16 %v1798, %v1794
        %v2615 = vpack.c.b16 %v1799, %v1795
        %v2616 = vpack.c.b16 %v1804, %v1800
        %v2617 = vpack.c.b16 %v1805, %v1801
        %v2618 = vpack.c.b16 %v1806, %v1802
        %v2619 = vpack.c.b16 %v1807, %v1803
        %v2620 = vpack.c.b16 %v1812, %v1808
        %v2621 = vpack.c.b16 %v1813, %v1809
        %v2622 = vpack.c.b16 %v1814, %v1810
        %v2623 = vpack.c.b16 %v1815, %v1811
        %v2624 = vpack.c.b16 %v1820, %v1816
        %v2625 = vpack.c.b16 %v1821, %v1817
        %v2626 = vpack.c.b16 %v1822, %v1818
        %v2627 = vpack.c.b16 %v1823, %v1819
        %v2628 = vpack.c.b16 %v1828, %v1824
        %v2629 = vpack.c.b16 %v1829, %v1825
        %v2630 = vpack.c.b16 %v1830, %v1826
        %v2631 = vpack.c.b16 %v1831, %v1827
        %v2632 = vpack.c.b16 %v1836, %v1832
        %v2633 = vpack.c.b16 %v1837, %v1833
        %v2634 = vpack.c.b16 %v1838, %v1834
        %v2635 = vpack.c.b16 %v1839, %v1835
        %v2636 = vpack.c.b16 %v1844, %v1840
        %v2637 = vpack.c.b16 %v1845, %v1841
        %v2638 = vpack.c.b16 %v1846, %v1842
        %v2639 = vpack.c.b16 %v1847, %v1843
        %v2640 = vpack.c.b16 %v1852, %v1848
        %v2641 = vpack.c.b16 %v1853, %v1849
        %v2642 = vpack.c.b16 %v1854, %v1850
        %v2643 = vpack.c.b16 %v1855, %v1851
        %v2644 = vpack.c.b16 %v1860, %v1856
        %v2645 = vpack.c.b16 %v1861, %v1857
        %v2646 = vpack.c.b16 %v1862, %v1858
        %v2647 = vpack.c.b16 %v1863, %v1859
        %v2648 = vpack.c.b16 %v1868, %v1864
        %v2649 = vpack.c.b16 %v1869, %v1865
        %v2650 = vpack.c.b16 %v1870, %v1866
        %v2651 = vpack.c.b16 %v1871, %v1867
        %v2652 = vpack.c.b16 %v1876, %v1872
        %v2653 = vpack.c.b16 %v1877, %v1873
        %v2654 = vpack.c.b16 %v1878, %v1874
        %v2655 = vpack.c.b16 %v1879, %v1875
        %v2656 = vpack.c.b16 %v1884, %v1880
        %v2657 = vpack.c.b16 %v1885, %v1881
        %v2658 = vpack.c.b16 %v1886, %v1882
        %v2659 = vpack.c.b16 %v1887, %v1883
        %v2660 = vpack.c.b16 %v1892, %v1888
        %v2661 = vpack.c.b16 %v1893, %v1889
        %v2662 = vpack.c.b16 %v1894, %v1890
        %v2663 = vpack.c.b16 %v1895, %v1891
        %v2664 = vpack.c.b16 %v1900, %v1896
        %v2665 = vpack.c.b16 %v1901, %v1897
        %v2666 = vpack.c.b16 %v1902, %v1898
        %v2667 = vpack.c.b16 %v1903, %v1899
        %v2668 = vpack.c.b16 %v1908, %v1904
        %v2669 = vpack.c.b16 %v1909, %v1905
        %v2670 = vpack.c.b16 %v1910, %v1906
        %v2671 = vpack.c.b16 %v1911, %v1907
        %v2672 = vpack.c.b16 %v1916, %v1912
        %v2673 = vpack.c.b16 %v1917, %v1913
        %v2674 = vpack.c.b16 %v1918, %v1914
        %v2675 = vpack.c.b16 %v1919, %v1915
        %v2676 = vpack.c.b16 %v1924, %v1920
        %v2677 = vpack.c.b16 %v1925, %v1921
        %v2678 = vpack.c.b16 %v1926, %v1922
        %v2679 = vpack.c.b16 %v1927, %v1923
        %v2680 = vpack.c.b16 %v1932, %v1928
        %v2681 = vpack.c.b16 %v1933, %v1929
        %v2682 = vpack.c.b16 %v1934, %v1930
        %v2683 = vpack.c.b16 %v1935, %v1931
        %v2684 = vpack.c.b16 %v1940, %v1936
        %v2685 = vpack.c.b16 %v1941, %v1937
        %v2686 = vpack.c.b16 %v1942, %v1938
        %v2687 = vpack.c.b16 %v1943, %v1939
        %v2688 = vpack.c.b16 %v1948, %v1944
        %v2689 = vpack.c.b16 %v1949, %v1945
        %v2690 = vpack.c.b16 %v1950, %v1946
        %v2691 = vpack.c.b16 %v1951, %v1947
        %v2692 = vpack.c.b16 %v1956, %v1952
        %v2693 = vpack.c.b16 %v1957, %v1953
        %v2694 = vpack.c.b16 %v1958, %v1954
        %v2695 = vpack.c.b16 %v1959, %v1955
        %v2696 = vpack.c.b16 %v1964, %v1960
        %v2697 = vpack.c.b16 %v1965, %v1961
        %v2698 = vpack.c.b16 %v1966, %v1962
        %v2699 = vpack.c.b16 %v1967, %v1963
        %v2700 = vpack.c.b16 %v1972, %v1968
        %v2701 = vpack.c.b16 %v1973, %v1969
        %v2702 = vpack.c.b16 %v1974, %v1970
        %v2703 = vpack.c.b16 %v1975, %v1971
        %v2704 = vpack.c.b16 %v1980, %v1976
        %v2705 = vpack.c.b16 %v1981, %v1977
        %v2706 = vpack.c.b16 %v1982, %v1978
        %v2707 = vpack.c.b16 %v1983, %v1979
        %v2708 = vpack.c.b16 %v1988, %v1984
        %v2709 = vpack.c.b16 %v1989, %v1985
        %v2710 = vpack.c.b16 %v1990, %v1986
        %v2711 = vpack.c.b16 %v1991, %v1987
        %v2712 = vpack.c.b16 %v1996, %v1992
        %v2713 = vpack.c.b16 %v1997, %v1993
        %v2714 = vpack.c.b16 %v1998, %v1994
        %v2715 = vpack.c.b16 %v1999, %v1995
        %v2716 = vpack.c.b16 %v2004, %v2000
        %v2717 = vpack.c.b16 %v2005, %v2001
        %v2718 = vpack.c.b16 %v2006, %v2002
        %v2719 = vpack.c.b16 %v2007, %v2003
        %v2720 = vpack.c.b16 %v2012, %v2008
        %v2721 = vpack.c.b16 %v2013, %v2009
        %v2722 = vpack.c.b16 %v2014, %v2010
        %v2723 = vpack.c.b16 %v2015, %v2011
        %v2724 = vpack.c.b16 %v2020, %v2016
        %v2725 = vpack.c.b16 %v2021, %v2017
        %v2726 = vpack.c.b16 %v2022, %v2018
        %v2727 = vpack.c.b16 %v2023, %v2019
        %v2728 = vpack.c.b16 %v2028, %v2024
        %v2729 = vpack.c.b16 %v2029, %v2025
        %v2730 = vpack.c.b16 %v2030, %v2026
        %v2731 = vpack.c.b16 %v2031, %v2027
        %v2732 = vpack.c.b16 %v2036, %v2032
        %v2733 = vpack.c.b16 %v2037, %v2033
        %v2734 = vpack.c.b16 %v2038, %v2034
        %v2735 = vpack.c.b16 %v2039, %v2035
        %v2736 = vpack.c.b16 %v2044, %v2040
        %v2737 = vpack.c.b16 %v2045, %v2041
        %v2738 = vpack.c.b16 %v2046, %v2042
        %v2739 = vpack.c.b16 %v2047, %v2043
        %v2740 = vpack.c.b16 %v2052, %v2048
        %v2741 = vpack.c.b16 %v2053, %v2049
        %v2742 = vpack.c.b16 %v2054, %v2050
        %v2743 = vpack.c.b16 %v2055, %v2051
        %v2744 = vpack.c.b16 %v2060, %v2056
        %v2745 = vpack.c.b16 %v2061, %v2057
        %v2746 = vpack.c.b16 %v2062, %v2058
        %v2747 = vpack.c.b16 %v2063, %v2059
        %v2748 = vpack.c.b16 %v2068, %v2064
        %v2749 = vpack.c.b16 %v2069, %v2065
        %v2750 = vpack.c.b16 %v2070, %v2066
        %v2751 = vpack.c.b16 %v2071, %v2067
        %v2752 = vpack.c.b16 %v2076, %v2072
        %v2753 = vpack.c.b16 %v2077, %v2073
        %v2754 = vpack.c.b16 %v2078, %v2074
        %v2755 = vpack.c.b16 %v2079, %v2075
        %v2756 = vpack.c.b16 %v2084, %v2080
        %v2757 = vpack.c.b16 %v2085, %v2081
        %v2758 = vpack.c.b16 %v2086, %v2082
        %v2759 = vpack.c.b16 %v2087, %v2083
        %v2760 = vpack.c.b16 %v2092, %v2088
        %v2761 = vpack.c.b16 %v2093, %v2089
        %v2762 = vpack.c.b16 %v2094, %v2090
        %v2763 = vpack.c.b16 %v2095, %v2091
        %v2764 = vpack.c.b16 %v2100, %v2096
        %v2765 = vpack.c.b16 %v2101, %v2097
        %v2766 = vpack.c.b16 %v2102, %v2098
        %v2767 = vpack.c.b16 %v2103, %v2099
        %v2768 = vpack.c.b16 %v2108, %v2104
        %v2769 = vpack.c.b16 %v2109, %v2105
        %v2770 = vpack.c.b16 %v2110, %v2106
        %v2771 = vpack.c.b16 %v2111, %v2107
        %v2772 = vpack.c.b16 %v2116, %v2112
        %v2773 = vpack.c.b16 %v2117, %v2113
        %v2774 = vpack.c.b16 %v2118, %v2114
        %v2775 = vpack.c.b16 %v2119, %v2115
        %v2776 = vpack.c.b16 %v2124, %v2120
        %v2777 = vpack.c.b16 %v2125, %v2121
        %v2778 = vpack.c.b16 %v2126, %v2122
        %v2779 = vpack.c.b16 %v2127, %v2123
        %v2780 = vpack.c.b16 %v2132, %v2128
        %v2781 = vpack.c.b16 %v2133, %v2129
        %v2782 = vpack.c.b16 %v2134, %v2130
        %v2783 = vpack.c.b16 %v2135, %v2131
        %v2784 = vpack.c.b16 %v2140, %v2136
        %v2785 = vpack.c.b16 %v2141, %v2137
        %v2786 = vpack.c.b16 %v2142, %v2138
        %v2787 = vpack.c.b16 %v2143, %v2139
        %v2788 = vpack.c.b16 %v2148, %v2144
        %v2789 = vpack.c.b16 %v2149, %v2145
        %v2790 = vpack.c.b16 %v2150, %v2146
        %v2791 = vpack.c.b16 %v2151, %v2147
        %v2792 = vpack.c.b16 %v2156, %v2152
        %v2793 = vpack.c.b16 %v2157, %v2153
        %v2794 = vpack.c.b16 %v2158, %v2154
        %v2795 = vpack.c.b16 %v2159, %v2155
        %v2796 = vpack.c.b16 %v2164, %v2160
        %v2797 = vpack.c.b16 %v2165, %v2161
        %v2798 = vpack.c.b16 %v2166, %v2162
        %v2799 = vpack.c.b16 %v2167, %v2163
        %v2800 = vpack.c.b16 %v2172, %v2168
        %v2801 = vpack.c.b16 %v2173, %v2169
        %v2802 = vpack.c.b16 %v2174, %v2170
        %v2803 = vpack.c.b16 %v2175, %v2171
        %v2804 = vpack.c.b16 %v2180, %v2176
        %v2805 = vpack.c.b16 %v2181, %v2177
        %v2806 = vpack.c.b16 %v2182, %v2178
        %v2807 = vpack.c.b16 %v2183, %v2179
        %v2808 = vpack.c.b16 %v2188, %v2184
        %v2809 = vpack.c.b16 %v2189, %v2185
        %v2810 = vpack.c.b16 %v2190, %v2186
        %v2811 = vpack.c.b16 %v2191, %v2187
        %v2812 = vpack.c.b16 %v2196, %v2192
        %v2813 = vpack.c.b16 %v2197, %v2193
        %v2814 = vpack.c.b16 %v2198, %v2194
        %v2815 = vpack.c.b16 %v2199, %v2195
        %v2816 = vpack.c.b16 %v2204, %v2200
        %v2817 = vpack.c.b16 %v2205, %v2201
        %v2818 = vpack.c.b16 %v2206, %v2202
        %v2819 = vpack.c.b16 %v2207, %v2203
        %v2820 = vpack.c.b16 %v2212, %v2208
        %v2821 = vpack.c.b16 %v2213, %v2209
        %v2822 = vpack.c.b16 %v2214, %v2210
        %v2823 = vpack.c.b16 %v2215, %v2211
        %v2824 = vpack.c.b16 %v2220, %v2216
        %v2825 = vpack.c.b16 %v2221, %v2217
        %v2826 = vpack.c.b16 %v2222, %v2218
        %v2827 = vpack.c.b16 %v2223, %v2219
        %v2828 = vpack.c.b16 %v2228, %v2224
        %v2829 = vpack.c.b16 %v2229, %v2225
        %v2830 = vpack.c.b16 %v2230, %v2226
        %v2831 = vpack.c.b16 %v2231, %v2227
        %v2832 = vpack.c.b16 %v2236, %v2232
        %v2833 = vpack.c.b16 %v2237, %v2233
        %v2834 = vpack.c.b16 %v2238, %v2234
        %v2835 = vpack.c.b16 %v2239, %v2235
        %v2836 = vpack.c.b16 %v2244, %v2240
        %v2837 = vpack.c.b16 %v2245, %v2241
        %v2838 = vpack.c.b16 %v2246, %v2242
        %v2839 = vpack.c.b16 %v2247, %v2243
        %v2840 = vpack.c.b16 %v2252, %v2248
        %v2841 = vpack.c.b16 %v2253, %v2249
        %v2842 = vpack.c.b16 %v2254, %v2250
        %v2843 = vpack.c.b16 %v2255, %v2251
        %v2844 = vpack.c.b16 %v2260, %v2256
        %v2845 = vpack.c.b16 %v2261, %v2257
        %v2846 = vpack.c.b16 %v2262, %v2258
        %v2847 = vpack.c.b16 %v2263, %v2259
        %v2848 = vpack.c.b16 %v2268, %v2264
        %v2849 = vpack.c.b16 %v2269, %v2265
        %v2850 = vpack.c.b16 %v2270, %v2266
        %v2851 = vpack.c.b16 %v2271, %v2267
        %v2852 = vpack.c.b16 %v2276, %v2272
        %v2853 = vpack.c.b16 %v2277, %v2273
        %v2854 = vpack.c.b16 %v2278, %v2274
        %v2855 = vpack.c.b16 %v2279, %v2275
        %v2856 = vpack.c.b16 %v2284, %v2280
        %v2857 = vpack.c.b16 %v2285, %v2281
        %v2858 = vpack.c.b16 %v2286, %v2282
        %v2859 = vpack.c.b16 %v2287, %v2283
        %v2860 = vpack.c.b16 %v2292, %v2288
        %v2861 = vpack.c.b16 %v2293, %v2289
        %v2862 = vpack.c.b16 %v2294, %v2290
        %v2863 = vpack.c.b16 %v2295, %v2291
        %v2864 = vpack.c.b16 %v2300, %v2296
        %v2865 = vpack.c.b16 %v2301, %v2297
        %v2866 = vpack.c.b16 %v2302, %v2298
        %v2867 = vpack.c.b16 %v2303, %v2299
        %v2868 = vpack.c.b16 %v2308, %v2304
        %v2869 = vpack.c.b16 %v2309, %v2305
        %v2870 = vpack.c.b16 %v2310, %v2306
        %v2871 = vpack.c.b16 %v2311, %v2307
        %v2872 = vpack.c.b16 %v2316, %v2312
        %v2873 = vpack.c.b16 %v2317, %v2313
        %v2874 = vpack.c.b16 %v2318, %v2314
        %v2875 = vpack.c.b16 %v2319, %v2315
        %v2876 = vpack.c.b16 %v2324, %v2320
        %v2877 = vpack.c.b16 %v2325, %v2321
        %v2878 = vpack.c.b16 %v2326, %v2322
        %v2879 = vpack.c.b16 %v2327, %v2323
        %v2880 = vpack.c.b16 %v2332, %v2328
        %v2881 = vpack.c.b16 %v2333, %v2329
        %v2882 = vpack.c.b16 %v2334, %v2330
        %v2883 = vpack.c.b16 %v2335, %v2331
        %v2884 = vpack.c.b16 %v2340, %v2336
        %v2885 = vpack.c.b16 %v2341, %v2337
        %v2886 = vpack.c.b16 %v2342, %v2338
        %v2887 = vpack.c.b16 %v2343, %v2339
        %v2888 = vpack.c.b16 %v2348, %v2344
        %v2889 = vpack.c.b16 %v2349, %v2345
        %v2890 = vpack.c.b16 %v2350, %v2346
        %v2891 = vpack.c.b16 %v2351, %v2347
        %v2892 = vpack.c.b16 %v2356, %v2352
        %v2893 = vpack.c.b16 %v2357, %v2353
        %v2894 = vpack.c.b16 %v2358, %v2354
        %v2895 = vpack.c.b16 %v2359, %v2355
        %v2896 = vpack.c.b16 %v2364, %v2360
        %v2897 = vpack.c.b16 %v2365, %v2361
        %v2898 = vpack.c.b16 %v2366, %v2362
        %v2899 = vpack.c.b16 %v2367, %v2363
        %v2900 = vpack.c.b16 %v2372, %v2368
        %v2901 = vpack.c.b16 %v2373, %v2369
        %v2902 = vpack.c.b16 %v2374, %v2370
        %v2903 = vpack.c.b16 %v2375, %v2371
        %v2904 = vpack.c.b16 %v2380, %v2376
        %v2905 = vpack.c.b16 %v2381, %v2377
        %v2906 = vpack.c.b16 %v2382, %v2378
        %v2907 = vpack.c.b16 %v2383, %v2379
        %v2908 = vpack.c.b16 %v2388, %v2384
        %v2909 = vpack.c.b16 %v2389, %v2385
        %v2910 = vpack.c.b16 %v2390, %v2386
        %v2911 = vpack.c.b16 %v2391, %v2387
        %v2912 = vpack.c.b16 %v2396, %v2392
        %v2913 = vpack.c.b16 %v2397, %v2393
        %v2914 = vpack.c.b16 %v2398, %v2394
        %v2915 = vpack.c.b16 %v2399, %v2395
        %v2916 = vpack.c.b16 %v2404, %v2400
        %v2917 = vpack.c.b16 %v2405, %v2401
        %v2918 = vpack.c.b16 %v2406, %v2402
        %v2919 = vpack.c.b16 %v2407, %v2403
        %3432 = vmatprep.subr.bf16.mxu0 %v2409
        %3433 = vmatpush1.bf16.msra.mxu0 %v2408
        %3434 = vmatprep.subr.bf16.mxu0 %v2413
        %3435 = vmatpush1.bf16.msra.mxu0 %v2412
        %3436 = vmatprep.subr.bf16.mxu0 %v2417
        %3437 = vmatpush1.bf16.msra.mxu0 %v2416
        %3438 = vmatprep.subr.bf16.mxu0 %v2421
        %3439 = vmatpush1.bf16.msra.mxu0 %v2420
        %3440 = vmatprep.subr.bf16.mxu0 %v2425
        %3441 = vmatpush1.bf16.msra.mxu0 %v2424
        %3442 = vmatprep.subr.bf16.mxu0 %v2429
        %3443 = vmatpush1.bf16.msra.mxu0 %v2428
        %3444 = vmatprep.subr.bf16.mxu0 %v2433
        %3445 = vmatpush1.bf16.msra.mxu0 %v2432
        %3446 = vmatprep.subr.bf16.mxu0 %v2437
        %3447 = vmatpush1.bf16.msra.mxu0 %v2436
        %3448 = vmatprep.subr.bf16.mxu0 %v2441
        %3449 = vmatpush1.bf16.msra.mxu0 %v2440
        %3450 = vmatprep.subr.bf16.mxu0 %v2445
        %3451 = vmatpush1.bf16.msra.mxu0 %v2444
        %3452 = vmatprep.subr.bf16.mxu0 %v2449
        %3453 = vmatpush1.bf16.msra.mxu0 %v2448
        %3454 = vmatprep.subr.bf16.mxu0 %v2453
        %3455 = vmatpush1.bf16.msra.mxu0 %v2452
        %3456 = vmatprep.subr.bf16.mxu0 %v2457
        %3457 = vmatpush1.bf16.msra.mxu0 %v2456
        %3458 = vmatprep.subr.bf16.mxu0 %v2461
        %3459 = vmatpush1.bf16.msra.mxu0 %v2460
        %3460 = vmatprep.subr.bf16.mxu0 %v2465
        %3461 = vmatpush1.bf16.msra.mxu0 %v2464
        %3462 = vmatprep.subr.bf16.mxu0 %v2469
        %3463 = vmatpush1.bf16.msra.mxu0 %v2468
        %3464 = vmatprep.mubr.bf16.mxu0 %v841
        %3465 = vmatmul.mubr.bf16.gmra.mrb[0].mxu0 %v840
        %v3466 = vpop.f32.mrb[0].mxu0
        %v3467 = vadd.f32 %v775, %v3466
        %v3468 = vpop.f32.mrb[0].mxu0
        %v3469 = vadd.f32 %v779, %v3468
        %v3470 = vpop.f32.mrb[0].mxu0
        %v3471 = vadd.f32 %v775, %v3470
        %v3472 = vpop.f32.mrb[0].mxu0
        %v3473 = vadd.f32 %v779, %v3472
        %3474 = vdwg.mxu0
        %3475 = vmatprep.subr.bf16.mxu0 %v2473
        %3476 = vmatpush1.bf16.msra.mxu0 %v2472
        %3477 = vmatprep.subr.bf16.mxu0 %v2477
        %3478 = vmatpush1.bf16.msra.mxu0 %v2476
        %3479 = vmatprep.subr.bf16.mxu0 %v2481
        %3480 = vmatpush1.bf16.msra.mxu0 %v2480
        %3481 = vmatprep.subr.bf16.mxu0 %v2485
        %3482 = vmatpush1.bf16.msra.mxu0 %v2484
        %3483 = vmatprep.subr.bf16.mxu0 %v2489
        %3484 = vmatpush1.bf16.msra.mxu0 %v2488
        %3485 = vmatprep.subr.bf16.mxu0 %v2493
        %3486 = vmatpush1.bf16.msra.mxu0 %v2492
        %3487 = vmatprep.subr.bf16.mxu0 %v2497
        %3488 = vmatpush1.bf16.msra.mxu0 %v2496
        %3489 = vmatprep.subr.bf16.mxu0 %v2501
        %3490 = vmatpush1.bf16.msra.mxu0 %v2500
        %3491 = vmatprep.subr.bf16.mxu0 %v2505
        %3492 = vmatpush1.bf16.msra.mxu0 %v2504
        %3493 = vmatprep.subr.bf16.mxu0 %v2509
        %3494 = vmatpush1.bf16.msra.mxu0 %v2508
        %3495 = vmatprep.subr.bf16.mxu0 %v2513
        %3496 = vmatpush1.bf16.msra.mxu0 %v2512
        %3497 = vmatprep.subr.bf16.mxu0 %v2517
        %3498 = vmatpush1.bf16.msra.mxu0 %v2516
        %3499 = vmatprep.subr.bf16.mxu0 %v2521
        %3500 = vmatpush1.bf16.msra.mxu0 %v2520
        %3501 = vmatprep.subr.bf16.mxu0 %v2525
        %3502 = vmatpush1.bf16.msra.mxu0 %v2524
        %3503 = vmatprep.subr.bf16.mxu0 %v2529
        %3504 = vmatpush1.bf16.msra.mxu0 %v2528
        %3505 = vmatprep.subr.bf16.mxu0 %v2533
        %3506 = vmatpush1.bf16.msra.mxu0 %v2532
        %3507 = vmatprep.mubr.bf16.mxu0 %v843
        %3508 = vmatmul.mubr.bf16.gmra.mrb[0].mxu0 %v842
        %v3509 = vpop.f32.mrb[0].mxu0
        %v3510 = vadd.f32 %v3467, %v3509
        %v3511 = vpop.f32.mrb[0].mxu0
        %v3512 = vadd.f32 %v3469, %v3511
        %v3513 = vpop.f32.mrb[0].mxu0
        %v3514 = vadd.f32 %v3471, %v3513
        %v3515 = vpop.f32.mrb[0].mxu0
        %v3516 = vadd.f32 %v3473, %v3515
        %3517 = vdwg.mxu0
        %3518 = vmatprep.subr.bf16.mxu0 %v2537
        %3519 = vmatpush1.bf16.msra.mxu0 %v2536
        %3520 = vmatprep.subr.bf16.mxu0 %v2541
        %3521 = vmatpush1.bf16.msra.mxu0 %v2540
        %3522 = vmatprep.subr.bf16.mxu0 %v2545
        %3523 = vmatpush1.bf16.msra.mxu0 %v2544
        %3524 = vmatprep.subr.bf16.mxu0 %v2549
        %3525 = vmatpush1.bf16.msra.mxu0 %v2548
        %3526 = vmatprep.subr.bf16.mxu0 %v2553
        %3527 = vmatpush1.bf16.msra.mxu0 %v2552
        %3528 = vmatprep.subr.bf16.mxu0 %v2557
        %3529 = vmatpush1.bf16.msra.mxu0 %v2556
        %3530 = vmatprep.subr.bf16.mxu0 %v2561
        %3531 = vmatpush1.bf16.msra.mxu0 %v2560
        %3532 = vmatprep.subr.bf16.mxu0 %v2565
        %3533 = vmatpush1.bf16.msra.mxu0 %v2564
        %3534 = vmatprep.subr.bf16.mxu0 %v2569
        %3535 = vmatpush1.bf16.msra.mxu0 %v2568
        %3536 = vmatprep.subr.bf16.mxu0 %v2573
        %3537 = vmatpush1.bf16.msra.mxu0 %v2572
        %3538 = vmatprep.subr.bf16.mxu0 %v2577
        %3539 = vmatpush1.bf16.msra.mxu0 %v2576
        %3540 = vmatprep.subr.bf16.mxu0 %v2581
        %3541 = vmatpush1.bf16.msra.mxu0 %v2580
        %3542 = vmatprep.subr.bf16.mxu0 %v2585
        %3543 = vmatpush1.bf16.msra.mxu0 %v2584
        %3544 = vmatprep.subr.bf16.mxu0 %v2589
        %3545 = vmatpush1.bf16.msra.mxu0 %v2588
        %3546 = vmatprep.subr.bf16.mxu0 %v2593
        %3547 = vmatpush1.bf16.msra.mxu0 %v2592
        %3548 = vmatprep.subr.bf16.mxu0 %v2597
        %3549 = vmatpush1.bf16.msra.mxu0 %v2596
        %3550 = vmatprep.mubr.bf16.mxu0 %v845
        %3551 = vmatmul.mubr.bf16.gmra.mrb[0].mxu0 %v844
        %v3552 = vpop.f32.mrb[0].mxu0
        %v3553 = vadd.f32 %v3510, %v3552
        %v3554 = vpop.f32.mrb[0].mxu0
        %v3555 = vadd.f32 %v3512, %v3554
        %v3556 = vpop.f32.mrb[0].mxu0
        %v3557 = vadd.f32 %v3514, %v3556
        %v3558 = vpop.f32.mrb[0].mxu0
        %v3559 = vadd.f32 %v3516, %v3558
        %3560 = vdwg.mxu0
        %3561 = vmatprep.subr.bf16.mxu0 %v2601
        %3562 = vmatpush1.bf16.msra.mxu0 %v2600
        %3563 = vmatprep.subr.bf16.mxu0 %v2605
        %3564 = vmatpush1.bf16.msra.mxu0 %v2604
        %3565 = vmatprep.subr.bf16.mxu0 %v2609
        %3566 = vmatpush1.bf16.msra.mxu0 %v2608
        %3567 = vmatprep.subr.bf16.mxu0 %v2613
        %3568 = vmatpush1.bf16.msra.mxu0 %v2612
        %3569 = vmatprep.subr.bf16.mxu0 %v2617
        %3570 = vmatpush1.bf16.msra.mxu0 %v2616
        %3571 = vmatprep.subr.bf16.mxu0 %v2621
        %3572 = vmatpush1.bf16.msra.mxu0 %v2620
        %3573 = vmatprep.subr.bf16.mxu0 %v2625
        %3574 = vmatpush1.bf16.msra.mxu0 %v2624
        %3575 = vmatprep.subr.bf16.mxu0 %v2629
        %3576 = vmatpush1.bf16.msra.mxu0 %v2628
        %3577 = vmatprep.subr.bf16.mxu0 %v2633
        %3578 = vmatpush1.bf16.msra.mxu0 %v2632
        %3579 = vmatprep.subr.bf16.mxu0 %v2637
        %3580 = vmatpush1.bf16.msra.mxu0 %v2636
        %3581 = vmatprep.subr.bf16.mxu0 %v2641
        %3582 = vmatpush1.bf16.msra.mxu0 %v2640
        %3583 = vmatprep.subr.bf16.mxu0 %v2645
        %3584 = vmatpush1.bf16.msra.mxu0 %v2644
        %3585 = vmatprep.subr.bf16.mxu0 %v2649
        %3586 = vmatpush1.bf16.msra.mxu0 %v2648
        %3587 = vmatprep.subr.bf16.mxu0 %v2653
        %3588 = vmatpush1.bf16.msra.mxu0 %v2652
        %3589 = vmatprep.subr.bf16.mxu0 %v2657
        %3590 = vmatpush1.bf16.msra.mxu0 %v2656
        %3591 = vmatprep.subr.bf16.mxu0 %v2661
        %3592 = vmatpush1.bf16.msra.mxu0 %v2660
        %3593 = vmatprep.mubr.bf16.mxu0 %v847
        %3594 = vmatmul.mubr.bf16.gmra.mrb[0].mxu0 %v846
        %v3595 = vpop.f32.mrb[0].mxu0
        %v3596 = vadd.f32 %v3553, %v3595
        %v3597 = vpop.f32.mrb[0].mxu0
        %v3598 = vadd.f32 %v3555, %v3597
        %v3599 = vpop.f32.mrb[0].mxu0
        %v3600 = vadd.f32 %v3557, %v3599
        %v3601 = vpop.f32.mrb[0].mxu0
        %v3602 = vadd.f32 %v3559, %v3601
        %3603 = vdwg.mxu0
        %3604 = vmatprep.subr.bf16.mxu0 %v2665
        %3605 = vmatpush1.bf16.msra.mxu0 %v2664
        %3606 = vmatprep.subr.bf16.mxu0 %v2669
        %3607 = vmatpush1.bf16.msra.mxu0 %v2668
        %3608 = vmatprep.subr.bf16.mxu0 %v2673
        %3609 = vmatpush1.bf16.msra.mxu0 %v2672
        %3610 = vmatprep.subr.bf16.mxu0 %v2677
        %3611 = vmatpush1.bf16.msra.mxu0 %v2676
        %3612 = vmatprep.subr.bf16.mxu0 %v2681
        %3613 = vmatpush1.bf16.msra.mxu0 %v2680
        %3614 = vmatprep.subr.bf16.mxu0 %v2685
        %3615 = vmatpush1.bf16.msra.mxu0 %v2684
        %3616 = vmatprep.subr.bf16.mxu0 %v2689
        %3617 = vmatpush1.bf16.msra.mxu0 %v2688
        %3618 = vmatprep.subr.bf16.mxu0 %v2693
        %3619 = vmatpush1.bf16.msra.mxu0 %v2692
        %3620 = vmatprep.subr.bf16.mxu0 %v2697
        %3621 = vmatpush1.bf16.msra.mxu0 %v2696
        %3622 = vmatprep.subr.bf16.mxu0 %v2701
        %3623 = vmatpush1.bf16.msra.mxu0 %v2700
        %3624 = vmatprep.subr.bf16.mxu0 %v2705
        %3625 = vmatpush1.bf16.msra.mxu0 %v2704
        %3626 = vmatprep.subr.bf16.mxu0 %v2709
        %3627 = vmatpush1.bf16.msra.mxu0 %v2708
        %3628 = vmatprep.subr.bf16.mxu0 %v2713
        %3629 = vmatpush1.bf16.msra.mxu0 %v2712
        %3630 = vmatprep.subr.bf16.mxu0 %v2717
        %3631 = vmatpush1.bf16.msra.mxu0 %v2716
        %3632 = vmatprep.subr.bf16.mxu0 %v2721
        %3633 = vmatpush1.bf16.msra.mxu0 %v2720
        %3634 = vmatprep.subr.bf16.mxu0 %v2725
        %3635 = vmatpush1.bf16.msra.mxu0 %v2724
        %3636 = vmatprep.mubr.bf16.mxu0 %v849
        %3637 = vmatmul.mubr.bf16.gmra.mrb[0].mxu0 %v848
        %v3638 = vpop.f32.mrb[0].mxu0
        %v3639 = vadd.f32 %v3596, %v3638
        %v3640 = vpop.f32.mrb[0].mxu0
        %v3641 = vadd.f32 %v3598, %v3640
        %v3642 = vpop.f32.mrb[0].mxu0
        %v3643 = vadd.f32 %v3600, %v3642
        %v3644 = vpop.f32.mrb[0].mxu0
        %v3645 = vadd.f32 %v3602, %v3644
        %3646 = vdwg.mxu0
        %3647 = vmatprep.subr.bf16.mxu0 %v2729
        %3648 = vmatpush1.bf16.msra.mxu0 %v2728
        %3649 = vmatprep.subr.bf16.mxu0 %v2733
        %3650 = vmatpush1.bf16.msra.mxu0 %v2732
        %3651 = vmatprep.subr.bf16.mxu0 %v2737
        %3652 = vmatpush1.bf16.msra.mxu0 %v2736
        %3653 = vmatprep.subr.bf16.mxu0 %v2741
        %3654 = vmatpush1.bf16.msra.mxu0 %v2740
        %3655 = vmatprep.subr.bf16.mxu0 %v2745
        %3656 = vmatpush1.bf16.msra.mxu0 %v2744
        %3657 = vmatprep.subr.bf16.mxu0 %v2749
        %3658 = vmatpush1.bf16.msra.mxu0 %v2748
        %3659 = vmatprep.subr.bf16.mxu0 %v2753
        %3660 = vmatpush1.bf16.msra.mxu0 %v2752
        %3661 = vmatprep.subr.bf16.mxu0 %v2757
        %3662 = vmatpush1.bf16.msra.mxu0 %v2756
        %3663 = vmatprep.subr.bf16.mxu0 %v2761
        %3664 = vmatpush1.bf16.msra.mxu0 %v2760
        %3665 = vmatprep.subr.bf16.mxu0 %v2765
        %3666 = vmatpush1.bf16.msra.mxu0 %v2764
        %3667 = vmatprep.subr.bf16.mxu0 %v2769
        %3668 = vmatpush1.bf16.msra.mxu0 %v2768
        %3669 = vmatprep.subr.bf16.mxu0 %v2773
        %3670 = vmatpush1.bf16.msra.mxu0 %v2772
        %3671 = vmatprep.subr.bf16.mxu0 %v2777
        %3672 = vmatpush1.bf16.msra.mxu0 %v2776
        %3673 = vmatprep.subr.bf16.mxu0 %v2781
        %3674 = vmatpush1.bf16.msra.mxu0 %v2780
        %3675 = vmatprep.subr.bf16.mxu0 %v2785
        %3676 = vmatpush1.bf16.msra.mxu0 %v2784
        %3677 = vmatprep.subr.bf16.mxu0 %v2789
        %3678 = vmatpush1.bf16.msra.mxu0 %v2788
        %3679 = vmatprep.mubr.bf16.mxu0 %v851
        %3680 = vmatmul.mubr.bf16.gmra.mrb[0].mxu0 %v850
        %v3681 = vpop.f32.mrb[0].mxu0
        %v3682 = vadd.f32 %v3639, %v3681
        %v3683 = vpop.f32.mrb[0].mxu0
        %v3684 = vadd.f32 %v3641, %v3683
        %v3685 = vpop.f32.mrb[0].mxu0
        %v3686 = vadd.f32 %v3643, %v3685
        %v3687 = vpop.f32.mrb[0].mxu0
        %v3688 = vadd.f32 %v3645, %v3687
        %3689 = vdwg.mxu0
        %3690 = vmatprep.subr.bf16.mxu0 %v2793
        %3691 = vmatpush1.bf16.msra.mxu0 %v2792
        %3692 = vmatprep.subr.bf16.mxu0 %v2797
        %3693 = vmatpush1.bf16.msra.mxu0 %v2796
        %3694 = vmatprep.subr.bf16.mxu0 %v2801
        %3695 = vmatpush1.bf16.msra.mxu0 %v2800
        %3696 = vmatprep.subr.bf16.mxu0 %v2805
        %3697 = vmatpush1.bf16.msra.mxu0 %v2804
        %3698 = vmatprep.subr.bf16.mxu0 %v2809
        %3699 = vmatpush1.bf16.msra.mxu0 %v2808
        %3700 = vmatprep.subr.bf16.mxu0 %v2813
        %3701 = vmatpush1.bf16.msra.mxu0 %v2812
        %3702 = vmatprep.subr.bf16.mxu0 %v2817
        %3703 = vmatpush1.bf16.msra.mxu0 %v2816
        %3704 = vmatprep.subr.bf16.mxu0 %v2821
        %3705 = vmatpush1.bf16.msra.mxu0 %v2820
        %3706 = vmatprep.subr.bf16.mxu0 %v2825
        %3707 = vmatpush1.bf16.msra.mxu0 %v2824
        %3708 = vmatprep.subr.bf16.mxu0 %v2829
        %3709 = vmatpush1.bf16.msra.mxu0 %v2828
        %3710 = vmatprep.subr.bf16.mxu0 %v2833
        %3711 = vmatpush1.bf16.msra.mxu0 %v2832
        %3712 = vmatprep.subr.bf16.mxu0 %v2837
        %3713 = vmatpush1.bf16.msra.mxu0 %v2836
        %3714 = vmatprep.subr.bf16.mxu0 %v2841
        %3715 = vmatpush1.bf16.msra.mxu0 %v2840
        %3716 = vmatprep.subr.bf16.mxu0 %v2845
        %3717 = vmatpush1.bf16.msra.mxu0 %v2844
        %3718 = vmatprep.subr.bf16.mxu0 %v2849
        %3719 = vmatpush1.bf16.msra.mxu0 %v2848
        %3720 = vmatprep.subr.bf16.mxu0 %v2853
        %3721 = vmatpush1.bf16.msra.mxu0 %v2852
        %3722 = vmatprep.mubr.bf16.mxu0 %v853
        %3723 = vmatmul.mubr.bf16.gmra.mrb[0].mxu0 %v852
        %v3724 = vpop.f32.mrb[0].mxu0
        %v3725 = vadd.f32 %v3682, %v3724
        %v3726 = vpop.f32.mrb[0].mxu0
        %v3727 = vadd.f32 %v3684, %v3726
        %v3728 = vpop.f32.mrb[0].mxu0
        %v3729 = vadd.f32 %v3686, %v3728
        %v3730 = vpop.f32.mrb[0].mxu0
        %v3731 = vadd.f32 %v3688, %v3730
        %3732 = vdwg.mxu0
        %3733 = vmatprep.subr.bf16.mxu0 %v2857
        %3734 = vmatpush1.bf16.msra.mxu0 %v2856
        %3735 = vmatprep.subr.bf16.mxu0 %v2861
        %3736 = vmatpush1.bf16.msra.mxu0 %v2860
        %3737 = vmatprep.subr.bf16.mxu0 %v2865
        %3738 = vmatpush1.bf16.msra.mxu0 %v2864
        %3739 = vmatprep.subr.bf16.mxu0 %v2869
        %3740 = vmatpush1.bf16.msra.mxu0 %v2868
        %3741 = vmatprep.subr.bf16.mxu0 %v2873
        %3742 = vmatpush1.bf16.msra.mxu0 %v2872
        %3743 = vmatprep.subr.bf16.mxu0 %v2877
        %3744 = vmatpush1.bf16.msra.mxu0 %v2876
        %3745 = vmatprep.subr.bf16.mxu0 %v2881
        %3746 = vmatpush1.bf16.msra.mxu0 %v2880
        %3747 = vmatprep.subr.bf16.mxu0 %v2885
        %3748 = vmatpush1.bf16.msra.mxu0 %v2884
        %3749 = vmatprep.subr.bf16.mxu0 %v2889
        %3750 = vmatpush1.bf16.msra.mxu0 %v2888
        %3751 = vmatprep.subr.bf16.mxu0 %v2893
        %3752 = vmatpush1.bf16.msra.mxu0 %v2892
        %3753 = vmatprep.subr.bf16.mxu0 %v2897
        %3754 = vmatpush1.bf16.msra.mxu0 %v2896
        %3755 = vmatprep.subr.bf16.mxu0 %v2901
        %3756 = vmatpush1.bf16.msra.mxu0 %v2900
        %3757 = vmatprep.subr.bf16.mxu0 %v2905
        %3758 = vmatpush1.bf16.msra.mxu0 %v2904
        %3759 = vmatprep.subr.bf16.mxu0 %v2909
        %3760 = vmatpush1.bf16.msra.mxu0 %v2908
        %3761 = vmatprep.subr.bf16.mxu0 %v2913
        %3762 = vmatpush1.bf16.msra.mxu0 %v2912
        %3763 = vmatprep.subr.bf16.mxu0 %v2917
        %3764 = vmatpush1.bf16.msra.mxu0 %v2916
        %3765 = vmatprep.mubr.bf16.mxu0 %v855
        %3766 = vmatmul.mubr.bf16.gmra.mrb[0].mxu0 %v854
        %v3767 = vpop.f32.mrb[0].mxu0
        %v3768 = vadd.f32 %v3725, %v3767
        %v3769 = vpop.f32.mrb[0].mxu0
        %v3770 = vadd.f32 %v3727, %v3769
        %v3771 = vpop.f32.mrb[0].mxu0
        %v3772 = vadd.f32 %v3729, %v3771
        %v3773 = vpop.f32.mrb[0].mxu0
        %v3774 = vadd.f32 %v3731, %v3773
        %3775 = vdwg.mxu0
        %3776 = vmatprep.subr.bf16.mxu0 %v2411
        %3777 = vmatpush1.bf16.msra.mxu0 %v2410
        %3778 = vmatprep.subr.bf16.mxu0 %v2415
        %3779 = vmatpush1.bf16.msra.mxu0 %v2414
        %3780 = vmatprep.subr.bf16.mxu0 %v2419
        %3781 = vmatpush1.bf16.msra.mxu0 %v2418
        %3782 = vmatprep.subr.bf16.mxu0 %v2423
        %3783 = vmatpush1.bf16.msra.mxu0 %v2422
        %3784 = vmatprep.subr.bf16.mxu0 %v2427
        %3785 = vmatpush1.bf16.msra.mxu0 %v2426
        %3786 = vmatprep.subr.bf16.mxu0 %v2431
        %3787 = vmatpush1.bf16.msra.mxu0 %v2430
        %3788 = vmatprep.subr.bf16.mxu0 %v2435
        %3789 = vmatpush1.bf16.msra.mxu0 %v2434
        %3790 = vmatprep.subr.bf16.mxu0 %v2439
        %3791 = vmatpush1.bf16.msra.mxu0 %v2438
        %3792 = vmatprep.subr.bf16.mxu0 %v2443
        %3793 = vmatpush1.bf16.msra.mxu0 %v2442
        %3794 = vmatprep.subr.bf16.mxu0 %v2447
        %3795 = vmatpush1.bf16.msra.mxu0 %v2446
        %3796 = vmatprep.subr.bf16.mxu0 %v2451
        %3797 = vmatpush1.bf16.msra.mxu0 %v2450
        %3798 = vmatprep.subr.bf16.mxu0 %v2455
        %3799 = vmatpush1.bf16.msra.mxu0 %v2454
        %3800 = vmatprep.subr.bf16.mxu0 %v2459
        %3801 = vmatpush1.bf16.msra.mxu0 %v2458
        %3802 = vmatprep.subr.bf16.mxu0 %v2463
        %3803 = vmatpush1.bf16.msra.mxu0 %v2462
        %3804 = vmatprep.subr.bf16.mxu0 %v2467
        %3805 = vmatpush1.bf16.msra.mxu0 %v2466
        %3806 = vmatprep.subr.bf16.mxu0 %v2471
        %3807 = vmatpush1.bf16.msra.mxu0 %v2470
        %3808 = vmatprep.mubr.bf16.mxu0 %v841
        %3809 = vmatmul.mubr.bf16.gmra.mrb[0].mxu0 %v840
        %v3810 = vpop.f32.mrb[0].mxu0
        %v3811 = vadd.f32 %v783, %v3810
        %v3812 = vpop.f32.mrb[0].mxu0
        %v3813 = vadd.f32 %v787, %v3812
        %v3814 = vpop.f32.mrb[0].mxu0
        %v3815 = vadd.f32 %v783, %v3814
        %v3816 = vpop.f32.mrb[0].mxu0
        %v3817 = vadd.f32 %v787, %v3816
        %3818 = vdwg.mxu0
        %3819 = vmatprep.subr.bf16.mxu0 %v2475
        %3820 = vmatpush1.bf16.msra.mxu0 %v2474
        %3821 = vmatprep.subr.bf16.mxu0 %v2479
        %3822 = vmatpush1.bf16.msra.mxu0 %v2478
        %3823 = vmatprep.subr.bf16.mxu0 %v2483
        %3824 = vmatpush1.bf16.msra.mxu0 %v2482
        %3825 = vmatprep.subr.bf16.mxu0 %v2487
        %3826 = vmatpush1.bf16.msra.mxu0 %v2486
        %3827 = vmatprep.subr.bf16.mxu0 %v2491
        %3828 = vmatpush1.bf16.msra.mxu0 %v2490
        %3829 = vmatprep.subr.bf16.mxu0 %v2495
        %3830 = vmatpush1.bf16.msra.mxu0 %v2494
        %3831 = vmatprep.subr.bf16.mxu0 %v2499
        %3832 = vmatpush1.bf16.msra.mxu0 %v2498
        %3833 = vmatprep.subr.bf16.mxu0 %v2503
        %3834 = vmatpush1.bf16.msra.mxu0 %v2502
        %3835 = vmatprep.subr.bf16.mxu0 %v2507
        %3836 = vmatpush1.bf16.msra.mxu0 %v2506
        %3837 = vmatprep.subr.bf16.mxu0 %v2511
        %3838 = vmatpush1.bf16.msra.mxu0 %v2510
        %3839 = vmatprep.subr.bf16.mxu0 %v2515
        %3840 = vmatpush1.bf16.msra.mxu0 %v2514
        %3841 = vmatprep.subr.bf16.mxu0 %v2519
        %3842 = vmatpush1.bf16.msra.mxu0 %v2518
        %3843 = vmatprep.subr.bf16.mxu0 %v2523
        %3844 = vmatpush1.bf16.msra.mxu0 %v2522
        %3845 = vmatprep.subr.bf16.mxu0 %v2527
        %3846 = vmatpush1.bf16.msra.mxu0 %v2526
        %3847 = vmatprep.subr.bf16.mxu0 %v2531
        %3848 = vmatpush1.bf16.msra.mxu0 %v2530
        %3849 = vmatprep.subr.bf16.mxu0 %v2535
        %3850 = vmatpush1.bf16.msra.mxu0 %v2534
        %3851 = vmatprep.mubr.bf16.mxu0 %v843
        %3852 = vmatmul.mubr.bf16.gmra.mrb[0].mxu0 %v842
        %v3853 = vpop.f32.mrb[0].mxu0
        %v3854 = vadd.f32 %v3811, %v3853
        %v3855 = vpop.f32.mrb[0].mxu0
        %v3856 = vadd.f32 %v3813, %v3855
        %v3857 = vpop.f32.mrb[0].mxu0
        %v3858 = vadd.f32 %v3815, %v3857
        %v3859 = vpop.f32.mrb[0].mxu0
        %v3860 = vadd.f32 %v3817, %v3859
        %3861 = vdwg.mxu0
        %3862 = vmatprep.subr.bf16.mxu0 %v2539
        %3863 = vmatpush1.bf16.msra.mxu0 %v2538
        %3864 = vmatprep.subr.bf16.mxu0 %v2543
        %3865 = vmatpush1.bf16.msra.mxu0 %v2542
        %3866 = vmatprep.subr.bf16.mxu0 %v2547
        %3867 = vmatpush1.bf16.msra.mxu0 %v2546
        %3868 = vmatprep.subr.bf16.mxu0 %v2551
        %3869 = vmatpush1.bf16.msra.mxu0 %v2550
        %3870 = vmatprep.subr.bf16.mxu0 %v2555
        %3871 = vmatpush1.bf16.msra.mxu0 %v2554
        %3872 = vmatprep.subr.bf16.mxu0 %v2559
        %3873 = vmatpush1.bf16.msra.mxu0 %v2558
        %3874 = vmatprep.subr.bf16.mxu0 %v2563
        %3875 = vmatpush1.bf16.msra.mxu0 %v2562
        %3876 = vmatprep.subr.bf16.mxu0 %v2567
        %3877 = vmatpush1.bf16.msra.mxu0 %v2566
        %3878 = vmatprep.subr.bf16.mxu0 %v2571
        %3879 = vmatpush1.bf16.msra.mxu0 %v2570
        %3880 = vmatprep.subr.bf16.mxu0 %v2575
        %3881 = vmatpush1.bf16.msra.mxu0 %v2574
        %3882 = vmatprep.subr.bf16.mxu0 %v2579
        %3883 = vmatpush1.bf16.msra.mxu0 %v2578
        %3884 = vmatprep.subr.bf16.mxu0 %v2583
        %3885 = vmatpush1.bf16.msra.mxu0 %v2582
        %3886 = vmatprep.subr.bf16.mxu0 %v2587
        %3887 = vmatpush1.bf16.msra.mxu0 %v2586
        %3888 = vmatprep.subr.bf16.mxu0 %v2591
        %3889 = vmatpush1.bf16.msra.mxu0 %v2590
        %3890 = vmatprep.subr.bf16.mxu0 %v2595
        %3891 = vmatpush1.bf16.msra.mxu0 %v2594
        %3892 = vmatprep.subr.bf16.mxu0 %v2599
        %3893 = vmatpush1.bf16.msra.mxu0 %v2598
        %3894 = vmatprep.mubr.bf16.mxu0 %v845
        %3895 = vmatmul.mubr.bf16.gmra.mrb[0].mxu0 %v844
        %v3896 = vpop.f32.mrb[0].mxu0
        %v3897 = vadd.f32 %v3854, %v3896
        %v3898 = vpop.f32.mrb[0].mxu0
        %v3899 = vadd.f32 %v3856, %v3898
        %v3900 = vpop.f32.mrb[0].mxu0
        %v3901 = vadd.f32 %v3858, %v3900
        %v3902 = vpop.f32.mrb[0].mxu0
        %v3903 = vadd.f32 %v3860, %v3902
        %3904 = vdwg.mxu0
        %3905 = vmatprep.subr.bf16.mxu0 %v2603
        %3906 = vmatpush1.bf16.msra.mxu0 %v2602
        %3907 = vmatprep.subr.bf16.mxu0 %v2607
        %3908 = vmatpush1.bf16.msra.mxu0 %v2606
        %3909 = vmatprep.subr.bf16.mxu0 %v2611
        %3910 = vmatpush1.bf16.msra.mxu0 %v2610
        %3911 = vmatprep.subr.bf16.mxu0 %v2615
        %3912 = vmatpush1.bf16.msra.mxu0 %v2614
        %3913 = vmatprep.subr.bf16.mxu0 %v2619
        %3914 = vmatpush1.bf16.msra.mxu0 %v2618
        %3915 = vmatprep.subr.bf16.mxu0 %v2623
        %3916 = vmatpush1.bf16.msra.mxu0 %v2622
        %3917 = vmatprep.subr.bf16.mxu0 %v2627
        %3918 = vmatpush1.bf16.msra.mxu0 %v2626
        %3919 = vmatprep.subr.bf16.mxu0 %v2631
        %3920 = vmatpush1.bf16.msra.mxu0 %v2630
        %3921 = vmatprep.subr.bf16.mxu0 %v2635
        %3922 = vmatpush1.bf16.msra.mxu0 %v2634
        %3923 = vmatprep.subr.bf16.mxu0 %v2639
        %3924 = vmatpush1.bf16.msra.mxu0 %v2638
        %3925 = vmatprep.subr.bf16.mxu0 %v2643
        %3926 = vmatpush1.bf16.msra.mxu0 %v2642
        %3927 = vmatprep.subr.bf16.mxu0 %v2647
        %3928 = vmatpush1.bf16.msra.mxu0 %v2646
        %3929 = vmatprep.subr.bf16.mxu0 %v2651
        %3930 = vmatpush1.bf16.msra.mxu0 %v2650
        %3931 = vmatprep.subr.bf16.mxu0 %v2655
        %3932 = vmatpush1.bf16.msra.mxu0 %v2654
        %3933 = vmatprep.subr.bf16.mxu0 %v2659
        %3934 = vmatpush1.bf16.msra.mxu0 %v2658
        %3935 = vmatprep.subr.bf16.mxu0 %v2663
        %3936 = vmatpush1.bf16.msra.mxu0 %v2662
        %3937 = vmatprep.mubr.bf16.mxu0 %v847
        %3938 = vmatmul.mubr.bf16.gmra.mrb[0].mxu0 %v846
        %v3939 = vpop.f32.mrb[0].mxu0
        %v3940 = vadd.f32 %v3897, %v3939
        %v3941 = vpop.f32.mrb[0].mxu0
        %v3942 = vadd.f32 %v3899, %v3941
        %v3943 = vpop.f32.mrb[0].mxu0
        %v3944 = vadd.f32 %v3901, %v3943
        %v3945 = vpop.f32.mrb[0].mxu0
        %v3946 = vadd.f32 %v3903, %v3945
        %3947 = vdwg.mxu0
        %3948 = vmatprep.subr.bf16.mxu0 %v2667
        %3949 = vmatpush1.bf16.msra.mxu0 %v2666
        %3950 = vmatprep.subr.bf16.mxu0 %v2671
        %3951 = vmatpush1.bf16.msra.mxu0 %v2670
        %3952 = vmatprep.subr.bf16.mxu0 %v2675
        %3953 = vmatpush1.bf16.msra.mxu0 %v2674
        %3954 = vmatprep.subr.bf16.mxu0 %v2679
        %3955 = vmatpush1.bf16.msra.mxu0 %v2678
        %3956 = vmatprep.subr.bf16.mxu0 %v2683
        %3957 = vmatpush1.bf16.msra.mxu0 %v2682
        %3958 = vmatprep.subr.bf16.mxu0 %v2687
        %3959 = vmatpush1.bf16.msra.mxu0 %v2686
        %3960 = vmatprep.subr.bf16.mxu0 %v2691
        %3961 = vmatpush1.bf16.msra.mxu0 %v2690
        %3962 = vmatprep.subr.bf16.mxu0 %v2695
        %3963 = vmatpush1.bf16.msra.mxu0 %v2694
        %3964 = vmatprep.subr.bf16.mxu0 %v2699
        %3965 = vmatpush1.bf16.msra.mxu0 %v2698
        %3966 = vmatprep.subr.bf16.mxu0 %v2703
        %3967 = vmatpush1.bf16.msra.mxu0 %v2702
        %3968 = vmatprep.subr.bf16.mxu0 %v2707
        %3969 = vmatpush1.bf16.msra.mxu0 %v2706
        %3970 = vmatprep.subr.bf16.mxu0 %v2711
        %3971 = vmatpush1.bf16.msra.mxu0 %v2710
        %3972 = vmatprep.subr.bf16.mxu0 %v2715
        %3973 = vmatpush1.bf16.msra.mxu0 %v2714
        %3974 = vmatprep.subr.bf16.mxu0 %v2719
        %3975 = vmatpush1.bf16.msra.mxu0 %v2718
        %3976 = vmatprep.subr.bf16.mxu0 %v2723
        %3977 = vmatpush1.bf16.msra.mxu0 %v2722
        %3978 = vmatprep.subr.bf16.mxu0 %v2727
        %3979 = vmatpush1.bf16.msra.mxu0 %v2726
        %3980 = vmatprep.mubr.bf16.mxu0 %v849
        %3981 = vmatmul.mubr.bf16.gmra.mrb[0].mxu0 %v848
        %v3982 = vpop.f32.mrb[0].mxu0
        %v3983 = vadd.f32 %v3940, %v3982
        %v3984 = vpop.f32.mrb[0].mxu0
        %v3985 = vadd.f32 %v3942, %v3984
        %v3986 = vpop.f32.mrb[0].mxu0
        %v3987 = vadd.f32 %v3944, %v3986
        %v3988 = vpop.f32.mrb[0].mxu0
        %v3989 = vadd.f32 %v3946, %v3988
        %3990 = vdwg.mxu0
        %3991 = vmatprep.subr.bf16.mxu0 %v2731
        %3992 = vmatpush1.bf16.msra.mxu0 %v2730
        %3993 = vmatprep.subr.bf16.mxu0 %v2735
        %3994 = vmatpush1.bf16.msra.mxu0 %v2734
        %3995 = vmatprep.subr.bf16.mxu0 %v2739
        %3996 = vmatpush1.bf16.msra.mxu0 %v2738
        %3997 = vmatprep.subr.bf16.mxu0 %v2743
        %3998 = vmatpush1.bf16.msra.mxu0 %v2742
        %3999 = vmatprep.subr.bf16.mxu0 %v2747
        %4000 = vmatpush1.bf16.msra.mxu0 %v2746
        %4001 = vmatprep.subr.bf16.mxu0 %v2751
        %4002 = vmatpush1.bf16.msra.mxu0 %v2750
        %4003 = vmatprep.subr.bf16.mxu0 %v2755
        %4004 = vmatpush1.bf16.msra.mxu0 %v2754
        %4005 = vmatprep.subr.bf16.mxu0 %v2759
        %4006 = vmatpush1.bf16.msra.mxu0 %v2758
        %4007 = vmatprep.subr.bf16.mxu0 %v2763
        %4008 = vmatpush1.bf16.msra.mxu0 %v2762
        %4009 = vmatprep.subr.bf16.mxu0 %v2767
        %4010 = vmatpush1.bf16.msra.mxu0 %v2766
        %4011 = vmatprep.subr.bf16.mxu0 %v2771
        %4012 = vmatpush1.bf16.msra.mxu0 %v2770
        %4013 = vmatprep.subr.bf16.mxu0 %v2775
        %4014 = vmatpush1.bf16.msra.mxu0 %v2774
        %4015 = vmatprep.subr.bf16.mxu0 %v2779
        %4016 = vmatpush1.bf16.msra.mxu0 %v2778
        %4017 = vmatprep.subr.bf16.mxu0 %v2783
        %4018 = vmatpush1.bf16.msra.mxu0 %v2782
        %4019 = vmatprep.subr.bf16.mxu0 %v2787
        %4020 = vmatpush1.bf16.msra.mxu0 %v2786
        %4021 = vmatprep.subr.bf16.mxu0 %v2791
        %4022 = vmatpush1.bf16.msra.mxu0 %v2790
        %4023 = vmatprep.mubr.bf16.mxu0 %v851
        %4024 = vmatmul.mubr.bf16.gmra.mrb[0].mxu0 %v850
        %v4025 = vpop.f32.mrb[0].mxu0
        %v4026 = vadd.f32 %v3983, %v4025
        %v4027 = vpop.f32.mrb[0].mxu0
        %v4028 = vadd.f32 %v3985, %v4027
        %v4029 = vpop.f32.mrb[0].mxu0
        %v4030 = vadd.f32 %v3987, %v4029
        %v4031 = vpop.f32.mrb[0].mxu0
        %v4032 = vadd.f32 %v3989, %v4031
        %4033 = vdwg.mxu0
        %4034 = vmatprep.subr.bf16.mxu0 %v2795
        %4035 = vmatpush1.bf16.msra.mxu0 %v2794
        %4036 = vmatprep.subr.bf16.mxu0 %v2799
        %4037 = vmatpush1.bf16.msra.mxu0 %v2798
        %4038 = vmatprep.subr.bf16.mxu0 %v2803
        %4039 = vmatpush1.bf16.msra.mxu0 %v2802
        %4040 = vmatprep.subr.bf16.mxu0 %v2807
        %4041 = vmatpush1.bf16.msra.mxu0 %v2806
        %4042 = vmatprep.subr.bf16.mxu0 %v2811
        %4043 = vmatpush1.bf16.msra.mxu0 %v2810
        %4044 = vmatprep.subr.bf16.mxu0 %v2815
        %4045 = vmatpush1.bf16.msra.mxu0 %v2814
        %4046 = vmatprep.subr.bf16.mxu0 %v2819
        %4047 = vmatpush1.bf16.msra.mxu0 %v2818
        %4048 = vmatprep.subr.bf16.mxu0 %v2823
        %4049 = vmatpush1.bf16.msra.mxu0 %v2822
        %4050 = vmatprep.subr.bf16.mxu0 %v2827
        %4051 = vmatpush1.bf16.msra.mxu0 %v2826
        %4052 = vmatprep.subr.bf16.mxu0 %v2831
        %4053 = vmatpush1.bf16.msra.mxu0 %v2830
        %4054 = vmatprep.subr.bf16.mxu0 %v2835
        %4055 = vmatpush1.bf16.msra.mxu0 %v2834
        %4056 = vmatprep.subr.bf16.mxu0 %v2839
        %4057 = vmatpush1.bf16.msra.mxu0 %v2838
        %4058 = vmatprep.subr.bf16.mxu0 %v2843
        %4059 = vmatpush1.bf16.msra.mxu0 %v2842
        %4060 = vmatprep.subr.bf16.mxu0 %v2847
        %4061 = vmatpush1.bf16.msra.mxu0 %v2846
        %4062 = vmatprep.subr.bf16.mxu0 %v2851
        %4063 = vmatpush1.bf16.msra.mxu0 %v2850
        %4064 = vmatprep.subr.bf16.mxu0 %v2855
        %4065 = vmatpush1.bf16.msra.mxu0 %v2854
        %4066 = vmatprep.mubr.bf16.mxu0 %v853
        %4067 = vmatmul.mubr.bf16.gmra.mrb[0].mxu0 %v852
        %v4068 = vpop.f32.mrb[0].mxu0
        %v4069 = vadd.f32 %v4026, %v4068
        %v4070 = vpop.f32.mrb[0].mxu0
        %v4071 = vadd.f32 %v4028, %v4070
        %v4072 = vpop.f32.mrb[0].mxu0
        %v4073 = vadd.f32 %v4030, %v4072
        %v4074 = vpop.f32.mrb[0].mxu0
        %v4075 = vadd.f32 %v4032, %v4074
        %4076 = vdwg.mxu0
        %4077 = vmatprep.subr.bf16.mxu0 %v2859
        %4078 = vmatpush1.bf16.msra.mxu0 %v2858
        %4079 = vmatprep.subr.bf16.mxu0 %v2863
        %4080 = vmatpush1.bf16.msra.mxu0 %v2862
        %4081 = vmatprep.subr.bf16.mxu0 %v2867
        %4082 = vmatpush1.bf16.msra.mxu0 %v2866
        %4083 = vmatprep.subr.bf16.mxu0 %v2871
        %4084 = vmatpush1.bf16.msra.mxu0 %v2870
        %4085 = vmatprep.subr.bf16.mxu0 %v2875
        %4086 = vmatpush1.bf16.msra.mxu0 %v2874
        %4087 = vmatprep.subr.bf16.mxu0 %v2879
        %4088 = vmatpush1.bf16.msra.mxu0 %v2878
        %4089 = vmatprep.subr.bf16.mxu0 %v2883
        %4090 = vmatpush1.bf16.msra.mxu0 %v2882
        %4091 = vmatprep.subr.bf16.mxu0 %v2887
        %4092 = vmatpush1.bf16.msra.mxu0 %v2886
        %4093 = vmatprep.subr.bf16.mxu0 %v2891
        %4094 = vmatpush1.bf16.msra.mxu0 %v2890
        %4095 = vmatprep.subr.bf16.mxu0 %v2895
        %4096 = vmatpush1.bf16.msra.mxu0 %v2894
        %4097 = vmatprep.subr.bf16.mxu0 %v2899
        %4098 = vmatpush1.bf16.msra.mxu0 %v2898
        %4099 = vmatprep.subr.bf16.mxu0 %v2903
        %4100 = vmatpush1.bf16.msra.mxu0 %v2902
        %4101 = vmatprep.subr.bf16.mxu0 %v2907
        %4102 = vmatpush1.bf16.msra.mxu0 %v2906
        %4103 = vmatprep.subr.bf16.mxu0 %v2911
        %4104 = vmatpush1.bf16.msra.mxu0 %v2910
        %4105 = vmatprep.subr.bf16.mxu0 %v2915
        %4106 = vmatpush1.bf16.msra.mxu0 %v2914
        %4107 = vmatprep.subr.bf16.mxu0 %v2919
        %4108 = vmatpush1.bf16.msra.mxu0 %v2918
        %4109 = vmatprep.mubr.bf16.mxu0 %v855
        %4110 = vmatmul.mubr.bf16.gmra.mrb[0].mxu0 %v854
        %v4111 = vpop.f32.mrb[0].mxu0
        %v4112 = vadd.f32 %v4069, %v4111
        %v4113 = vpop.f32.mrb[0].mxu0
        %v4114 = vadd.f32 %v4071, %v4113
        %v4115 = vpop.f32.mrb[0].mxu0
        %v4116 = vadd.f32 %v4073, %v4115
        %v4117 = vpop.f32.mrb[0].mxu0
        %v4118 = vadd.f32 %v4075, %v4117
        %4119 = vdwg.mxu0
        %v4120 = vmax.f32 %v3768, 0.0
        %v4121 = vmax.f32 %v3770, 0.0
        %v4122 = vmax.f32 %v4112, 0.0
        %v4123 = vmax.f32 %v4114, 0.0
        %v4124 = vmax.f32 %v3772, 0.0
        %v4125 = vmax.f32 %v3774, 0.0
        %v4126 = vmax.f32 %v4116, 0.0
        %v4127 = vmax.f32 %v4118, 0.0
        %v4128 = vpack.c.bf16 %v4124, %v4120
        %v4129 = vpack.c.bf16 %v4125, %v4121
        %v4130 = vpack.c.bf16 %v4126, %v4122
        %v4131 = vpack.c.bf16 %v4127, %v4123
        %v4136 = vunpack.c.l.b16 %v4128
        %v4137 = vunpack.c.l.b16 %v4129
        %v4138 = vunpack.c.l.b16 %v4130
        %v4139 = vunpack.c.l.b16 %v4131
        %v4140 = vunpack.c.h.b16 %v4128
        %v4141 = vunpack.c.h.b16 %v4129
        %v4142 = vunpack.c.h.b16 %v4130
        %v4143 = vunpack.c.h.b16 %v4131
        %v4144 = vpack.c.b16 %v4137, %v4136
        %v4145 = vpack.c.b16 %v4139, %v4138
        %v4146 = vpack.c.b16 %v4141, %v4140
        %v4147 = vpack.c.b16 %v4143, %v4142
        %4152 = vst [vmem:[%s238] sm:$0xff] %v4144
        %4153 = vst [vmem:[%s238 + $0x8] sm:$0xff] %v4145
        %4154 = vst [vmem:[%s238 + $0x10] sm:$0xff] %v4146
        %4155 = vst [vmem:[%s238 + $0x18] sm:$0xff] %v4147
        %s4156 = sand.u32 %s102, 1
        %s4157 = scalar_lea.sflag [#allocation4], %s4156
        %s4158 = sand.u32 %s102, 1
        %s4159 = smul.addr %s4158, 32
        %s4160 = scalar_lea.vmem [#allocation8], %s4159
        // Predicated region
        $region45: #{tpu_custom_call.1} parent=31 // pred_check
          %p4161 = pneg %p112
        $region46: #{tpu_custom_call.1} parent=31 // pred_check_branch
          %4163 = sbr.rel (%p4161) target = $region48
        $region47: #{tpu_custom_call.1} parent=31 // pred_region
          %s4164 = smul.u32 4, %s21
          %s4166 = ssub.s32 512, 512
          %4167 = vsyncadd %s4157, %s4166
          %s4168 = smul.addr %s4164, 64
          %s4169 = scalar_lea.hbm %s3, %s4168
          %s4170 = sshll.u32 %s4160, 4
          %s4171 = int_to_ptr.vmem [resolvable:$true] %s4170
          %4176 = dma.vmem_to_hbm [thread:$0]  %s4171, 512, %s4169, %s4157, 256, 2048, 16
        $region48: #{tpu_custom_call.1} parent=31 // pred_fallthru
          _
      $region32: #{tpu_custom_call.1} parent=5 // pred_fallthru
        _
      %p4177 = scmp.le.s32.totalorder 2, %s16
      // Predicated region
      $region49: #{tpu_custom_call.1} parent=5 // pred_check
        %p4178 = pneg %p4177
      $region50: #{tpu_custom_call.1} parent=5 // pred_check_branch
        %4180 = sbr.rel (%p4178) target = $region52
      $region51: #{tpu_custom_call.1} parent=5 // pred_region
        %s4181 = ssub.s32 %s16, 2
        // Predicated region
        $region53: #{tpu_custom_call.1} parent=51 // pred_check
          %p4182 = pneg %p118
        $region54: #{tpu_custom_call.1} parent=51 // pred_check_branch
          %4184 = sbr.rel (%p4182) target = $region56
        $region55: #{tpu_custom_call.1} parent=51 // pred_region
          %s4185 = sand.u32 %s103, 1
          %s4186 = scalar_lea.sflag [#allocation4], %s4185
          %s4187 = sand.u32 %s103, 1
          %s4188 = smul.addr %s4187, 32
          %s4189 = scalar_lea.vmem [#allocation8], %s4188
          %4190 = dma.done %s4186, 512
        $region56: #{tpu_custom_call.1} parent=51 // pred_fallthru
          _
      $region52: #{tpu_custom_call.1} parent=5 // pred_fallthru
        _
    $region6: #{tpu_custom_call.1} parent=1 // loop_footer
      %s20 = sadd.s32 1, %s16
    $region7: #{tpu_custom_call.1} parent=1 // loop_footer_branch
      %15 = sbr.rel target = $region3
    $region8: #{tpu_custom_call.1} parent=1 // loop_exit
      _
    %4191 = vsyncpa [#allocation3], 1
    %s4192 = scalar_lea.sflag [#allocation3], 1
    %4193 = vsyncpa %s4192, 1
    %4194 = vsyncpa [#allocation6], 1
    %s4195 = scalar_lea.sflag [#allocation6], 1
    %4196 = vsyncpa %s4195, 1
    %4197 = vsyncpa [#allocation4], 1
    %s4198 = scalar_lea.sflag [#allocation4], 1
    %4199 = vsyncpa %s4198, 1

</llo_original>
